<compile_context>
chip_gen: v7x
topology: tpu7x:2x2x1
jax: 0.10.0
libtpu: 0.0.40
codegen_flags: <defaults>
</compile_context>

<pallas_src>
import functools

import jax
import jax.numpy as jnp
from jax.experimental import pallas as pl
from jax.experimental.pallas import tpu as pltpu

_LANE = 128
_NODE_TILE_PREF = 2048            # bf16 adj tile 2048x2048 = 8 MiB (x2 buffers)
_NORM_TILE_CAP = 1024             # f32-in/bf16-out adjacency-normalize tile
_HIER_TILE_CAP = 256              # row tile for the fused hierarchy kernel
_VMEM_LIMIT = 48 * 1024 * 1024    # <= v7x 64 MiB physical; fine on v5e/v6e
_NEG_BIG = -1e30                  # mask value for padded logit lanes


# ---------------------------------------------------------------------------
# small helpers
# ---------------------------------------------------------------------------
def _round_up(n, m):
    return (n + m - 1) // m * m


def _largest_div_tile(n, cap):
    """Largest multiple of 128 that divides n and is <= cap (>= 128)."""
    cap = max(_LANE, cap)
    best = _LANE
    t = _LANE
    lim = min(cap, n)
    while t <= lim:
        if n % t == 0:
            best = t
        t += _LANE
    return best


def _choose_node_tile(n):
    """(tile, padded_n): big divisor tile, avoiding 128-wide tiles on big graphs."""
    n_p = _round_up(n, _LANE)
    t = _largest_div_tile(n_p, _NODE_TILE_PREF)
    if t < 512 and n_p > 512:
        n_p = _round_up(n, 512)
        t = _largest_div_tile(n_p, _NODE_TILE_PREF)
    return t, n_p


def _transform_tile(n_p, cin_p):
    """Row tile for the standalone X@W^T kernel (bound the [tile, cin_p] buffer)."""
    cap = max(_LANE, min(_NODE_TILE_PREF,
                         ((2 * 1024 * 1024) // max(cin_p, 1)) // _LANE * _LANE))
    return _largest_div_tile(n_p, cap)


def _pad2(x, rows, cols, fill=0.0):
    r, c = x.shape
    if r == rows and c == cols:
        return x
    return jnp.pad(x, ((0, rows - r), (0, cols - c)), constant_values=fill)


def _pad_row(v, cols, fill=0.0):
    v = jnp.asarray(v, jnp.float32)
    return jnp.pad(v, (0, cols - v.shape[0]), constant_values=fill).reshape(1, cols)


def _cparams(dim_sem):
    return pltpu.CompilerParams(
        dimension_semantics=dim_sem, vmem_limit_bytes=_VMEM_LIMIT
    )


def _masked_log_softmax(y, valid_cols):
    # y: [tm, Np] f32; padded columns (>= valid_cols) masked out of the reduction.
    col = jax.lax.broadcasted_iota(jnp.int32, y.shape, 1)
    y = jnp.where(col < valid_cols, y, _NEG_BIG)
    m = jnp.max(y, axis=-1, keepdims=True)
    e = jnp.exp(y - m)
    s = jnp.sum(e, axis=-1, keepdims=True)
    return (y - m) - jnp.log(s)


# ---------------------------------------------------------------------------
# Pallas kernels
# ---------------------------------------------------------------------------
def _normalize_adj_kernel(a_ref, dr_ref, dc_ref, o_ref, *, tile, n_valid):
    """One (i,k) tile of D^{-1/2}(A + I)D^{-1/2}, written as padded bf16."""
    i = pl.program_id(0)
    k = pl.program_id(1)
    r = jax.lax.broadcasted_iota(jnp.int32, (tile, tile), 0) + i * tile
    c = jax.lax.broadcasted_iota(jnp.int32, (tile, tile), 1) + k * tile
    diag = jnp.where((r == c) & (r < n_valid), 1.0, 0.0)
    a = a_ref[...] + diag
    o_ref[...] = (a * dr_ref[...] * dc_ref[...]).astype(o_ref.dtype)


def _gcn_layer_kernel(adj_ref, x_ref, wt_ref, scale_ref, shift_ref, o_ref, acc_ref):
    """Fused GCN layer: relu((adj @ (x @ W^T)) * scale + shift), K-tiled over nodes.

    Used when cin_p <= h_p (re-doing x@W^T per row tile is traffic-neutral)."""
    k = pl.program_id(1)

    @pl.when(k == 0)
    def _():
        acc_ref[...] = jnp.zeros_like(acc_ref)

    xw = jnp.dot(x_ref[...], wt_ref[...], preferred_element_type=jnp.float32)
    acc_ref[...] += jnp.dot(
        adj_ref[...], xw.astype(adj_ref.dtype), preferred_element_type=jnp.float32
    )

    @pl.when(k == pl.num_programs(1) - 1)
    def _():
        y = acc_ref[...] * scale_ref[...] + shift_ref[...]          # f32 epilogue
        o_ref[...] = jnp.maximum(y, 0.0).astype(o_ref.dtype)


def _xw_kernel(x_ref, wt_ref, o_ref):
    """Feature transform only: o = x @ W^T (bf16 out, f32 accumulation)."""
    o_ref[...] = jnp.dot(
        x_ref[...], wt_ref[...], preferred_element_type=jnp.float32
    ).astype(o_ref.dtype)


def _adj_prop_kernel(adj_ref, xw_ref, scale_ref, shift_ref, o_ref, acc_ref):
    """Propagation only: relu((adj @ xw) * scale + shift), K-tiled over nodes."""
    k = pl.program_id(1)

    @pl.when(k == 0)
    def _():
        acc_ref[...] = jnp.zeros_like(acc_ref)

    acc_ref[...] += jnp.dot(
        adj_ref[...], xw_ref[...], preferred_element_type=jnp.float32
    )

    @pl.when(k == pl.num_programs(1) - 1)
    def _():
        y = acc_ref[...] * scale_ref[...] + shift_ref[...]
        o_ref[...] = jnp.maximum(y, 0.0).astype(o_ref.dtype)


def _hierarchy_kernel(*refs, num_hier, out_ch):
    """Whole post-GCN chain for one row tile of h, all weights VMEM-resident.

    Inputs (in order): h,
      wt0, s0, t0,
      for i in 1..H-1: wt_top_i, wt_bot_i, s_i, t_i,
      wt_g, b_g,
      for i in 0..H-1: w1_i, s1_i, t1_i, w2_i, b2_i.
    Outputs: og, ol_0 .. ol_{H-1}  (all log-softmaxed, f32)."""
    it = iter(refs)
    h_ref = next(it)
    x = h_ref[...]                                           # bf16 [t, h_p]

    def dot32(a, b_ref):
        return jnp.dot(a, b_ref[...], preferred_element_type=jnp.float32)

    # fcs_g[0] + BN + ReLU
    wt0, s0, t0 = next(it), next(it), next(it)
    hg = [jnp.maximum(dot32(x, wt0) * s0[...] + t0[...], 0.0)]

    # concat FCs: cat([hg[i-1], x]) @ W^T == hg[i-1] @ Wt_top + x @ Wt_bot
    for i in range(1, num_hier):
        wtt, wtb, s, t = next(it), next(it), next(it), next(it)
        y = dot32(hg[i - 1].astype(x.dtype), wtt) + dot32(x, wtb)
        hg.append(jnp.maximum(y * s[...] + t[...], 0.0))

    # global classifier + masked log-softmax
    wt_g, b_g = next(it), next(it)
    og = dot32(hg[-1].astype(x.dtype), wt_g) + b_g[...]
    og = _masked_log_softmax(og, out_ch)

    # local heads: FC + BN + ReLU + classifier + masked log-softmax
    ols = []
    for i in range(num_hier):
        w1, s1, t1, w2, b2 = next(it), next(it), next(it), next(it), next(it)
        hl = jnp.maximum(dot32(hg[i].astype(x.dtype), w1) * s1[...] + t1[...], 0.0)
        o = dot32(hl.astype(x.dtype), w2) + b2[...]
        ols.append(_masked_log_softmax(o, out_ch))

    og_ref = next(it)
    og_ref[...] = og.astype(og_ref.dtype)
    for i in range(num_hier):
        r = next(it)
        r[...] = ols[i].astype(r.dtype)


# ---------------------------------------------------------------------------
# pallas_call wrappers (all operands pre-padded: rows % tile == 0, cols % 128 == 0)
# ---------------------------------------------------------------------------
def normalize_adjacency(adj, n_p, n_valid):
    """Padded bf16 D^{-1/2}(A+I)D^{-1/2}; one f32 read + one bf16 write of A."""
    n = adj.shape[0]
    a_pad = _pad2(adj.astype(jnp.float32), n_p, n_p)
    deg = jnp.sum(adj, axis=-1) + 1.0                 # row sums of A + I
    d = jax.lax.rsqrt(jnp.maximum(deg, 1e-12))
    d_pad = jnp.pad(d, (0, n_p - n))                  # padded rows/cols scale to 0
    d_row = d_pad.reshape(n_p, 1)
    d_col = d_pad.reshape(1, n_p)

    tn = _largest_div_tile(n_p, _NORM_TILE_CAP)
    kernel = functools.partial(_normalize_adj_kernel, tile=tn, n_valid=n_valid)
    return pl.pallas_call(
        kernel,
        out_shape=jax.ShapeDtypeStruct((n_p, n_p), jnp.bfloat16),
        grid=(n_p // tn, n_p // tn),
        in_specs=[
            pl.BlockSpec((tn, tn), lambda i, k: (i, k)),
            pl.BlockSpec((tn, 1), lambda i, k: (i, 0)),
            pl.BlockSpec((1, tn), lambda i, k: (0, k)),
        ],
        out_specs=pl.BlockSpec((tn, tn), lambda i, k: (i, k)),
        compiler_params=_cparams(("parallel", "parallel")),
    )(a_pad, d_row, d_col)


def gcn_layer(adj_p, x_p, wt_p, scale_p, shift_p, tile):
    n_p = adj_p.shape[0]
    cin_p = x_p.shape[1]
    h_p = wt_p.shape[1]
    return pl.pallas_call(
        _gcn_layer_kernel,
        out_shape=jax.ShapeDtypeStruct((n_p, h_p), jnp.bfloat16),
        grid=(n_p // tile, n_p // tile),
        in_specs=[
            pl.BlockSpec((tile, tile), lambda i, k: (i, k)),    # adjacency tile
            pl.BlockSpec((tile, cin_p), lambda i, k: (k, 0)),   # node features (K tile)
            pl.BlockSpec((cin_p, h_p), lambda i, k: (0, 0)),    # W^T (resident)
            pl.BlockSpec((1, h_p), lambda i, k: (0, 0)),        # folded BN scale
            pl.BlockSpec((1, h_p), lambda i, k: (0, 0)),        # folded BN shift
        ],
        out_specs=pl.BlockSpec((tile, h_p), lambda i, k: (i, 0)),
        scratch_shapes=[pltpu.VMEM((tile, h_p), jnp.float32)],
        compiler_params=_cparams(("parallel", "arbitrary")),
    )(adj_p, x_p, wt_p, scale_p, shift_p)


def feature_transform(x_p, wt_p, tile):
    m_p, k_p = x_p.shape
    n_p = wt_p.shape[1]
    return pl.pallas_call(
        _xw_kernel,
        out_shape=jax.ShapeDtypeStruct((m_p, n_p), jnp.bfloat16),
        grid=(m_p // tile,),
        in_specs=[
            pl.BlockSpec((tile, k_p), lambda i: (i, 0)),
            pl.BlockSpec((k_p, n_p), lambda i: (0, 0)),
        ],
        out_specs=pl.BlockSpec((tile, n_p), lambda i: (i, 0)),
        compiler_params=_cparams(("parallel",)),
    )(x_p, wt_p)


def adj_propagate(adj_p, xw_p, scale_p, shift_p, tile):
    n_p = adj_p.shape[0]
    h_p = xw_p.shape[1]
    return pl.pallas_call(
        _adj_prop_kernel,
        out_shape=jax.ShapeDtypeStruct((n_p, h_p), jnp.bfloat16),
        grid=(n_p // tile, n_p // tile),
        in_specs=[
            pl.BlockSpec((tile, tile), lambda i, k: (i, k)),
            pl.BlockSpec((tile, h_p), lambda i, k: (k, 0)),
            pl.BlockSpec((1, h_p), lambda i, k: (0, 0)),
            pl.BlockSpec((1, h_p), lambda i, k: (0, 0)),
        ],
        out_specs=pl.BlockSpec((tile, h_p), lambda i, k: (i, 0)),
        scratch_shapes=[pltpu.VMEM((tile, h_p), jnp.float32)],
        compiler_params=_cparams(("parallel", "arbitrary")),
    )(adj_p, xw_p, scale_p, shift_p)


def hierarchy_chain(h_p_arr, prep, tile, *, num_hier, out_ch):
    """One fused pallas_call for fcs_g chain + out_g + all local heads."""
    n_p, h_dim = h_p_arr.shape
    o_p = prep["out_g"][0].shape[1]

    inputs = [h_p_arr]
    in_specs = [pl.BlockSpec((tile, h_dim), lambda i: (i, 0))]

    def add_full(arr):
        inputs.append(arr)
        r, c = arr.shape
        in_specs.append(pl.BlockSpec((r, c), lambda i: (0, 0)))

    wt0, s0, t0 = prep["fcs_g"][0]
    for a in (wt0, s0, t0):
        add_full(a)
    for entry in prep["fcs_g"][1:]:                 # (wt_top, wt_bot, s, t)
        for a in entry:
            add_full(a)
    wt_g, b_g = prep["out_g"]
    add_full(wt_g)
    add_full(b_g)
    for head in prep["heads_l"]:                    # (w1, s1, t1, w2, b2)
        for a in head:
            add_full(a)

    n_out = 1 + num_hier
    out_shape = tuple(
        jax.ShapeDtypeStruct((n_p, o_p), jnp.float32) for _ in range(n_out)
    )
    out_specs = tuple(
        pl.BlockSpec((tile, o_p), lambda i: (i, 0)) for _ in range(n_out)
    )

    kernel = functools.partial(_hierarchy_kernel, num_hier=num_hier, out_ch=out_ch)
    outs = pl.pallas_call(
        kernel,
        out_shape=out_shape,
        grid=(n_p // tile,),
        in_specs=in_specs,
        out_specs=out_specs,
        compiler_params=_cparams(("parallel",)),
    )(*inputs)
    return outs[0], list(outs[1:])


# ---------------------------------------------------------------------------
# Parameter initialization (deterministic, PyTorch-like fan-in uniform)
# ---------------------------------------------------------------------------
def init_linear(key, fan_in, fan_out):
    k1, k2 = jax.random.split(key)
    bound = 1.0 / jnp.sqrt(float(fan_in))
    wt = jax.random.uniform(k1, (fan_in, fan_out), jnp.float32, -bound, bound)  # W^T
    b = jax.random.uniform(k2, (fan_out,), jnp.float32, -bound, bound)
    return {"wt": wt, "b": b}


def init_bn(key, c):
    k1, k2, k3, k4 = jax.random.split(key, 4)
    return {
        "gamma": 1.0 + 0.1 * jax.random.normal(k1, (c,), jnp.float32),
        "beta": 0.1 * jax.random.normal(k2, (c,), jnp.float32),
        "mean": 0.1 * jax.random.normal(k3, (c,), jnp.float32),
        "var": 1.0 + 0.5 * jax.random.uniform(k4, (c,), jnp.float32),
    }


def bn_fold(bn, linear_bias, eps=1e-5):
    """Fold eval-mode BN applied to (y + b) into per-column scale & shift."""
    s = bn["gamma"] / jnp.sqrt(bn["var"] + eps)
    t = bn["beta"] - bn["mean"] * s + linear_bias * s
    return s, t


def init_hicfl_params(key, in_ch, hid, out_ch, num_layers, num_hierarchy):
    n_keys = 2 * num_layers + 5 * num_hierarchy + 3
    keys = iter(jax.random.split(key, n_keys))
    p = {"convs": [], "bns": [], "fcs_g": [], "bns_g": [],
         "fcs_l": [], "bns_l": [], "out_l": []}
    p["convs"].append(init_linear(next(keys), in_ch, hid))
    p["bns"].append(init_bn(next(keys), hid))
    for _ in range(num_layers - 1):
        p["convs"].append(init_linear(next(keys), hid, hid))
        p["bns"].append(init_bn(next(keys), hid))
    p["fcs_g"].append(init_linear(next(keys), hid, hid))
    p["bns_g"].append(init_bn(next(keys), hid))
    for _ in range(num_hierarchy - 1):
        p["fcs_g"].append(init_linear(next(keys), hid * 2, hid))
        p["bns_g"].append(init_bn(next(keys), hid))
    for _ in range(num_hierarchy):
        p["fcs_l"].append(init_linear(next(keys), hid, hid))
        p["bns_l"].append(init_bn(next(keys), hid))
    p["out_g"] = init_linear(next(keys), hid, out_ch)
    for _ in range(num_hierarchy):
        p["out_l"].append(init_linear(next(keys), hid, out_ch))
    return p


# ---------------------------------------------------------------------------
# Pad / fold / cast parameters once (bf16 weights, f32 folded BN affine)
# ---------------------------------------------------------------------------
def prepare_params(params, in_ch, hid, out_ch):
    cin_p = _round_up(in_ch, _LANE)
    h_p = _round_up(hid, _LANE)
    o_p = _round_up(out_ch, _LANE)

    def pad_wt(wt, k_p, n_p):
        return _pad2(jnp.asarray(wt, jnp.float32), k_p, n_p).astype(jnp.bfloat16)

    def fold_pad(bn, bias, n_p):
        s, t = bn_fold(bn, bias)
        return _pad_row(s, n_p, fill=1.0), _pad_row(t, n_p, fill=0.0)

    prep = {"convs": [], "fcs_g": [], "heads_l": []}

    # GCN stack
    k_in = cin_p
    for conv, bn in zip(params["convs"], params["bns"]):
        wt_p = pad_wt(conv["wt"], k_in, h_p)
        s_p, t_p = fold_pad(bn, conv["b"], h_p)
        prep["convs"].append((wt_p, s_p, t_p))
        k_in = h_p

    # global hierarchy: first FC, then concat-FCs with split weights
    wt0 = pad_wt(params["fcs_g"][0]["wt"], h_p, h_p)
    s0, t0 = fold_pad(params["bns_g"][0], params["fcs_g"][0]["b"], h_p)
    prep["fcs_g"].append((wt0, s0, t0))
    for i, fc in enumerate(params["fcs_g"][1:]):
        wt = fc["wt"]                                   # [2*hid, hid] == W^T
        wt_top = pad_wt(wt[:hid], h_p, h_p)             # multiplies hg[i]
        wt_bot = pad_wt(wt[hid:], h_p, h_p)             # multiplies x
        s_p, t_p = fold_pad(params["bns_g"][i + 1], fc["b"], h_p)
        prep["fcs_g"].append((wt_top, wt_bot, s_p, t_p))

    # global classifier
    prep["out_g"] = (pad_wt(params["out_g"]["wt"], h_p, o_p),
                     _pad_row(params["out_g"]["b"], o_p))

    # local heads (FC + BN + ReLU + classifier fused)
    for i in range(len(params["fcs_l"])):
        wt1 = pad_wt(params["fcs_l"][i]["wt"], h_p, h_p)
        s1, t1 = fold_pad(params["bns_l"][i], params["fcs_l"][i]["b"], h_p)
        wt2 = pad_wt(params["out_l"][i]["wt"], h_p, o_p)
        b2 = _pad_row(params["out_l"][i]["b"], o_p)
        prep["heads_l"].append((wt1, s1, t1, wt2, b2))
    return prep


# ---------------------------------------------------------------------------
# Forward pass (eval mode: dropout == identity)
# ---------------------------------------------------------------------------
def hicfl_forward(prep, x, adj, *, out_ch, num_hier):
    n, in_ch = x.shape
    cin_p = _round_up(in_ch, _LANE)
    tile, n_p = _choose_node_tile(n)

    # adjacency: self loops + symmetric normalization + pad + bf16, in-kernel
    adj_n = normalize_adjacency(adj, n_p, n)

    # node features: pad + single bf16 cast for the MXU
    h = _pad2(x.astype(jnp.float32), n_p, cin_p).astype(jnp.bfloat16)

    # GCN stack; split the feature transform out when cin_p > h_p (first layer)
    for wt_p, s_p, t_p in prep["convs"]:
        k_p, h_p = wt_p.shape
        if k_p > h_p:
            xw = feature_transform(h, wt_p, _transform_tile(n_p, k_p))
            h = adj_propagate(adj_n, xw, s_p, t_p, tile)
        else:
            h = gcn_layer(adj_n, h, wt_p, s_p, t_p, tile)

    # whole hierarchy (global chain + classifier + all local heads) in one call
    t_h = _largest_div_tile(n_p, _HIER_TILE_CAP)
    og_p, ol_p = hierarchy_chain(h, prep, t_h, num_hier=num_hier, out_ch=out_ch)
    og = og_p[:n, :out_ch]
    ol = [o[:n, :out_ch] for o in ol_p]
    return og, ol


# ---------------------------------------------------------------------------
# Pure-JAX f32 reference (eval-mode semantics of the PyTorch module)
# ---------------------------------------------------------------------------
def hicfl_reference(params, x, adj, *, out_ch, num_hier, eps=1e-5):
    n = adj.shape[0]
    a_hat = adj + jnp.eye(n, dtype=jnp.float32)
    deg = jnp.sum(a_hat, axis=-1)
    d = jax.lax.rsqrt(jnp.maximum(deg, 1e-12))
    adj_n = a_hat * d[:, None] * d[None, :]

    def bn(y, b):
        return (y - b["mean"]) / jnp.sqrt(b["var"] + eps) * b["gamma"] + b["beta"]

    h = x
    for conv, b in zip(params["convs"], params["bns"]):
        h = adj_n @ (h @ conv["wt"]) + conv["b"]
        h = jax.nn.relu(bn(h, b))
    hg = [jax.nn.relu(bn(h @ params["fcs_g"][0]["wt"] + params["fcs_g"][0]["b"],
                         params["bns_g"][0]))]
    for i in range(1, num_hier):
        cat = jnp.concatenate([hg[i - 1], h], axis=-1)
        y = cat @ params["fcs_g"][i]["wt"] + params["fcs_g"][i]["b"]
        hg.append(jax.nn.relu(bn(y, params["bns_g"][i])))
    og = jax.nn.log_softmax(hg[-1] @ params["out_g"]["wt"] + params["out_g"]["b"], -1)
    ol = []
    for i in range(num_hier):
        hl = jax.nn.relu(bn(hg[i] @ params["fcs_l"][i]["wt"] + params["fcs_l"][i]["b"],
                            params["bns_l"][i]))
        ol.append(jax.nn.log_softmax(hl @ params["out_l"][i]["wt"]
                                     + params["out_l"][i]["b"], -1))
    return og, ol


# ---------------------------------------------------------------------------
if __name__ == "__main__":
    # small shapes consistent with the module's forward;
    # IN_CH > 128 exercises the split feature-transform path of the first layer.
    N_NODES = 128
    IN_CH, HID, OUT_CH = 200, 32, 8
    NUM_LAYERS, NUM_HIER, DROPOUT = 2, 3, 0.5   # dropout unused in eval mode

    key = jax.random.PRNGKey(0)
    k_x, k_adj, k_par = jax.random.split(key, 3)

    x = jax.random.normal(k_x, (N_NODES, IN_CH), jnp.float32)
    # random symmetric binary adjacency (no self loops; kernel adds them)
    r = jax.random.uniform(k_adj, (N_NODES, N_NODES))
    adj = (r < 0.05).astype(jnp.float32)
    adj = jnp.maximum(adj, adj.T)
    adj = adj * (1.0 - jnp.eye(N_NODES, dtype=jnp.float32))

    params = init_hicfl_params(k_par, IN_CH, HID, OUT_CH, NUM_LAYERS, NUM_HIER)
    prep = prepare_params(params, IN_CH, HID, OUT_CH)

    fwd = jax.jit(functools.partial(hicfl_forward, out_ch=OUT_CH, num_hier=NUM_HIER))
    og, ol = fwd(prep, x, adj)
    og = jax.block_until_ready(og)
    ol = [jax.block_until_ready(o) for o in ol]

    assert og.shape == (N_NODES, OUT_CH)
    assert len(ol) == NUM_HIER and all(o.shape == (N_NODES, OUT_CH) for o in ol)

    # numerical check against the f32 plain-JAX reference (bf16 MXU -> loose tol)
    og_ref, ol_ref = hicfl_reference(params, x, adj, out_ch=OUT_CH, num_hier=NUM_HIER)
    max_diff = float(jnp.max(jnp.abs(og - og_ref)))
    for a, b in zip(ol, ol_ref):
        max_diff = max(max_diff, float(jnp.max(jnp.abs(a - b))))
    assert max_diff < 0.2, f"max |pallas - f32 reference| = {max_diff}"

    # log-softmax sanity: rows exponentiate-sum to 1, all finite
    for o in [og] + ol:
        assert bool(jnp.all(jnp.isfinite(o)))
        assert bool(jnp.all(jnp.abs(jnp.sum(jnp.exp(o), axis=-1) - 1.0) < 2e-3))
    print("KERNEL_OK")
</pallas_src>

<mosaic_0001>
module attributes {stable_mosaic.version = 11 : i64} {
  func.func @_xw_kernel(%arg0: i32, %arg1: memref<128x256xbf16, #tpu.memory_space<vmem>>, %arg2: memref<256x128xbf16, #tpu.memory_space<vmem>>, %arg3: memref<128x128xbf16, #tpu.memory_space<vmem>>) attributes {dimension_semantics = [#tpu.dimension_semantics<parallel>], iteration_bounds = array<i64: 1>, scalar_prefetch = 0 : i64, scratch_operands = 0 : i64, tpu.core_type = #tpu.core_type<tc>, window_params = [{transform_indices = @transform_0, window_bounds = array<i64: 128, 256>}, {pipeline_mode = #tpu.pipeline_mode<synchronous>, transform_indices = @transform_1, window_bounds = array<i64: 256, 128>}, {transform_indices = @transform_2, window_bounds = array<i64: 128, 128>}]} {
    %c0 = arith.constant 0 : index
    %c0_0 = arith.constant 0 : index
    %0 = vector.load %arg1[%c0, %c0_0] : memref<128x256xbf16, #tpu.memory_space<vmem>>, vector<128x256xbf16>
    %c0_1 = arith.constant 0 : index
    %c0_2 = arith.constant 0 : index
    %1 = vector.load %arg2[%c0_1, %c0_2] : memref<256x128xbf16, #tpu.memory_space<vmem>>, vector<256x128xbf16>
    %cst = arith.constant dense<0.000000e+00> : vector<128x128xf32>
    %2 = tpu.matmul %0, %1, %cst {dimension_numbers = #tpu.dot_dimension_numbers<[1], [0], [0], [1], [0, 0, 1, 1], [], []>} : vector<128x256xbf16>, vector<256x128xbf16>, vector<128x128xf32> -> vector<128x128xf32>
    %3 = arith.truncf %2 : vector<128x128xf32> to vector<128x128xbf16>
    %c0_3 = arith.constant 0 : index
    %c0_4 = arith.constant 0 : index
    %4 = vector.load %arg3[%c0_3, %c0_4] : memref<128x128xbf16, #tpu.memory_space<vmem>>, vector<128x128xbf16>
    tpu.vector_store %arg3[%c0_3, %c0_4], %3 {strides = array<i32>} : memref<128x128xbf16, #tpu.memory_space<vmem>>, vector<128x128xbf16>,
    return
  }
  func.func @transform_0(%arg0: i32) -> (i32, i32) {
    %c0_i32 = arith.constant 0 : i32
    %c0_i32_0 = arith.constant 0 : i32
    return %arg0, %c0_i32 : i32, i32
  }
  func.func @transform_1(%arg0: i32) -> (i32, i32) {
    %c0_i32 = arith.constant 0 : i32
    %c0_i32_0 = arith.constant 0 : i32
    %c0_i32_1 = arith.constant 0 : i32
    return %c0_i32, %c0_i32_0 : i32, i32
  }
  func.func @transform_2(%arg0: i32) -> (i32, i32) {
    %c0_i32 = arith.constant 0 : i32
    %c0_i32_0 = arith.constant 0 : i32
    return %arg0, %c0_i32 : i32, i32
  }
}

module attributes {stable_mosaic.version = 11 : i64} {
  func.func @_adj_prop_kernel(%arg0: i32, %arg1: i32, %arg2: memref<128x128xbf16, #tpu.memory_space<vmem>>, %arg3: memref<128x128xbf16, #tpu.memory_space<vmem>>, %arg4: memref<1x128xf32, #tpu.memory_space<vmem>>, %arg5: memref<1x128xf32, #tpu.memory_space<vmem>>, %arg6: memref<128x128xbf16, #tpu.memory_space<vmem>>, %arg7: memref<128x128xf32, #tpu.memory_space<vmem>>) attributes {dimension_semantics = [#tpu.dimension_semantics<parallel>, #tpu.dimension_semantics<arbitrary>], iteration_bounds = array<i64: 1, 1>, scalar_prefetch = 0 : i64, scratch_operands = 1 : i64, tpu.core_type = #tpu.core_type<tc>, window_params = [{transform_indices = @transform_0, window_bounds = array<i64: 128, 128>}, {transform_indices = @transform_1, window_bounds = array<i64: 128, 128>}, {pipeline_mode = #tpu.pipeline_mode<synchronous>, transform_indices = @transform_2, window_bounds = array<i64: 1, 128>}, {pipeline_mode = #tpu.pipeline_mode<synchronous>, transform_indices = @transform_3, window_bounds = array<i64: 1, 128>}, {transform_indices = @transform_4, window_bounds = array<i64: 128, 128>}]} {
    %c0_i32 = arith.constant 0 : i32
    %0 = arith.cmpi eq, %arg1, %c0_i32 : i32
    %1 = arith.extui %0 : i1 to i32
    %c0_i32_0 = arith.constant 0 : i32
    %2 = arith.cmpi ne, %1, %c0_i32_0 : i32
    scf.if %2 {
      %cst_10 = arith.constant 0.000000e+00 : f32
      %12 = vector.broadcast %cst_10 : f32 to vector<128x128xf32>
      %c0_11 = arith.constant 0 : index
      %c0_12 = arith.constant 0 : index
      %13 = vector.load %arg7[%c0_11, %c0_12] : memref<128x128xf32, #tpu.memory_space<vmem>>, vector<128x128xf32>
      tpu.vector_store %arg7[%c0_11, %c0_12], %12 {strides = array<i32>} : memref<128x128xf32, #tpu.memory_space<vmem>>, vector<128x128xf32>,
    } else {
    }
    %c0 = arith.constant 0 : index
    %c0_1 = arith.constant 0 : index
    %3 = vector.load %arg7[%c0, %c0_1] : memref<128x128xf32, #tpu.memory_space<vmem>>, vector<128x128xf32>
    %c0_2 = arith.constant 0 : index
    %c0_3 = arith.constant 0 : index
    %4 = vector.load %arg2[%c0_2, %c0_3] : memref<128x128xbf16, #tpu.memory_space<vmem>>, vector<128x128xbf16>
    %c0_4 = arith.constant 0 : index
    %c0_5 = arith.constant 0 : index
    %5 = vector.load %arg3[%c0_4, %c0_5] : memref<128x128xbf16, #tpu.memory_space<vmem>>, vector<128x128xbf16>
    %cst = arith.constant dense<0.000000e+00> : vector<128x128xf32>
    %6 = tpu.matmul %4, %5, %cst {dimension_numbers = #tpu.dot_dimension_numbers<[1], [0], [0], [1], [0, 0, 1, 1], [], []>} : vector<128x128xbf16>, vector<128x128xbf16>, vector<128x128xf32> -> vector<128x128xf32>
    %7 = arith.addf %3, %6 : vector<128x128xf32>
    %c0_6 = arith.constant 0 : index
    %c0_7 = arith.constant 0 : index
    %8 = vector.load %arg7[%c0_6, %c0_7] : memref<128x128xf32, #tpu.memory_space<vmem>>, vector<128x128xf32>
    tpu.vector_store %arg7[%c0_6, %c0_7], %7 {strides = array<i32>} : memref<128x128xf32, #tpu.memory_space<vmem>>, vector<128x128xf32>,
    %c0_i32_8 = arith.constant 0 : i32
    %9 = arith.cmpi eq, %arg1, %c0_i32_8 : i32
    %10 = arith.extui %9 : i1 to i32
    %c0_i32_9 = arith.constant 0 : i32
    %11 = arith.cmpi ne, %10, %c0_i32_9 : i32
    scf.if %11 {
      %c0_10 = arith.constant 0 : index
      %c0_11 = arith.constant 0 : index
      %12 = vector.load %arg7[%c0_10, %c0_11] : memref<128x128xf32, #tpu.memory_space<vmem>>, vector<128x128xf32>
      %c0_12 = arith.constant 0 : index
      %c0_13 = arith.constant 0 : index
      %13 = vector.load %arg4[%c0_12, %c0_13] : memref<1x128xf32, #tpu.memory_space<vmem>>, vector<1x128xf32>
      %14 = vector.broadcast %13 : vector<1x128xf32> to vector<128x128xf32>
      %15 = arith.mulf %12, %14 : vector<128x128xf32>
      %c0_14 = arith.constant 0 : index
      %c0_15 = arith.constant 0 : index
      %16 = vector.load %arg5[%c0_14, %c0_15] : memref<1x128xf32, #tpu.memory_space<vmem>>, vector<1x128xf32>
      %17 = vector.broadcast %16 : vector<1x128xf32> to vector<128x128xf32>
      %18 = arith.addf %15, %17 : vector<128x128xf32>
      %cst_16 = arith.constant 0.000000e+00 : f32
      %19 = vector.broadcast %cst_16 : f32 to vector<128x128xf32>
      %20 = arith.maximumf %18, %19 : vector<128x128xf32>
      %21 = arith.truncf %20 : vector<128x128xf32> to vector<128x128xbf16>
      %c0_17 = arith.constant 0 : index
      %c0_18 = arith.constant 0 : index
      %22 = vector.load %arg6[%c0_17, %c0_18] : memref<128x128xbf16, #tpu.memory_space<vmem>>, vector<128x128xbf16>
      tpu.vector_store %arg6[%c0_17, %c0_18], %21 {strides = array<i32>} : memref<128x128xbf16, #tpu.memory_space<vmem>>, vector<128x128xbf16>,
    } else {
    }
    return
  }
  func.func @transform_0(%arg0: i32, %arg1: i32) -> (i32, i32) {
    %c0_i32 = arith.constant 0 : i32
    return %arg0, %arg1 : i32, i32
  }
  func.func @transform_1(%arg0: i32, %arg1: i32) -> (i32, i32) {
    %c0_i32 = arith.constant 0 : i32
    %c0_i32_0 = arith.constant 0 : i32
    return %arg1, %c0_i32 : i32, i32
  }
  func.func @transform_2(%arg0: i32, %arg1: i32) -> (i32, i32) {
    %c0_i32 = arith.constant 0 : i32
    %c0_i32_0 = arith.constant 0 : i32
    %c0_i32_1 = arith.constant 0 : i32
    return %c0_i32, %c0_i32_0 : i32, i32
  }
  func.func @transform_3(%arg0: i32, %arg1: i32) -> (i32, i32) {
    %c0_i32 = arith.constant 0 : i32
    %c0_i32_0 = arith.constant 0 : i32
    %c0_i32_1 = arith.constant 0 : i32
    return %c0_i32, %c0_i32_0 : i32, i32
  }
  func.func @transform_4(%arg0: i32, %arg1: i32) -> (i32, i32) {
    %c0_i32 = arith.constant 0 : i32
    %c0_i32_0 = arith.constant 0 : i32
    return %arg0, %c0_i32 : i32, i32
  }
}

module attributes {stable_mosaic.version = 11 : i64} {
  func.func @_gcn_layer_kernel(%arg0: i32, %arg1: i32, %arg2: memref<128x128xbf16, #tpu.memory_space<vmem>>, %arg3: memref<128x128xbf16, #tpu.memory_space<vmem>>, %arg4: memref<128x128xbf16, #tpu.memory_space<vmem>>, %arg5: memref<1x128xf32, #tpu.memory_space<vmem>>, %arg6: memref<1x128xf32, #tpu.memory_space<vmem>>, %arg7: memref<128x128xbf16, #tpu.memory_space<vmem>>, %arg8: memref<128x128xf32, #tpu.memory_space<vmem>>) attributes {dimension_semantics = [#tpu.dimension_semantics<parallel>, #tpu.dimension_semantics<arbitrary>], iteration_bounds = array<i64: 1, 1>, scalar_prefetch = 0 : i64, scratch_operands = 1 : i64, tpu.core_type = #tpu.core_type<tc>, window_params = [{transform_indices = @transform_0, window_bounds = array<i64: 128, 128>}, {transform_indices = @transform_1, window_bounds = array<i64: 128, 128>}, {pipeline_mode = #tpu.pipeline_mode<synchronous>, transform_indices = @transform_2, window_bounds = array<i64: 128, 128>}, {pipeline_mode = #tpu.pipeline_mode<synchronous>, transform_indices = @transform_3, window_bounds = array<i64: 1, 128>}, {pipeline_mode = #tpu.pipeline_mode<synchronous>, transform_indices = @transform_4, window_bounds = array<i64: 1, 128>}, {transform_indices = @transform_5, window_bounds = array<i64: 128, 128>}]} {
    %c0_i32 = arith.constant 0 : i32
    %0 = arith.cmpi eq, %arg1, %c0_i32 : i32
    %1 = arith.extui %0 : i1 to i32
    %c0_i32_0 = arith.constant 0 : i32
    %2 = arith.cmpi ne, %1, %c0_i32_0 : i32
    scf.if %2 {
      %cst_13 = arith.constant 0.000000e+00 : f32
      %15 = vector.broadcast %cst_13 : f32 to vector<128x128xf32>
      %c0_14 = arith.constant 0 : index
      %c0_15 = arith.constant 0 : index
      %16 = vector.load %arg8[%c0_14, %c0_15] : memref<128x128xf32, #tpu.memory_space<vmem>>, vector<128x128xf32>
      tpu.vector_store %arg8[%c0_14, %c0_15], %15 {strides = array<i32>} : memref<128x128xf32, #tpu.memory_space<vmem>>, vector<128x128xf32>,
    } else {
    }
    %c0 = arith.constant 0 : index
    %c0_1 = arith.constant 0 : index
    %3 = vector.load %arg3[%c0, %c0_1] : memref<128x128xbf16, #tpu.memory_space<vmem>>, vector<128x128xbf16>
    %c0_2 = arith.constant 0 : index
    %c0_3 = arith.constant 0 : index
    %4 = vector.load %arg4[%c0_2, %c0_3] : memref<128x128xbf16, #tpu.memory_space<vmem>>, vector<128x128xbf16>
    %cst = arith.constant dense<0.000000e+00> : vector<128x128xf32>
    %5 = tpu.matmul %3, %4, %cst {dimension_numbers = #tpu.dot_dimension_numbers<[1], [0], [0], [1], [0, 0, 1, 1], [], []>} : vector<128x128xbf16>, vector<128x128xbf16>, vector<128x128xf32> -> vector<128x128xf32>
    %c0_4 = arith.constant 0 : index
    %c0_5 = arith.constant 0 : index
    %6 = vector.load %arg8[%c0_4, %c0_5] : memref<128x128xf32, #tpu.memory_space<vmem>>, vector<128x128xf32>
    %c0_6 = arith.constant 0 : index
    %c0_7 = arith.constant 0 : index
    %7 = vector.load %arg2[%c0_6, %c0_7] : memref<128x128xbf16, #tpu.memory_space<vmem>>, vector<128x128xbf16>
    %8 = arith.truncf %5 : vector<128x128xf32> to vector<128x128xbf16>
    %cst_8 = arith.constant dense<0.000000e+00> : vector<128x128xf32>
    %9 = tpu.matmul %7, %8, %cst_8 {dimension_numbers = #tpu.dot_dimension_numbers<[1], [0], [0], [1], [0, 0, 1, 1], [], []>} : vector<128x128xbf16>, vector<128x128xbf16>, vector<128x128xf32> -> vector<128x128xf32>
    %10 = arith.addf %6, %9 : vector<128x128xf32>
    %c0_9 = arith.constant 0 : index
    %c0_10 = arith.constant 0 : index
    %11 = vector.load %arg8[%c0_9, %c0_10] : memref<128x128xf32, #tpu.memory_space<vmem>>, vector<128x128xf32>
    tpu.vector_store %arg8[%c0_9, %c0_10], %10 {strides = array<i32>} : memref<128x128xf32, #tpu.memory_space<vmem>>, vector<128x128xf32>,
    %c0_i32_11 = arith.constant 0 : i32
    %12 = arith.cmpi eq, %arg1, %c0_i32_11 : i32
    %13 = arith.extui %12 : i1 to i32
    %c0_i32_12 = arith.constant 0 : i32
    %14 = arith.cmpi ne, %13, %c0_i32_12 : i32
    scf.if %14 {
      %c0_13 = arith.constant 0 : index
      %c0_14 = arith.constant 0 : index
      %15 = vector.load %arg8[%c0_13, %c0_14] : memref<128x128xf32, #tpu.memory_space<vmem>>, vector<128x128xf32>
      %c0_15 = arith.constant 0 : index
      %c0_16 = arith.constant 0 : index
      %16 = vector.load %arg5[%c0_15, %c0_16] : memref<1x128xf32, #tpu.memory_space<vmem>>, vector<1x128xf32>
      %17 = vector.broadcast %16 : vector<1x128xf32> to vector<128x128xf32>
      %18 = arith.mulf %15, %17 : vector<128x128xf32>
      %c0_17 = arith.constant 0 : index
      %c0_18 = arith.constant 0 : index
      %19 = vector.load %arg6[%c0_17, %c0_18] : memref<1x128xf32, #tpu.memory_space<vmem>>, vector<1x128xf32>
      %20 = vector.broadcast %19 : vector<1x128xf32> to vector<128x128xf32>
      %21 = arith.addf %18, %20 : vector<128x128xf32>
      %cst_19 = arith.constant 0.000000e+00 : f32
      %22 = vector.broadcast %cst_19 : f32 to vector<128x128xf32>
      %23 = arith.maximumf %21, %22 : vector<128x128xf32>
      %24 = arith.truncf %23 : vector<128x128xf32> to vector<128x128xbf16>
      %c0_20 = arith.constant 0 : index
      %c0_21 = arith.constant 0 : index
      %25 = vector.load %arg7[%c0_20, %c0_21] : memref<128x128xbf16, #tpu.memory_space<vmem>>, vector<128x128xbf16>
      tpu.vector_store %arg7[%c0_20, %c0_21], %24 {strides = array<i32>} : memref<128x128xbf16, #tpu.memory_space<vmem>>, vector<128x128xbf16>,
    } else {
    }
    return
  }
  func.func @transform_0(%arg0: i32, %arg1: i32) -> (i32, i32) {
    %c0_i32 = arith.constant 0 : i32
    return %arg0, %arg1 : i32, i32
  }
  func.func @transform_1(%arg0: i32, %arg1: i32) -> (i32, i32) {
    %c0_i32 = arith.constant 0 : i32
    %c0_i32_0 = arith.constant 0 : i32
    return %arg1, %c0_i32 : i32, i32
  }
  func.func @transform_2(%arg0: i32, %arg1: i32) -> (i32, i32) {
    %c0_i32 = arith.constant 0 : i32
    %c0_i32_0 = arith.constant 0 : i32
    %c0_i32_1 = arith.constant 0 : i32
    return %c0_i32, %c0_i32_0 : i32, i32
  }
  func.func @transform_3(%arg0: i32, %arg1: i32) -> (i32, i32) {
    %c0_i32 = arith.constant 0 : i32
    %c0_i32_0 = arith.constant 0 : i32
    %c0_i32_1 = arith.constant 0 : i32
    return %c0_i32, %c0_i32_0 : i32, i32
  }
  func.func @transform_4(%arg0: i32, %arg1: i32) -> (i32, i32) {
    %c0_i32 = arith.constant 0 : i32
    %c0_i32_0 = arith.constant 0 : i32
    %c0_i32_1 = arith.constant 0 : i32
    return %c0_i32, %c0_i32_0 : i32, i32
  }
  func.func @transform_5(%arg0: i32, %arg1: i32) -> (i32, i32) {
    %c0_i32 = arith.constant 0 : i32
    %c0_i32_0 = arith.constant 0 : i32
    return %arg0, %c0_i32 : i32, i32
  }
}

module attributes {stable_mosaic.version = 11 : i64} {
  func.func @_normalize_adj_kernel(%arg0: i32, %arg1: i32, %arg2: memref<128x128xf32, #tpu.memory_space<vmem>>, %arg3: memref<128x1xf32, #tpu.memory_space<vmem>>, %arg4: memref<1x128xf32, #tpu.memory_space<vmem>>, %arg5: memref<128x128xbf16, #tpu.memory_space<vmem>>) attributes {dimension_semantics = [#tpu.dimension_semantics<parallel>, #tpu.dimension_semantics<parallel>], iteration_bounds = array<i64: 1, 1>, scalar_prefetch = 0 : i64, scratch_operands = 0 : i64, tpu.core_type = #tpu.core_type<tc>, window_params = [{transform_indices = @transform_0, window_bounds = array<i64: 128, 128>}, {transform_indices = @transform_1, window_bounds = array<i64: 128, 1>}, {transform_indices = @transform_2, window_bounds = array<i64: 1, 128>}, {transform_indices = @transform_3, window_bounds = array<i64: 128, 128>}]} {
    %0 = tpu.iota {dimensions = array<i32: 0>} : vector<128x128xi32>
    %c128_i32 = arith.constant 128 : i32
    %1 = arith.muli %arg0, %c128_i32 : i32
    %2 = vector.broadcast %1 : i32 to vector<128x128xi32>
    %3 = arith.addi %0, %2 : vector<128x128xi32>
    %4 = tpu.iota {dimensions = array<i32: 1>} : vector<128x128xi32>
    %c128_i32_0 = arith.constant 128 : i32
    %5 = arith.muli %arg1, %c128_i32_0 : i32
    %6 = vector.broadcast %5 : i32 to vector<128x128xi32>
    %7 = arith.addi %4, %6 : vector<128x128xi32>
    %8 = arith.cmpi eq, %3, %7 : vector<128x128xi32>
    %c128_i32_1 = arith.constant 128 : i32
    %9 = vector.broadcast %c128_i32_1 : i32 to vector<128x128xi32>
    %10 = arith.cmpi slt, %3, %9 : vector<128x128xi32>
    %11 = arith.andi %8, %10 : vector<128x128xi1>
    %cst = arith.constant 1.000000e+00 : f32
    %cst_2 = arith.constant 0.000000e+00 : f32
    %12 = vector.broadcast %cst : f32 to vector<128x128xf32>
    %13 = vector.broadcast %cst_2 : f32 to vector<128x128xf32>
    %14 = arith.select %11, %12, %13 : vector<128x128xi1>, vector<128x128xf32>
    %c0 = arith.constant 0 : index
    %c0_3 = arith.constant 0 : index
    %15 = vector.load %arg2[%c0, %c0_3] : memref<128x128xf32, #tpu.memory_space<vmem>>, vector<128x128xf32>
    %16 = arith.addf %15, %14 : vector<128x128xf32>
    %c0_4 = arith.constant 0 : index
    %c0_5 = arith.constant 0 : index
    %17 = vector.load %arg3[%c0_4, %c0_5] : memref<128x1xf32, #tpu.memory_space<vmem>>, vector<128x1xf32>
    %18 = vector.broadcast %17 : vector<128x1xf32> to vector<128x128xf32>
    %19 = arith.mulf %16, %18 : vector<128x128xf32>
    %c0_6 = arith.constant 0 : index
    %c0_7 = arith.constant 0 : index
    %20 = vector.load %arg4[%c0_6, %c0_7] : memref<1x128xf32, #tpu.memory_space<vmem>>, vector<1x128xf32>
    %21 = vector.broadcast %20 : vector<1x128xf32> to vector<128x128xf32>
    %22 = arith.mulf %19, %21 : vector<128x128xf32>
    %23 = arith.truncf %22 : vector<128x128xf32> to vector<128x128xbf16>
    %c0_8 = arith.constant 0 : index
    %c0_9 = arith.constant 0 : index
    %24 = vector.load %arg5[%c0_8, %c0_9] : memref<128x128xbf16, #tpu.memory_space<vmem>>, vector<128x128xbf16>
    tpu.vector_store %arg5[%c0_8, %c0_9], %23 {strides = array<i32>} : memref<128x128xbf16, #tpu.memory_space<vmem>>, vector<128x128xbf16>,
    return
  }
  func.func @transform_0(%arg0: i32, %arg1: i32) -> (i32, i32) {
    %c0_i32 = arith.constant 0 : i32
    return %arg0, %arg1 : i32, i32
  }
  func.func @transform_1(%arg0: i32, %arg1: i32) -> (i32, i32) {
    %c0_i32 = arith.constant 0 : i32
    %c0_i32_0 = arith.constant 0 : i32
    return %arg0, %c0_i32 : i32, i32
  }
  func.func @transform_2(%arg0: i32, %arg1: i32) -> (i32, i32) {
    %c0_i32 = arith.constant 0 : i32
    %c0_i32_0 = arith.constant 0 : i32
    return %c0_i32, %arg1 : i32, i32
  }
  func.func @transform_3(%arg0: i32, %arg1: i32) -> (i32, i32) {
    %c0_i32 = arith.constant 0 : i32
    return %arg0, %arg1 : i32, i32
  }
}

module attributes {stable_mosaic.version = 11 : i64} {
  func.func @_hierarchy_kernel(%arg0: i32, %arg1: memref<128x128xbf16, #tpu.memory_space<vmem>>, %arg2: memref<128x128xbf16, #tpu.memory_space<vmem>>, %arg3: memref<1x128xf32, #tpu.memory_space<vmem>>, %arg4: memref<1x128xf32, #tpu.memory_space<vmem>>, %arg5: memref<128x128xbf16, #tpu.memory_space<vmem>>, %arg6: memref<128x128xbf16, #tpu.memory_space<vmem>>, %arg7: memref<1x128xf32, #tpu.memory_space<vmem>>, %arg8: memref<1x128xf32, #tpu.memory_space<vmem>>, %arg9: memref<128x128xbf16, #tpu.memory_space<vmem>>, %arg10: memref<128x128xbf16, #tpu.memory_space<vmem>>, %arg11: memref<1x128xf32, #tpu.memory_space<vmem>>, %arg12: memref<1x128xf32, #tpu.memory_space<vmem>>, %arg13: memref<128x128xbf16, #tpu.memory_space<vmem>>, %arg14: memref<1x128xf32, #tpu.memory_space<vmem>>, %arg15: memref<128x128xbf16, #tpu.memory_space<vmem>>, %arg16: memref<1x128xf32, #tpu.memory_space<vmem>>, %arg17: memref<1x128xf32, #tpu.memory_space<vmem>>, %arg18: memref<128x128xbf16, #tpu.memory_space<vmem>>, %arg19: memref<1x128xf32, #tpu.memory_space<vmem>>, %arg20: memref<128x128xbf16, #tpu.memory_space<vmem>>, %arg21: memref<1x128xf32, #tpu.memory_space<vmem>>, %arg22: memref<1x128xf32, #tpu.memory_space<vmem>>, %arg23: memref<128x128xbf16, #tpu.memory_space<vmem>>, %arg24: memref<1x128xf32, #tpu.memory_space<vmem>>, %arg25: memref<128x128xbf16, #tpu.memory_space<vmem>>, %arg26: memref<1x128xf32, #tpu.memory_space<vmem>>, %arg27: memref<1x128xf32, #tpu.memory_space<vmem>>, %arg28: memref<128x128xbf16, #tpu.memory_space<vmem>>, %arg29: memref<1x128xf32, #tpu.memory_space<vmem>>, %arg30: memref<128x128xf32, #tpu.memory_space<vmem>>, %arg31: memref<128x128xf32, #tpu.memory_space<vmem>>, %arg32: memref<128x128xf32, #tpu.memory_space<vmem>>, %arg33: memref<128x128xf32, #tpu.memory_space<vmem>>) attributes {dimension_semantics = [#tpu.dimension_semantics<parallel>], iteration_bounds = array<i64: 1>, scalar_prefetch = 0 : i64, scratch_operands = 0 : i64, tpu.core_type = #tpu.core_type<tc>, window_params = [{transform_indices = @transform_0, window_bounds = array<i64: 128, 128>}, {pipeline_mode = #tpu.pipeline_mode<synchronous>, transform_indices = @transform_1, window_bounds = array<i64: 128, 128>}, {pipeline_mode = #tpu.pipeline_mode<synchronous>, transform_indices = @transform_2, window_bounds = array<i64: 1, 128>}, {pipeline_mode = #tpu.pipeline_mode<synchronous>, transform_indices = @transform_3, window_bounds = array<i64: 1, 128>}, {pipeline_mode = #tpu.pipeline_mode<synchronous>, transform_indices = @transform_4, window_bounds = array<i64: 128, 128>}, {pipeline_mode = #tpu.pipeline_mode<synchronous>, transform_indices = @transform_5, window_bounds = array<i64: 128, 128>}, {pipeline_mode = #tpu.pipeline_mode<synchronous>, transform_indices = @transform_6, window_bounds = array<i64: 1, 128>}, {pipeline_mode = #tpu.pipeline_mode<synchronous>, transform_indices = @transform_7, window_bounds = array<i64: 1, 128>}, {pipeline_mode = #tpu.pipeline_mode<synchronous>, transform_indices = @transform_8, window_bounds = array<i64: 128, 128>}, {pipeline_mode = #tpu.pipeline_mode<synchronous>, transform_indices = @transform_9, window_bounds = array<i64: 128, 128>}, {pipeline_mode = #tpu.pipeline_mode<synchronous>, transform_indices = @transform_10, window_bounds = array<i64: 1, 128>}, {pipeline_mode = #tpu.pipeline_mode<synchronous>, transform_indices = @transform_11, window_bounds = array<i64: 1, 128>}, {pipeline_mode = #tpu.pipeline_mode<synchronous>, transform_indices = @transform_12, window_bounds = array<i64: 128, 128>}, {pipeline_mode = #tpu.pipeline_mode<synchronous>, transform_indices = @transform_13, window_bounds = array<i64: 1, 128>}, {pipeline_mode = #tpu.pipeline_mode<synchronous>, transform_indices = @transform_14, window_bounds = array<i64: 128, 128>}, {pipeline_mode = #tpu.pipeline_mode<synchronous>, transform_indices = @transform_15, window_bounds = array<i64: 1, 128>}, {pipeline_mode = #tpu.pipeline_mode<synchronous>, transform_indices = @transform_16, window_bounds = array<i64: 1, 128>}, {pipeline_mode = #tpu.pipeline_mode<synchronous>, transform_indices = @transform_17, window_bounds = array<i64: 128, 128>}, {pipeline_mode = #tpu.pipeline_mode<synchronous>, transform_indices = @transform_18, window_bounds = array<i64: 1, 128>}, {pipeline_mode = #tpu.pipeline_mode<synchronous>, transform_indices = @transform_19, window_bounds = array<i64: 128, 128>}, {pipeline_mode = #tpu.pipeline_mode<synchronous>, transform_indices = @transform_20, window_bounds = array<i64: 1, 128>}, {pipeline_mode = #tpu.pipeline_mode<synchronous>, transform_indices = @transform_21, window_bounds = array<i64: 1, 128>}, {pipeline_mode = #tpu.pipeline_mode<synchronous>, transform_indices = @transform_22, window_bounds = array<i64: 128, 128>}, {pipeline_mode = #tpu.pipeline_mode<synchronous>, transform_indices = @transform_23, window_bounds = array<i64: 1, 128>}, {pipeline_mode = #tpu.pipeline_mode<synchronous>, transform_indices = @transform_24, window_bounds = array<i64: 128, 128>}, {pipeline_mode = #tpu.pipeline_mode<synchronous>, transform_indices = @transform_25, window_bounds = array<i64: 1, 128>}, {pipeline_mode = #tpu.pipeline_mode<synchronous>, transform_indices = @transform_26, window_bounds = array<i64: 1, 128>}, {pipeline_mode = #tpu.pipeline_mode<synchronous>, transform_indices = @transform_27, window_bounds = array<i64: 128, 128>}, {pipeline_mode = #tpu.pipeline_mode<synchronous>, transform_indices = @transform_28, window_bounds = array<i64: 1, 128>}, {transform_indices = @transform_29, window_bounds = array<i64: 128, 128>}, {transform_indices = @transform_30, window_bounds = array<i64: 128, 128>}, {transform_indices = @transform_31, window_bounds = array<i64: 128, 128>}, {transform_indices = @transform_32, window_bounds = array<i64: 128, 128>}]} {
    %c0 = arith.constant 0 : index
    %c0_0 = arith.constant 0 : index
    %0 = vector.load %arg1[%c0, %c0_0] : memref<128x128xbf16, #tpu.memory_space<vmem>>, vector<128x128xbf16>
    %c0_1 = arith.constant 0 : index
    %c0_2 = arith.constant 0 : index
    %1 = vector.load %arg2[%c0_1, %c0_2] : memref<128x128xbf16, #tpu.memory_space<vmem>>, vector<128x128xbf16>
    %cst = arith.constant dense<0.000000e+00> : vector<128x128xf32>
    %2 = tpu.matmul %0, %1, %cst {dimension_numbers = #tpu.dot_dimension_numbers<[1], [0], [0], [1], [0, 0, 1, 1], [], []>} : vector<128x128xbf16>, vector<128x128xbf16>, vector<128x128xf32> -> vector<128x128xf32>
    %c0_3 = arith.constant 0 : index
    %c0_4 = arith.constant 0 : index
    %3 = vector.load %arg3[%c0_3, %c0_4] : memref<1x128xf32, #tpu.memory_space<vmem>>, vector<1x128xf32>
    %4 = vector.broadcast %3 : vector<1x128xf32> to vector<128x128xf32>
    %5 = arith.mulf %2, %4 : vector<128x128xf32>
    %c0_5 = arith.constant 0 : index
    %c0_6 = arith.constant 0 : index
    %6 = vector.load %arg4[%c0_5, %c0_6] : memref<1x128xf32, #tpu.memory_space<vmem>>, vector<1x128xf32>
    %7 = vector.broadcast %6 : vector<1x128xf32> to vector<128x128xf32>
    %8 = arith.addf %5, %7 : vector<128x128xf32>
    %cst_7 = arith.constant 0.000000e+00 : f32
    %9 = vector.broadcast %cst_7 : f32 to vector<128x128xf32>
    %10 = arith.maximumf %8, %9 : vector<128x128xf32>
    %11 = arith.truncf %10 : vector<128x128xf32> to vector<128x128xbf16>
    %c0_8 = arith.constant 0 : index
    %c0_9 = arith.constant 0 : index
    %12 = vector.load %arg5[%c0_8, %c0_9] : memref<128x128xbf16, #tpu.memory_space<vmem>>, vector<128x128xbf16>
    %cst_10 = arith.constant dense<0.000000e+00> : vector<128x128xf32>
    %13 = tpu.matmul %11, %12, %cst_10 {dimension_numbers = #tpu.dot_dimension_numbers<[1], [0], [0], [1], [0, 0, 1, 1], [], []>} : vector<128x128xbf16>, vector<128x128xbf16>, vector<128x128xf32> -> vector<128x128xf32>
    %c0_11 = arith.constant 0 : index
    %c0_12 = arith.constant 0 : index
    %14 = vector.load %arg6[%c0_11, %c0_12] : memref<128x128xbf16, #tpu.memory_space<vmem>>, vector<128x128xbf16>
    %cst_13 = arith.constant dense<0.000000e+00> : vector<128x128xf32>
    %15 = tpu.matmul %0, %14, %cst_13 {dimension_numbers = #tpu.dot_dimension_numbers<[1], [0], [0], [1], [0, 0, 1, 1], [], []>} : vector<128x128xbf16>, vector<128x128xbf16>, vector<128x128xf32> -> vector<128x128xf32>
    %16 = arith.addf %13, %15 : vector<128x128xf32>
    %c0_14 = arith.constant 0 : index
    %c0_15 = arith.constant 0 : index
    %17 = vector.load %arg7[%c0_14, %c0_15] : memref<1x128xf32, #tpu.memory_space<vmem>>, vector<1x128xf32>
    %18 = vector.broadcast %17 : vector<1x128xf32> to vector<128x128xf32>
    %19 = arith.mulf %16, %18 : vector<128x128xf32>
    %c0_16 = arith.constant 0 : index
    %c0_17 = arith.constant 0 : index
    %20 = vector.load %arg8[%c0_16, %c0_17] : memref<1x128xf32, #tpu.memory_space<vmem>>, vector<1x128xf32>
    %21 = vector.broadcast %20 : vector<1x128xf32> to vector<128x128xf32>
    %22 = arith.addf %19, %21 : vector<128x128xf32>
    %cst_18 = arith.constant 0.000000e+00 : f32
    %23 = vector.broadcast %cst_18 : f32 to vector<128x128xf32>
    %24 = arith.maximumf %22, %23 : vector<128x128xf32>
    %25 = arith.truncf %24 : vector<128x128xf32> to vector<128x128xbf16>
    %c0_19 = arith.constant 0 : index
    %c0_20 = arith.constant 0 : index
    %26 = vector.load %arg9[%c0_19, %c0_20] : memref<128x128xbf16, #tpu.memory_space<vmem>>, vector<128x128xbf16>
    %cst_21 = arith.constant dense<0.000000e+00> : vector<128x128xf32>
    %27 = tpu.matmul %25, %26, %cst_21 {dimension_numbers = #tpu.dot_dimension_numbers<[1], [0], [0], [1], [0, 0, 1, 1], [], []>} : vector<128x128xbf16>, vector<128x128xbf16>, vector<128x128xf32> -> vector<128x128xf32>
    %c0_22 = arith.constant 0 : index
    %c0_23 = arith.constant 0 : index
    %28 = vector.load %arg10[%c0_22, %c0_23] : memref<128x128xbf16, #tpu.memory_space<vmem>>, vector<128x128xbf16>
    %cst_24 = arith.constant dense<0.000000e+00> : vector<128x128xf32>
    %29 = tpu.matmul %0, %28, %cst_24 {dimension_numbers = #tpu.dot_dimension_numbers<[1], [0], [0], [1], [0, 0, 1, 1], [], []>} : vector<128x128xbf16>, vector<128x128xbf16>, vector<128x128xf32> -> vector<128x128xf32>
    %30 = arith.addf %27, %29 : vector<128x128xf32>
    %c0_25 = arith.constant 0 : index
    %c0_26 = arith.constant 0 : index
    %31 = vector.load %arg11[%c0_25, %c0_26] : memref<1x128xf32, #tpu.memory_space<vmem>>, vector<1x128xf32>
    %32 = vector.broadcast %31 : vector<1x128xf32> to vector<128x128xf32>
    %33 = arith.mulf %30, %32 : vector<128x128xf32>
    %c0_27 = arith.constant 0 : index
    %c0_28 = arith.constant 0 : index
    %34 = vector.load %arg12[%c0_27, %c0_28] : memref<1x128xf32, #tpu.memory_space<vmem>>, vector<1x128xf32>
    %35 = vector.broadcast %34 : vector<1x128xf32> to vector<128x128xf32>
    %36 = arith.addf %33, %35 : vector<128x128xf32>
    %cst_29 = arith.constant 0.000000e+00 : f32
    %37 = vector.broadcast %cst_29 : f32 to vector<128x128xf32>
    %38 = arith.maximumf %36, %37 : vector<128x128xf32>
    %39 = arith.truncf %38 : vector<128x128xf32> to vector<128x128xbf16>
    %c0_30 = arith.constant 0 : index
    %c0_31 = arith.constant 0 : index
    %40 = vector.load %arg13[%c0_30, %c0_31] : memref<128x128xbf16, #tpu.memory_space<vmem>>, vector<128x128xbf16>
    %cst_32 = arith.constant dense<0.000000e+00> : vector<128x128xf32>
    %41 = tpu.matmul %39, %40, %cst_32 {dimension_numbers = #tpu.dot_dimension_numbers<[1], [0], [0], [1], [0, 0, 1, 1], [], []>} : vector<128x128xbf16>, vector<128x128xbf16>, vector<128x128xf32> -> vector<128x128xf32>
    %c0_33 = arith.constant 0 : index
    %c0_34 = arith.constant 0 : index
    %42 = vector.load %arg14[%c0_33, %c0_34] : memref<1x128xf32, #tpu.memory_space<vmem>>, vector<1x128xf32>
    %43 = vector.broadcast %42 : vector<1x128xf32> to vector<128x128xf32>
    %44 = arith.addf %41, %43 : vector<128x128xf32>
    %45 = tpu.iota {dimensions = array<i32: 1>} : vector<128x128xi32>
    %c8_i32 = arith.constant 8 : i32
    %46 = vector.broadcast %c8_i32 : i32 to vector<128x128xi32>
    %47 = arith.cmpi slt, %45, %46 : vector<128x128xi32>
    %cst_35 = arith.constant -1.000000e+30 : f32
    %48 = vector.broadcast %cst_35 : f32 to vector<128x128xf32>
    %49 = arith.select %47, %44, %48 : vector<128x128xi1>, vector<128x128xf32>
    %cst_36 = arith.constant dense<0xFF800000> : vector<128xf32>
    %50 = vector.multi_reduction <maximumf>, %49, %cst_36 [1] : vector<128x128xf32> to vector<128xf32>
    %51 = vector.shape_cast %50 : vector<128xf32> to vector<128x1xf32>
    %52 = vector.broadcast %51 : vector<128x1xf32> to vector<128x128xf32>
    %53 = arith.subf %49, %52 : vector<128x128xf32>
    %54 = math.exp %53 : vector<128x128xf32>
    %cst_37 = arith.constant dense<0.000000e+00> : vector<128xf32>
    %55 = vector.multi_reduction <add>, %54, %cst_37 [1] : vector<128x128xf32> to vector<128xf32>
    %56 = vector.shape_cast %55 : vector<128xf32> to vector<128x1xf32>
    %57 = vector.broadcast %51 : vector<128x1xf32> to vector<128x128xf32>
    %58 = arith.subf %49, %57 : vector<128x128xf32>
    %59 = math.log %56 : vector<128x1xf32>
    %60 = vector.broadcast %59 : vector<128x1xf32> to vector<128x128xf32>
    %61 = arith.subf %58, %60 : vector<128x128xf32>
    %62 = arith.truncf %10 : vector<128x128xf32> to vector<128x128xbf16>
    %c0_38 = arith.constant 0 : index
    %c0_39 = arith.constant 0 : index
    %63 = vector.load %arg15[%c0_38, %c0_39] : memref<128x128xbf16, #tpu.memory_space<vmem>>, vector<128x128xbf16>
    %cst_40 = arith.constant dense<0.000000e+00> : vector<128x128xf32>
    %64 = tpu.matmul %62, %63, %cst_40 {dimension_numbers = #tpu.dot_dimension_numbers<[1], [0], [0], [1], [0, 0, 1, 1], [], []>} : vector<128x128xbf16>, vector<128x128xbf16>, vector<128x128xf32> -> vector<128x128xf32>
    %c0_41 = arith.constant 0 : index
    %c0_42 = arith.constant 0 : index
    %65 = vector.load %arg16[%c0_41, %c0_42] : memref<1x128xf32, #tpu.memory_space<vmem>>, vector<1x128xf32>
    %66 = vector.broadcast %65 : vector<1x128xf32> to vector<128x128xf32>
    %67 = arith.mulf %64, %66 : vector<128x128xf32>
    %c0_43 = arith.constant 0 : index
    %c0_44 = arith.constant 0 : index
    %68 = vector.load %arg17[%c0_43, %c0_44] : memref<1x128xf32, #tpu.memory_space<vmem>>, vector<1x128xf32>
    %69 = vector.broadcast %68 : vector<1x128xf32> to vector<128x128xf32>
    %70 = arith.addf %67, %69 : vector<128x128xf32>
    %cst_45 = arith.constant 0.000000e+00 : f32
    %71 = vector.broadcast %cst_45 : f32 to vector<128x128xf32>
    %72 = arith.maximumf %70, %71 : vector<128x128xf32>
    %73 = arith.truncf %72 : vector<128x128xf32> to vector<128x128xbf16>
    %c0_46 = arith.constant 0 : index
    %c0_47 = arith.constant 0 : index
    %74 = vector.load %arg18[%c0_46, %c0_47] : memref<128x128xbf16, #tpu.memory_space<vmem>>, vector<128x128xbf16>
    %cst_48 = arith.constant dense<0.000000e+00> : vector<128x128xf32>
    %75 = tpu.matmul %73, %74, %cst_48 {dimension_numbers = #tpu.dot_dimension_numbers<[1], [0], [0], [1], [0, 0, 1, 1], [], []>} : vector<128x128xbf16>, vector<128x128xbf16>, vector<128x128xf32> -> vector<128x128xf32>
    %c0_49 = arith.constant 0 : index
    %c0_50 = arith.constant 0 : index
    %76 = vector.load %arg19[%c0_49, %c0_50] : memref<1x128xf32, #tpu.memory_space<vmem>>, vector<1x128xf32>
    %77 = vector.broadcast %76 : vector<1x128xf32> to vector<128x128xf32>
    %78 = arith.addf %75, %77 : vector<128x128xf32>
    %79 = tpu.iota {dimensions = array<i32: 1>} : vector<128x128xi32>
    %c8_i32_51 = arith.constant 8 : i32
    %80 = vector.broadcast %c8_i32_51 : i32 to vector<128x128xi32>
    %81 = arith.cmpi slt, %79, %80 : vector<128x128xi32>
    %cst_52 = arith.constant -1.000000e+30 : f32
    %82 = vector.broadcast %cst_52 : f32 to vector<128x128xf32>
    %83 = arith.select %81, %78, %82 : vector<128x128xi1>, vector<128x128xf32>
    %cst_53 = arith.constant dense<0xFF800000> : vector<128xf32>
    %84 = vector.multi_reduction <maximumf>, %83, %cst_53 [1] : vector<128x128xf32> to vector<128xf32>
    %85 = vector.shape_cast %84 : vector<128xf32> to vector<128x1xf32>
    %86 = vector.broadcast %85 : vector<128x1xf32> to vector<128x128xf32>
    %87 = arith.subf %83, %86 : vector<128x128xf32>
    %88 = math.exp %87 : vector<128x128xf32>
    %cst_54 = arith.constant dense<0.000000e+00> : vector<128xf32>
    %89 = vector.multi_reduction <add>, %88, %cst_54 [1] : vector<128x128xf32> to vector<128xf32>
    %90 = vector.shape_cast %89 : vector<128xf32> to vector<128x1xf32>
    %91 = vector.broadcast %85 : vector<128x1xf32> to vector<128x128xf32>
    %92 = arith.subf %83, %91 : vector<128x128xf32>
    %93 = math.log %90 : vector<128x1xf32>
    %94 = vector.broadcast %93 : vector<128x1xf32> to vector<128x128xf32>
    %95 = arith.subf %92, %94 : vector<128x128xf32>
    %96 = arith.truncf %24 : vector<128x128xf32> to vector<128x128xbf16>
    %c0_55 = arith.constant 0 : index
    %c0_56 = arith.constant 0 : index
    %97 = vector.load %arg20[%c0_55, %c0_56] : memref<128x128xbf16, #tpu.memory_space<vmem>>, vector<128x128xbf16>
    %cst_57 = arith.constant dense<0.000000e+00> : vector<128x128xf32>
    %98 = tpu.matmul %96, %97, %cst_57 {dimension_numbers = #tpu.dot_dimension_numbers<[1], [0], [0], [1], [0, 0, 1, 1], [], []>} : vector<128x128xbf16>, vector<128x128xbf16>, vector<128x128xf32> -> vector<128x128xf32>
    %c0_58 = arith.constant 0 : index
    %c0_59 = arith.constant 0 : index
    %99 = vector.load %arg21[%c0_58, %c0_59] : memref<1x128xf32, #tpu.memory_space<vmem>>, vector<1x128xf32>
    %100 = vector.broadcast %99 : vector<1x128xf32> to vector<128x128xf32>
    %101 = arith.mulf %98, %100 : vector<128x128xf32>
    %c0_60 = arith.constant 0 : index
    %c0_61 = arith.constant 0 : index
    %102 = vector.load %arg22[%c0_60, %c0_61] : memref<1x128xf32, #tpu.memory_space<vmem>>, vector<1x128xf32>
    %103 = vector.broadcast %102 : vector<1x128xf32> to vector<128x128xf32>
    %104 = arith.addf %101, %103 : vector<128x128xf32>
    %cst_62 = arith.constant 0.000000e+00 : f32
    %105 = vector.broadcast %cst_62 : f32 to vector<128x128xf32>
    %106 = arith.maximumf %104, %105 : vector<128x128xf32>
    %107 = arith.truncf %106 : vector<128x128xf32> to vector<128x128xbf16>
    %c0_63 = arith.constant 0 : index
    %c0_64 = arith.constant 0 : index
    %108 = vector.load %arg23[%c0_63, %c0_64] : memref<128x128xbf16, #tpu.memory_space<vmem>>, vector<128x128xbf16>
    %cst_65 = arith.constant dense<0.000000e+00> : vector<128x128xf32>
    %109 = tpu.matmul %107, %108, %cst_65 {dimension_numbers = #tpu.dot_dimension_numbers<[1], [0], [0], [1], [0, 0, 1, 1], [], []>} : vector<128x128xbf16>, vector<128x128xbf16>, vector<128x128xf32> -> vector<128x128xf32>
    %c0_66 = arith.constant 0 : index
    %c0_67 = arith.constant 0 : index
    %110 = vector.load %arg24[%c0_66, %c0_67] : memref<1x128xf32, #tpu.memory_space<vmem>>, vector<1x128xf32>
    %111 = vector.broadcast %110 : vector<1x128xf32> to vector<128x128xf32>
    %112 = arith.addf %109, %111 : vector<128x128xf32>
    %113 = tpu.iota {dimensions = array<i32: 1>} : vector<128x128xi32>
    %c8_i32_68 = arith.constant 8 : i32
    %114 = vector.broadcast %c8_i32_68 : i32 to vector<128x128xi32>
    %115 = arith.cmpi slt, %113, %114 : vector<128x128xi32>
    %cst_69 = arith.constant -1.000000e+30 : f32
    %116 = vector.broadcast %cst_69 : f32 to vector<128x128xf32>
    %117 = arith.select %115, %112, %116 : vector<128x128xi1>, vector<128x128xf32>
    %cst_70 = arith.constant dense<0xFF800000> : vector<128xf32>
    %118 = vector.multi_reduction <maximumf>, %117, %cst_70 [1] : vector<128x128xf32> to vector<128xf32>
    %119 = vector.shape_cast %118 : vector<128xf32> to vector<128x1xf32>
    %120 = vector.broadcast %119 : vector<128x1xf32> to vector<128x128xf32>
    %121 = arith.subf %117, %120 : vector<128x128xf32>
    %122 = math.exp %121 : vector<128x128xf32>
    %cst_71 = arith.constant dense<0.000000e+00> : vector<128xf32>
    %123 = vector.multi_reduction <add>, %122, %cst_71 [1] : vector<128x128xf32> to vector<128xf32>
    %124 = vector.shape_cast %123 : vector<128xf32> to vector<128x1xf32>
    %125 = vector.broadcast %119 : vector<128x1xf32> to vector<128x128xf32>
    %126 = arith.subf %117, %125 : vector<128x128xf32>
    %127 = math.log %124 : vector<128x1xf32>
    %128 = vector.broadcast %127 : vector<128x1xf32> to vector<128x128xf32>
    %129 = arith.subf %126, %128 : vector<128x128xf32>
    %130 = arith.truncf %38 : vector<128x128xf32> to vector<128x128xbf16>
    %c0_72 = arith.constant 0 : index
    %c0_73 = arith.constant 0 : index
    %131 = vector.load %arg25[%c0_72, %c0_73] : memref<128x128xbf16, #tpu.memory_space<vmem>>, vector<128x128xbf16>
    %cst_74 = arith.constant dense<0.000000e+00> : vector<128x128xf32>
    %132 = tpu.matmul %130, %131, %cst_74 {dimension_numbers = #tpu.dot_dimension_numbers<[1], [0], [0], [1], [0, 0, 1, 1], [], []>} : vector<128x128xbf16>, vector<128x128xbf16>, vector<128x128xf32> -> vector<128x128xf32>
    %c0_75 = arith.constant 0 : index
    %c0_76 = arith.constant 0 : index
    %133 = vector.load %arg26[%c0_75, %c0_76] : memref<1x128xf32, #tpu.memory_space<vmem>>, vector<1x128xf32>
    %134 = vector.broadcast %133 : vector<1x128xf32> to vector<128x128xf32>
    %135 = arith.mulf %132, %134 : vector<128x128xf32>
    %c0_77 = arith.constant 0 : index
    %c0_78 = arith.constant 0 : index
    %136 = vector.load %arg27[%c0_77, %c0_78] : memref<1x128xf32, #tpu.memory_space<vmem>>, vector<1x128xf32>
    %137 = vector.broadcast %136 : vector<1x128xf32> to vector<128x128xf32>
    %138 = arith.addf %135, %137 : vector<128x128xf32>
    %cst_79 = arith.constant 0.000000e+00 : f32
    %139 = vector.broadcast %cst_79 : f32 to vector<128x128xf32>
    %140 = arith.maximumf %138, %139 : vector<128x128xf32>
    %141 = arith.truncf %140 : vector<128x128xf32> to vector<128x128xbf16>
    %c0_80 = arith.constant 0 : index
    %c0_81 = arith.constant 0 : index
    %142 = vector.load %arg28[%c0_80, %c0_81] : memref<128x128xbf16, #tpu.memory_space<vmem>>, vector<128x128xbf16>
    %cst_82 = arith.constant dense<0.000000e+00> : vector<128x128xf32>
    %143 = tpu.matmul %141, %142, %cst_82 {dimension_numbers = #tpu.dot_dimension_numbers<[1], [0], [0], [1], [0, 0, 1, 1], [], []>} : vector<128x128xbf16>, vector<128x128xbf16>, vector<128x128xf32> -> vector<128x128xf32>
    %c0_83 = arith.constant 0 : index
    %c0_84 = arith.constant 0 : index
    %144 = vector.load %arg29[%c0_83, %c0_84] : memref<1x128xf32, #tpu.memory_space<vmem>>, vector<1x128xf32>
    %145 = vector.broadcast %144 : vector<1x128xf32> to vector<128x128xf32>
    %146 = arith.addf %143, %145 : vector<128x128xf32>
    %147 = tpu.iota {dimensions = array<i32: 1>} : vector<128x128xi32>
    %c8_i32_85 = arith.constant 8 : i32
    %148 = vector.broadcast %c8_i32_85 : i32 to vector<128x128xi32>
    %149 = arith.cmpi slt, %147, %148 : vector<128x128xi32>
    %cst_86 = arith.constant -1.000000e+30 : f32
    %150 = vector.broadcast %cst_86 : f32 to vector<128x128xf32>
    %151 = arith.select %149, %146, %150 : vector<128x128xi1>, vector<128x128xf32>
    %cst_87 = arith.constant dense<0xFF800000> : vector<128xf32>
    %152 = vector.multi_reduction <maximumf>, %151, %cst_87 [1] : vector<128x128xf32> to vector<128xf32>
    %153 = vector.shape_cast %152 : vector<128xf32> to vector<128x1xf32>
    %154 = vector.broadcast %153 : vector<128x1xf32> to vector<128x128xf32>
    %155 = arith.subf %151, %154 : vector<128x128xf32>
    %156 = math.exp %155 : vector<128x128xf32>
    %cst_88 = arith.constant dense<0.000000e+00> : vector<128xf32>
    %157 = vector.multi_reduction <add>, %156, %cst_88 [1] : vector<128x128xf32> to vector<128xf32>
    %158 = vector.shape_cast %157 : vector<128xf32> to vector<128x1xf32>
    %159 = vector.broadcast %153 : vector<128x1xf32> to vector<128x128xf32>
    %160 = arith.subf %151, %159 : vector<128x128xf32>
    %161 = math.log %158 : vector<128x1xf32>
    %162 = vector.broadcast %161 : vector<128x1xf32> to vector<128x128xf32>
    %163 = arith.subf %160, %162 : vector<128x128xf32>
    %c0_89 = arith.constant 0 : index
    %c0_90 = arith.constant 0 : index
    %164 = vector.load %arg30[%c0_89, %c0_90] : memref<128x128xf32, #tpu.memory_space<vmem>>, vector<128x128xf32>
    tpu.vector_store %arg30[%c0_89, %c0_90], %61 {strides = array<i32>} : memref<128x128xf32, #tpu.memory_space<vmem>>, vector<128x128xf32>,
    %c0_91 = arith.constant 0 : index
    %c0_92 = arith.constant 0 : index
    %165 = vector.load %arg31[%c0_91, %c0_92] : memref<128x128xf32, #tpu.memory_space<vmem>>, vector<128x128xf32>
    tpu.vector_store %arg31[%c0_91, %c0_92], %95 {strides = array<i32>} : memref<128x128xf32, #tpu.memory_space<vmem>>, vector<128x128xf32>,
    %c0_93 = arith.constant 0 : index
    %c0_94 = arith.constant 0 : index
    %166 = vector.load %arg32[%c0_93, %c0_94] : memref<128x128xf32, #tpu.memory_space<vmem>>, vector<128x128xf32>
    tpu.vector_store %arg32[%c0_93, %c0_94], %129 {strides = array<i32>} : memref<128x128xf32, #tpu.memory_space<vmem>>, vector<128x128xf32>,
    %c0_95 = arith.constant 0 : index
    %c0_96 = arith.constant 0 : index
    %167 = vector.load %arg33[%c0_95, %c0_96] : memref<128x128xf32, #tpu.memory_space<vmem>>, vector<128x128xf32>
    tpu.vector_store %arg33[%c0_95, %c0_96], %163 {strides = array<i32>} : memref<128x128xf32, #tpu.memory_space<vmem>>, vector<128x128xf32>,
    return
  }
  func.func @transform_0(%arg0: i32) -> (i32, i32) {
    %c0_i32 = arith.constant 0 : i32
    %c0_i32_0 = arith.constant 0 : i32
    return %arg0, %c0_i32 : i32, i32
  }
  func.func @transform_1(%arg0: i32) -> (i32, i32) {
    %c0_i32 = arith.constant 0 : i32
    %c0_i32_0 = arith.constant 0 : i32
    %c0_i32_1 = arith.constant 0 : i32
    return %c0_i32, %c0_i32_0 : i32, i32
  }
  func.func @transform_2(%arg0: i32) -> (i32, i32) {
    %c0_i32 = arith.constant 0 : i32
    %c0_i32_0 = arith.constant 0 : i32
    %c0_i32_1 = arith.constant 0 : i32
    return %c0_i32, %c0_i32_0 : i32, i32
  }
  func.func @transform_3(%arg0: i32) -> (i32, i32) {
    %c0_i32 = arith.constant 0 : i32
    %c0_i32_0 = arith.constant 0 : i32
    %c0_i32_1 = arith.constant 0 : i32
    return %c0_i32, %c0_i32_0 : i32, i32
  }
  func.func @transform_4(%arg0: i32) -> (i32, i32) {
    %c0_i32 = arith.constant 0 : i32
    %c0_i32_0 = arith.constant 0 : i32
    %c0_i32_1 = arith.constant 0 : i32
    return %c0_i32, %c0_i32_0 : i32, i32
  }
  func.func @transform_5(%arg0: i32) -> (i32, i32) {
    %c0_i32 = arith.constant 0 : i32
    %c0_i32_0 = arith.constant 0 : i32
    %c0_i32_1 = arith.constant 0 : i32
    return %c0_i32, %c0_i32_0 : i32, i32
  }
  func.func @transform_6(%arg0: i32) -> (i32, i32) {
    %c0_i32 = arith.constant 0 : i32
    %c0_i32_0 = arith.constant 0 : i32
    %c0_i32_1 = arith.constant 0 : i32
    return %c0_i32, %c0_i32_0 : i32, i32
  }
  func.func @transform_7(%arg0: i32) -> (i32, i32) {
    %c0_i32 = arith.constant 0 : i32
    %c0_i32_0 = arith.constant 0 : i32
    %c0_i32_1 = arith.constant 0 : i32
    return %c0_i32, %c0_i32_0 : i32, i32
  }
  func.func @transform_8(%arg0: i32) -> (i32, i32) {
    %c0_i32 = arith.constant 0 : i32
    %c0_i32_0 = arith.constant 0 : i32
    %c0_i32_1 = arith.constant 0 : i32
    return %c0_i32, %c0_i32_0 : i32, i32
  }
  func.func @transform_9(%arg0: i32) -> (i32, i32) {
    %c0_i32 = arith.constant 0 : i32
    %c0_i32_0 = arith.constant 0 : i32
    %c0_i32_1 = arith.constant 0 : i32
    return %c0_i32, %c0_i32_0 : i32, i32
  }
  func.func @transform_10(%arg0: i32) -> (i32, i32) {
    %c0_i32 = arith.constant 0 : i32
    %c0_i32_0 = arith.constant 0 : i32
    %c0_i32_1 = arith.constant 0 : i32
    return %c0_i32, %c0_i32_0 : i32, i32
  }
  func.func @transform_11(%arg0: i32) -> (i32, i32) {
    %c0_i32 = arith.constant 0 : i32
    %c0_i32_0 = arith.constant 0 : i32
    %c0_i32_1 = arith.constant 0 : i32
    return %c0_i32, %c0_i32_0 : i32, i32
  }
  func.func @transform_12(%arg0: i32) -> (i32, i32) {
    %c0_i32 = arith.constant 0 : i32
    %c0_i32_0 = arith.constant 0 : i32
    %c0_i32_1 = arith.constant 0 : i32
    return %c0_i32, %c0_i32_0 : i32, i32
  }
  func.func @transform_13(%arg0: i32) -> (i32, i32) {
    %c0_i32 = arith.constant 0 : i32
    %c0_i32_0 = arith.constant 0 : i32
    %c0_i32_1 = arith.constant 0 : i32
    return %c0_i32, %c0_i32_0 : i32, i32
  }
  func.func @transform_14(%arg0: i32) -> (i32, i32) {
    %c0_i32 = arith.constant 0 : i32
    %c0_i32_0 = arith.constant 0 : i32
    %c0_i32_1 = arith.constant 0 : i32
    return %c0_i32, %c0_i32_0 : i32, i32
  }
  func.func @transform_15(%arg0: i32) -> (i32, i32) {
    %c0_i32 = arith.constant 0 : i32
    %c0_i32_0 = arith.constant 0 : i32
    %c0_i32_1 = arith.constant 0 : i32
    return %c0_i32, %c0_i32_0 : i32, i32
  }
  func.func @transform_16(%arg0: i32) -> (i32, i32) {
    %c0_i32 = arith.constant 0 : i32
    %c0_i32_0 = arith.constant 0 : i32
    %c0_i32_1 = arith.constant 0 : i32
    return %c0_i32, %c0_i32_0 : i32, i32
  }
  func.func @transform_17(%arg0: i32) -> (i32, i32) {
    %c0_i32 = arith.constant 0 : i32
    %c0_i32_0 = arith.constant 0 : i32
    %c0_i32_1 = arith.constant 0 : i32
    return %c0_i32, %c0_i32_0 : i32, i32
  }
  func.func @transform_18(%arg0: i32) -> (i32, i32) {
    %c0_i32 = arith.constant 0 : i32
    %c0_i32_0 = arith.constant 0 : i32
    %c0_i32_1 = arith.constant 0 : i32
    return %c0_i32, %c0_i32_0 : i32, i32
  }
  func.func @transform_19(%arg0: i32) -> (i32, i32) {
    %c0_i32 = arith.constant 0 : i32
    %c0_i32_0 = arith.constant 0 : i32
    %c0_i32_1 = arith.constant 0 : i32
    return %c0_i32, %c0_i32_0 : i32, i32
  }
  func.func @transform_20(%arg0: i32) -> (i32, i32) {
    %c0_i32 = arith.constant 0 : i32
    %c0_i32_0 = arith.constant 0 : i32
    %c0_i32_1 = arith.constant 0 : i32
    return %c0_i32, %c0_i32_0 : i32, i32
  }
  func.func @transform_21(%arg0: i32) -> (i32, i32) {
    %c0_i32 = arith.constant 0 : i32
    %c0_i32_0 = arith.constant 0 : i32
    %c0_i32_1 = arith.constant 0 : i32
    return %c0_i32, %c0_i32_0 : i32, i32
  }
  func.func @transform_22(%arg0: i32) -> (i32, i32) {
    %c0_i32 = arith.constant 0 : i32
    %c0_i32_0 = arith.constant 0 : i32
    %c0_i32_1 = arith.constant 0 : i32
    return %c0_i32, %c0_i32_0 : i32, i32
  }
  func.func @transform_23(%arg0: i32) -> (i32, i32) {
    %c0_i32 = arith.constant 0 : i32
    %c0_i32_0 = arith.constant 0 : i32
    %c0_i32_1 = arith.constant 0 : i32
    return %c0_i32, %c0_i32_0 : i32, i32
  }
  func.func @transform_24(%arg0: i32) -> (i32, i32) {
    %c0_i32 = arith.constant 0 : i32
    %c0_i32_0 = arith.constant 0 : i32
    %c0_i32_1 = arith.constant 0 : i32
    return %c0_i32, %c0_i32_0 : i32, i32
  }
  func.func @transform_25(%arg0: i32) -> (i32, i32) {
    %c0_i32 = arith.constant 0 : i32
    %c0_i32_0 = arith.constant 0 : i32
    %c0_i32_1 = arith.constant 0 : i32
    return %c0_i32, %c0_i32_0 : i32, i32
  }
  func.func @transform_26(%arg0: i32) -> (i32, i32) {
    %c0_i32 = arith.constant 0 : i32
    %c0_i32_0 = arith.constant 0 : i32
    %c0_i32_1 = arith.constant 0 : i32
    return %c0_i32, %c0_i32_0 : i32, i32
  }
  func.func @transform_27(%arg0: i32) -> (i32, i32) {
    %c0_i32 = arith.constant 0 : i32
    %c0_i32_0 = arith.constant 0 : i32
    %c0_i32_1 = arith.constant 0 : i32
    return %c0_i32, %c0_i32_0 : i32, i32
  }
  func.func @transform_28(%arg0: i32) -> (i32, i32) {
    %c0_i32 = arith.constant 0 : i32
    %c0_i32_0 = arith.constant 0 : i32
    %c0_i32_1 = arith.constant 0 : i32
    return %c0_i32, %c0_i32_0 : i32, i32
  }
  func.func @transform_29(%arg0: i32) -> (i32, i32) {
    %c0_i32 = arith.constant 0 : i32
    %c0_i32_0 = arith.constant 0 : i32
    return %arg0, %c0_i32 : i32, i32
  }
  func.func @transform_30(%arg0: i32) -> (i32, i32) {
    %c0_i32 = arith.constant 0 : i32
    %c0_i32_0 = arith.constant 0 : i32
    return %arg0, %c0_i32 : i32, i32
  }
  func.func @transform_31(%arg0: i32) -> (i32, i32) {
    %c0_i32 = arith.constant 0 : i32
    %c0_i32_0 = arith.constant 0 : i32
    return %arg0, %c0_i32 : i32, i32
  }
  func.func @transform_32(%arg0: i32) -> (i32, i32) {
    %c0_i32 = arith.constant 0 : i32
    %c0_i32_0 = arith.constant 0 : i32
    return %arg0, %c0_i32 : i32, i32
  }
}

</mosaic_0001>

<llo_original>
// kernel: hicfl_forward.6
$region0: #{hicfl_forward.6}
  #allocation0 [shape = 'u32[]', space=smem, size = 0x4, offset = 0x4, fixed_abs, tag = 'smem constant byte address 0x4 - core index']
  #allocation1 [shape = 'u32[144,128]{1,0:T(1,128)}', space=vmem, size = 0x12000, scoped, tag = 'internal scratch']
  %s0 = inlined_call_operand.vmem [shape: bf16[128,256], index: 0, kind: input, shape index: {}]
  %s1 = inlined_call_operand.vmem [shape: bf16[256,128], index: 1, kind: input, shape index: {}]
  %s2 = inlined_call_operand.vmem [shape: bf16[128,128], index: 2, kind: output, shape index: {}]
  %s3 = sld [smem:[#allocation0]]
  $region18: #{hicfl_forward.6} parent=0
    _
  %s5 = ssub.s32 1, %s3
  %s6 = scalar_select 0, %s5, %s3
  // Predicated region
  $region2: #{hicfl_forward.6} parent=0 // pred_check
    _
  $region3: #{hicfl_forward.6} parent=0 // pred_check_branch
    %8 = sbr.rel (0) target = $region5
  $region4: #{hicfl_forward.6} parent=0 // pred_region
    _
  $region5: #{hicfl_forward.6} parent=0 // pred_fallthru
    _
  // Predicated region
  $region6: #{hicfl_forward.6} parent=0 // pred_check
    _
  $region7: #{hicfl_forward.6} parent=0 // pred_check_branch
    %10 = sbr.rel (0) target = $region9
  $region8: #{hicfl_forward.6} parent=0 // pred_region
    _
  $region9: #{hicfl_forward.6} parent=0 // pred_fallthru
    _
  %v12 = vld [vmem:[%s0] sm:$0xff]
  %v13 = vld [vmem:[%s0 + $0x8] sm:$0xff]
  %v14 = vld [vmem:[%s0 + $0x10] sm:$0xff]
  %v15 = vld [vmem:[%s0 + $0x18] sm:$0xff]
  %v16 = vld [vmem:[%s0 + $0x20] sm:$0xff]
  %v17 = vld [vmem:[%s0 + $0x28] sm:$0xff]
  %v18 = vld [vmem:[%s0 + $0x30] sm:$0xff]
  %v19 = vld [vmem:[%s0 + $0x38] sm:$0xff]
  %v20 = vld [vmem:[%s0 + $0x40] sm:$0xff]
  %v21 = vld [vmem:[%s0 + $0x48] sm:$0xff]
  %v22 = vld [vmem:[%s0 + $0x50] sm:$0xff]
  %v23 = vld [vmem:[%s0 + $0x58] sm:$0xff]
  %v24 = vld [vmem:[%s0 + $0x60] sm:$0xff]
  %v25 = vld [vmem:[%s0 + $0x68] sm:$0xff]
  %v26 = vld [vmem:[%s0 + $0x70] sm:$0xff]
  %v27 = vld [vmem:[%s0 + $0x78] sm:$0xff]
  %v28 = vld [vmem:[%s1] sm:$0xf]
  %v29 = vld [vmem:[%s1 + $0x4] sm:$0xf]
  %v30 = vld [vmem:[%s1 + $0x8] sm:$0xf]
  %v31 = vld [vmem:[%s1 + $0xc] sm:$0xf]
  %v32 = vld [vmem:[%s1 + $0x10] sm:$0xf]
  %v33 = vld [vmem:[%s1 + $0x14] sm:$0xf]
  %v34 = vld [vmem:[%s1 + $0x18] sm:$0xf]
  %v35 = vld [vmem:[%s1 + $0x1c] sm:$0xf]
  %v36 = vld [vmem:[%s1 + $0x20] sm:$0xf]
  %v37 = vld [vmem:[%s1 + $0x24] sm:$0xf]
  %v38 = vld [vmem:[%s1 + $0x28] sm:$0xf]
  %v39 = vld [vmem:[%s1 + $0x2c] sm:$0xf]
  %v40 = vld [vmem:[%s1 + $0x30] sm:$0xf]
  %v41 = vld [vmem:[%s1 + $0x34] sm:$0xf]
  %v42 = vld [vmem:[%s1 + $0x38] sm:$0xf]
  %v43 = vld [vmem:[%s1 + $0x3c] sm:$0xf]
  %v44 = vld [vmem:[%s1 + $0x40] sm:$0xf]
  %v45 = vld [vmem:[%s1 + $0x44] sm:$0xf]
  %v46 = vld [vmem:[%s1 + $0x48] sm:$0xf]
  %v47 = vld [vmem:[%s1 + $0x4c] sm:$0xf]
  %v48 = vld [vmem:[%s1 + $0x50] sm:$0xf]
  %v49 = vld [vmem:[%s1 + $0x54] sm:$0xf]
  %v50 = vld [vmem:[%s1 + $0x58] sm:$0xf]
  %v51 = vld [vmem:[%s1 + $0x5c] sm:$0xf]
  %v52 = vld [vmem:[%s1 + $0x60] sm:$0xf]
  %v53 = vld [vmem:[%s1 + $0x64] sm:$0xf]
  %v54 = vld [vmem:[%s1 + $0x68] sm:$0xf]
  %v55 = vld [vmem:[%s1 + $0x6c] sm:$0xf]
  %v56 = vld [vmem:[%s1 + $0x70] sm:$0xf]
  %v57 = vld [vmem:[%s1 + $0x74] sm:$0xf]
  %v58 = vld [vmem:[%s1 + $0x78] sm:$0xf]
  %v59 = vld [vmem:[%s1 + $0x7c] sm:$0xf]
  %v76 = vunpack.c.l.b16 %v12
  %v77 = vunpack.c.h.b16 %v12
  %v78 = vunpack.c.l.b16 %v13
  %v79 = vunpack.c.h.b16 %v13
  %v80 = vunpack.c.l.b16 %v14
  %v81 = vunpack.c.h.b16 %v14
  %v82 = vunpack.c.l.b16 %v15
  %v83 = vunpack.c.h.b16 %v15
  %v84 = vunpack.c.l.b16 %v16
  %v85 = vunpack.c.h.b16 %v16
  %v86 = vunpack.c.l.b16 %v17
  %v87 = vunpack.c.h.b16 %v17
  %v88 = vunpack.c.l.b16 %v18
  %v89 = vunpack.c.h.b16 %v18
  %v90 = vunpack.c.l.b16 %v19
  %v91 = vunpack.c.h.b16 %v19
  %v92 = vunpack.c.l.b16 %v20
  %v93 = vunpack.c.h.b16 %v20
  %v94 = vunpack.c.l.b16 %v21
  %v95 = vunpack.c.h.b16 %v21
  %v96 = vunpack.c.l.b16 %v22
  %v97 = vunpack.c.h.b16 %v22
  %v98 = vunpack.c.l.b16 %v23
  %v99 = vunpack.c.h.b16 %v23
  %v100 = vunpack.c.l.b16 %v24
  %v101 = vunpack.c.h.b16 %v24
  %v102 = vunpack.c.l.b16 %v25
  %v103 = vunpack.c.h.b16 %v25
  %v104 = vunpack.c.l.b16 %v26
  %v105 = vunpack.c.h.b16 %v26
  %v106 = vunpack.c.l.b16 %v27
  %v107 = vunpack.c.h.b16 %v27
  %v108 = vpack.c.b16 %v78, %v76
  %v109 = vpack.c.b16 %v79, %v77
  %v110 = vpack.c.b16 %v82, %v80
  %v111 = vpack.c.b16 %v83, %v81
  %v112 = vpack.c.b16 %v86, %v84
  %v113 = vpack.c.b16 %v87, %v85
  %v114 = vpack.c.b16 %v90, %v88
  %v115 = vpack.c.b16 %v91, %v89
  %v116 = vpack.c.b16 %v94, %v92
  %v117 = vpack.c.b16 %v95, %v93
  %v118 = vpack.c.b16 %v98, %v96
  %v119 = vpack.c.b16 %v99, %v97
  %v120 = vpack.c.b16 %v102, %v100
  %v121 = vpack.c.b16 %v103, %v101
  %v122 = vpack.c.b16 %v106, %v104
  %v123 = vpack.c.b16 %v107, %v105
  %v172 = vunpack.c.l.b16 %v28
  %v173 = vunpack.c.l.b16 %v29
  %v174 = vunpack.c.l.b16 %v30
  %v175 = vunpack.c.l.b16 %v31
  %v176 = vunpack.c.l.b16 %v32
  %v177 = vunpack.c.l.b16 %v33
  %v178 = vunpack.c.l.b16 %v34
  %v179 = vunpack.c.l.b16 %v35
  %v180 = vunpack.c.l.b16 %v36
  %v181 = vunpack.c.l.b16 %v37
  %v182 = vunpack.c.l.b16 %v38
  %v183 = vunpack.c.l.b16 %v39
  %v184 = vunpack.c.l.b16 %v40
  %v185 = vunpack.c.l.b16 %v41
  %v186 = vunpack.c.l.b16 %v42
  %v187 = vunpack.c.l.b16 %v43
  %v188 = vunpack.c.l.b16 %v44
  %v189 = vunpack.c.l.b16 %v45
  %v190 = vunpack.c.l.b16 %v46
  %v191 = vunpack.c.l.b16 %v47
  %v192 = vunpack.c.l.b16 %v48
  %v193 = vunpack.c.l.b16 %v49
  %v194 = vunpack.c.l.b16 %v50
  %v195 = vunpack.c.l.b16 %v51
  %v196 = vunpack.c.l.b16 %v52
  %v197 = vunpack.c.l.b16 %v53
  %v198 = vunpack.c.l.b16 %v54
  %v199 = vunpack.c.l.b16 %v55
  %v200 = vunpack.c.l.b16 %v56
  %v201 = vunpack.c.l.b16 %v57
  %v202 = vunpack.c.l.b16 %v58
  %v203 = vunpack.c.l.b16 %v59
  %v204 = vpack.c.b16 %v173, %v172
  %v205 = vpack.c.b16 %v175, %v174
  %v206 = vpack.c.b16 %v177, %v176
  %v207 = vpack.c.b16 %v179, %v178
  %v208 = vpack.c.b16 %v181, %v180
  %v209 = vpack.c.b16 %v183, %v182
  %v210 = vpack.c.b16 %v185, %v184
  %v211 = vpack.c.b16 %v187, %v186
  %v212 = vpack.c.b16 %v189, %v188
  %v213 = vpack.c.b16 %v191, %v190
  %v214 = vpack.c.b16 %v193, %v192
  %v215 = vpack.c.b16 %v195, %v194
  %v216 = vpack.c.b16 %v197, %v196
  %v217 = vpack.c.b16 %v199, %v198
  %v218 = vpack.c.b16 %v201, %v200
  %v219 = vpack.c.b16 %v203, %v202
  %236 = vmatprep.subr.bf16.mxu0 0
  %237 = vmatpush1.bf16.msra.mxu0 %v204
  %238 = vmatprep.subr.bf16.mxu0 0
  %239 = vmatpush1.bf16.msra.mxu0 %v205
  %240 = vmatprep.subr.bf16.mxu0 0
  %241 = vmatpush1.bf16.msra.mxu0 %v206
  %242 = vmatprep.subr.bf16.mxu0 0
  %243 = vmatpush1.bf16.msra.mxu0 %v207
  %244 = vmatprep.subr.bf16.mxu0 0
  %245 = vmatpush1.bf16.msra.mxu0 %v208
  %246 = vmatprep.subr.bf16.mxu0 0
  %247 = vmatpush1.bf16.msra.mxu0 %v209
  %248 = vmatprep.subr.bf16.mxu0 0
  %249 = vmatpush1.bf16.msra.mxu0 %v210
  %250 = vmatprep.subr.bf16.mxu0 0
  %251 = vmatpush1.bf16.msra.mxu0 %v211
  %252 = vmatprep.subr.bf16.mxu0 0
  %253 = vmatpush1.bf16.msra.mxu0 %v212
  %254 = vmatprep.subr.bf16.mxu0 0
  %255 = vmatpush1.bf16.msra.mxu0 %v213
  %256 = vmatprep.subr.bf16.mxu0 0
  %257 = vmatpush1.bf16.msra.mxu0 %v214
  %258 = vmatprep.subr.bf16.mxu0 0
  %259 = vmatpush1.bf16.msra.mxu0 %v215
  %260 = vmatprep.subr.bf16.mxu0 0
  %261 = vmatpush1.bf16.msra.mxu0 %v216
  %262 = vmatprep.subr.bf16.mxu0 0
  %263 = vmatpush1.bf16.msra.mxu0 %v217
  %264 = vmatprep.subr.bf16.mxu0 0
  %265 = vmatpush1.bf16.msra.mxu0 %v218
  %266 = vmatprep.subr.bf16.mxu0 0
  %267 = vmatpush1.bf16.msra.mxu0 %v219
  %268 = vmatprep.mubr.bf16.mxu0 %v109
  %269 = vmatmul.mubr.bf16.gmra.mrb[0].mxu0 %v108
  %v270 = vpop.f32.mrb[0].mxu0
  %v271 = vadd.f32 0.0, %v270
  %v272 = vpop.f32.mrb[0].mxu0
  %v273 = vpop.f32.mrb[0].mxu0
  %v274 = vadd.f32 0.0, %v273
  %v275 = vpop.f32.mrb[0].mxu0
  %276 = vmatprep.mubr.bf16.mxu0 %v111
  %277 = vmatmul.mubr.bf16.gmra.mrb[0].mxu0 %v110
  %v278 = vpop.f32.mrb[0].mxu0
  %v279 = vadd.f32 0.0, %v278
  %v280 = vpop.f32.mrb[0].mxu0
  %v281 = vpop.f32.mrb[0].mxu0
  %v282 = vadd.f32 0.0, %v281
  %v283 = vpop.f32.mrb[0].mxu0
  %284 = vmatprep.mubr.bf16.mxu0 %v113
  %285 = vmatmul.mubr.bf16.gmra.mrb[0].mxu0 %v112
  %v286 = vpop.f32.mrb[0].mxu0
  %v287 = vadd.f32 0.0, %v286
  %v288 = vpop.f32.mrb[0].mxu0
  %v289 = vpop.f32.mrb[0].mxu0
  %v290 = vadd.f32 0.0, %v289
  %v291 = vpop.f32.mrb[0].mxu0
  %292 = vmatprep.mubr.bf16.mxu0 %v115
  %293 = vmatmul.mubr.bf16.gmra.mrb[0].mxu0 %v114
  %v294 = vpop.f32.mrb[0].mxu0
  %v295 = vadd.f32 0.0, %v294
  %v296 = vpop.f32.mrb[0].mxu0
  %v297 = vpop.f32.mrb[0].mxu0
  %v298 = vadd.f32 0.0, %v297
  %v299 = vpop.f32.mrb[0].mxu0
  %300 = vmatprep.mubr.bf16.mxu0 %v117
  %301 = vmatmul.mubr.bf16.gmra.mrb[0].mxu0 %v116
  %v302 = vpop.f32.mrb[0].mxu0
  %v303 = vadd.f32 0.0, %v302
  %v304 = vpop.f32.mrb[0].mxu0
  %v305 = vpop.f32.mrb[0].mxu0
  %v306 = vadd.f32 0.0, %v305
  %v307 = vpop.f32.mrb[0].mxu0
  %308 = vmatprep.mubr.bf16.mxu0 %v119
  %309 = vmatmul.mubr.bf16.gmra.mrb[0].mxu0 %v118
  %v310 = vpop.f32.mrb[0].mxu0
  %v311 = vadd.f32 0.0, %v310
  %v312 = vpop.f32.mrb[0].mxu0
  %v313 = vpop.f32.mrb[0].mxu0
  %v314 = vadd.f32 0.0, %v313
  %v315 = vpop.f32.mrb[0].mxu0
  %316 = vmatprep.mubr.bf16.mxu0 %v121
  %317 = vmatmul.mubr.bf16.gmra.mrb[0].mxu0 %v120
  %v318 = vpop.f32.mrb[0].mxu0
  %v319 = vadd.f32 0.0, %v318
  %v320 = vpop.f32.mrb[0].mxu0
  %v321 = vpop.f32.mrb[0].mxu0
  %v322 = vadd.f32 0.0, %v321
  %v323 = vpop.f32.mrb[0].mxu0
  %324 = vmatprep.mubr.bf16.mxu0 %v123
  %325 = vmatmul.mubr.bf16.gmra.mrb[0].mxu0 %v122
  %v326 = vpop.f32.mrb[0].mxu0
  %v327 = vadd.f32 0.0, %v326
  %v328 = vpop.f32.mrb[0].mxu0
  %v329 = vpop.f32.mrb[0].mxu0
  %v330 = vadd.f32 0.0, %v329
  %v331 = vpop.f32.mrb[0].mxu0
  %332 = vdwg.mxu0
  %v333 = vpack.c.bf16 %v274, %v271
  %v334 = vpack.c.bf16 %v282, %v279
  %v335 = vpack.c.bf16 %v290, %v287
  %v336 = vpack.c.bf16 %v298, %v295
  %v337 = vpack.c.bf16 %v306, %v303
  %v338 = vpack.c.bf16 %v314, %v311
  %v339 = vpack.c.bf16 %v322, %v319
  %v340 = vpack.c.bf16 %v330, %v327
  %v349 = vunpack.c.l.b16 %v333
  %v350 = vunpack.c.h.b16 %v333
  %v351 = vunpack.c.l.b16 %v334
  %v352 = vunpack.c.h.b16 %v334
  %v353 = vunpack.c.l.b16 %v335
  %v354 = vunpack.c.h.b16 %v335
  %v355 = vunpack.c.l.b16 %v336
  %v356 = vunpack.c.h.b16 %v336
  %v357 = vunpack.c.l.b16 %v337
  %v358 = vunpack.c.h.b16 %v337
  %v359 = vunpack.c.l.b16 %v338
  %v360 = vunpack.c.h.b16 %v338
  %v361 = vunpack.c.l.b16 %v339
  %v362 = vunpack.c.h.b16 %v339
  %v363 = vunpack.c.l.b16 %v340
  %v364 = vunpack.c.h.b16 %v340
  %v365 = vpack.c.b16 %v349, %v349
  %v366 = vpack.c.b16 %v350, %v350
  %v367 = vpack.c.b16 %v351, %v351
  %v368 = vpack.c.b16 %v352, %v352
  %v369 = vpack.c.b16 %v353, %v353
  %v370 = vpack.c.b16 %v354, %v354
  %v371 = vpack.c.b16 %v355, %v355
  %v372 = vpack.c.b16 %v356, %v356
  %v373 = vpack.c.b16 %v357, %v357
  %v374 = vpack.c.b16 %v358, %v358
  %v375 = vpack.c.b16 %v359, %v359
  %v376 = vpack.c.b16 %v360, %v360
  %v377 = vpack.c.b16 %v361, %v361
  %v378 = vpack.c.b16 %v362, %v362
  %v379 = vpack.c.b16 %v363, %v363
  %v380 = vpack.c.b16 %v364, %v364
  %397 = vst [vmem:[%s2] sm:$0xf] %v365
  %398 = vst [vmem:[%s2 + $0x4] sm:$0xf] %v366
  %399 = vst [vmem:[%s2 + $0x8] sm:$0xf] %v367
  %400 = vst [vmem:[%s2 + $0xc] sm:$0xf] %v368
  %401 = vst [vmem:[%s2 + $0x10] sm:$0xf] %v369
  %402 = vst [vmem:[%s2 + $0x14] sm:$0xf] %v370
  %403 = vst [vmem:[%s2 + $0x18] sm:$0xf] %v371
  %404 = vst [vmem:[%s2 + $0x1c] sm:$0xf] %v372
  %405 = vst [vmem:[%s2 + $0x20] sm:$0xf] %v373
  %406 = vst [vmem:[%s2 + $0x24] sm:$0xf] %v374
  %407 = vst [vmem:[%s2 + $0x28] sm:$0xf] %v375
  %408 = vst [vmem:[%s2 + $0x2c] sm:$0xf] %v376
  %409 = vst [vmem:[%s2 + $0x30] sm:$0xf] %v377
  %410 = vst [vmem:[%s2 + $0x34] sm:$0xf] %v378
  %411 = vst [vmem:[%s2 + $0x38] sm:$0xf] %v379
  %412 = vst [vmem:[%s2 + $0x3c] sm:$0xf] %v380
  // Predicated region
  $region10: #{hicfl_forward.6} parent=0 // pred_check
    _
  $region11: #{hicfl_forward.6} parent=0 // pred_check_branch
    %414 = sbr.rel (0) target = $region13
  $region12: #{hicfl_forward.6} parent=0 // pred_region
    _
  $region13: #{hicfl_forward.6} parent=0 // pred_fallthru
    _
  // Predicated region
  $region14: #{hicfl_forward.6} parent=0 // pred_check
    _
  $region15: #{hicfl_forward.6} parent=0 // pred_check_branch
    %416 = sbr.rel (0) target = $region17
  $region16: #{hicfl_forward.6} parent=0 // pred_region
    _
  $region17: #{hicfl_forward.6} parent=0 // pred_fallthru
    _

// kernel: hicfl_forward.7
$region0: #{hicfl_forward.7}
  #allocation0 [shape = 'u32[]', space=smem, size = 0x4, offset = 0x4, fixed_abs, tag = 'smem constant byte address 0x4 - core index']
  #allocation1 [shape = 'u32[144,128]{1,0:T(1,128)}', space=vmem, size = 0x12000, scoped, tag = 'internal scratch']
  #allocation2 [shape = 'f32[128,128]{1,0:T(8,128)}', space=vmem, size = 0x10000, scoped, tag = 'scratch operand']
  %s0 = inlined_call_operand.vmem [shape: bf16[128,128], index: 0, kind: input, shape index: {}]
  %s1 = inlined_call_operand.vmem [shape: bf16[128,128], index: 1, kind: input, shape index: {}]
  %s2 = inlined_call_operand.vmem [shape: f32[1,128], index: 2, kind: input, shape index: {}]
  %s3 = inlined_call_operand.vmem [shape: f32[1,128], index: 3, kind: input, shape index: {}]
  %s4 = inlined_call_operand.vmem [shape: bf16[128,128], index: 4, kind: output, shape index: {}]
  %s5 = sld [smem:[#allocation0]]
  $region34: #{hicfl_forward.7} parent=0
    _
  %s7 = ssub.s32 1, %s5
  %s8 = scalar_select 0, %s7, %s5
  // Predicated region
  $region2: #{hicfl_forward.7} parent=0 // pred_check
    _
  $region3: #{hicfl_forward.7} parent=0 // pred_check_branch
    %10 = sbr.rel (0) target = $region5
  $region4: #{hicfl_forward.7} parent=0 // pred_region
    _
  $region5: #{hicfl_forward.7} parent=0 // pred_fallthru
    _
  // Predicated region
  $region6: #{hicfl_forward.7} parent=0 // pred_check
    _
  $region7: #{hicfl_forward.7} parent=0 // pred_check_branch
    %12 = sbr.rel (0) target = $region9
  $region8: #{hicfl_forward.7} parent=0 // pred_region
    _
  $region9: #{hicfl_forward.7} parent=0 // pred_fallthru
    _
  // Predicated region
  $region10: #{hicfl_forward.7} parent=0 // pred_check
    _
  $region11: #{hicfl_forward.7} parent=0 // pred_check_branch
    %14 = sbr.rel (0) target = $region13
  $region12: #{hicfl_forward.7} parent=0 // pred_region
    _
  $region13: #{hicfl_forward.7} parent=0 // pred_fallthru
    _
  // Predicated region
  $region14: #{hicfl_forward.7} parent=0 // pred_check
    _
  $region15: #{hicfl_forward.7} parent=0 // pred_check_branch
    %16 = sbr.rel (0) target = $region17
  $region16: #{hicfl_forward.7} parent=0 // pred_region
    _
  $region17: #{hicfl_forward.7} parent=0 // pred_fallthru
    _
  %p18 = scmp.eq.s32.totalorder 0, 0
  // Predicated region
  $region18: #{hicfl_forward.7} parent=0 // pred_check
    %p19 = pneg %p18
  $region19: #{hicfl_forward.7} parent=0 // pred_check_branch
    %21 = sbr.rel (%p19) target = $region21
  $region20: #{hicfl_forward.7} parent=0 // pred_region
    %22 = vst [vmem:[#allocation2] sm:$0xff] 0.0
    %23 = vst [vmem:[#allocation2 + $0x8] sm:$0xff] 0.0
    %24 = vst [vmem:[#allocation2 + $0x10] sm:$0xff] 0.0
    %25 = vst [vmem:[#allocation2 + $0x18] sm:$0xff] 0.0
    %26 = vst [vmem:[#allocation2 + $0x20] sm:$0xff] 0.0
    %27 = vst [vmem:[#allocation2 + $0x28] sm:$0xff] 0.0
    %28 = vst [vmem:[#allocation2 + $0x30] sm:$0xff] 0.0
    %29 = vst [vmem:[#allocation2 + $0x38] sm:$0xff] 0.0
    %30 = vst [vmem:[#allocation2 + $0x40] sm:$0xff] 0.0
    %31 = vst [vmem:[#allocation2 + $0x48] sm:$0xff] 0.0
    %32 = vst [vmem:[#allocation2 + $0x50] sm:$0xff] 0.0
    %33 = vst [vmem:[#allocation2 + $0x58] sm:$0xff] 0.0
    %34 = vst [vmem:[#allocation2 + $0x60] sm:$0xff] 0.0
    %35 = vst [vmem:[#allocation2 + $0x68] sm:$0xff] 0.0
    %36 = vst [vmem:[#allocation2 + $0x70] sm:$0xff] 0.0
    %37 = vst [vmem:[#allocation2 + $0x78] sm:$0xff] 0.0
  $region21: #{hicfl_forward.7} parent=0 // pred_fallthru
    _
  %v38 = vld [vmem:[#allocation2] sm:$0xff]
  %v39 = vld [vmem:[#allocation2 + $0x8] sm:$0xff]
  %v40 = vld [vmem:[#allocation2 + $0x10] sm:$0xff]
  %v41 = vld [vmem:[#allocation2 + $0x18] sm:$0xff]
  %v42 = vld [vmem:[#allocation2 + $0x20] sm:$0xff]
  %v43 = vld [vmem:[#allocation2 + $0x28] sm:$0xff]
  %v44 = vld [vmem:[#allocation2 + $0x30] sm:$0xff]
  %v45 = vld [vmem:[#allocation2 + $0x38] sm:$0xff]
  %v46 = vld [vmem:[#allocation2 + $0x40] sm:$0xff]
  %v47 = vld [vmem:[#allocation2 + $0x48] sm:$0xff]
  %v48 = vld [vmem:[#allocation2 + $0x50] sm:$0xff]
  %v49 = vld [vmem:[#allocation2 + $0x58] sm:$0xff]
  %v50 = vld [vmem:[#allocation2 + $0x60] sm:$0xff]
  %v51 = vld [vmem:[#allocation2 + $0x68] sm:$0xff]
  %v52 = vld [vmem:[#allocation2 + $0x70] sm:$0xff]
  %v53 = vld [vmem:[#allocation2 + $0x78] sm:$0xff]
  %v54 = vld [vmem:[%s0] sm:$0xf]
  %v55 = vld [vmem:[%s0 + $0x4] sm:$0xf]
  %v56 = vld [vmem:[%s0 + $0x8] sm:$0xf]
  %v57 = vld [vmem:[%s0 + $0xc] sm:$0xf]
  %v58 = vld [vmem:[%s0 + $0x10] sm:$0xf]
  %v59 = vld [vmem:[%s0 + $0x14] sm:$0xf]
  %v60 = vld [vmem:[%s0 + $0x18] sm:$0xf]
  %v61 = vld [vmem:[%s0 + $0x1c] sm:$0xf]
  %v62 = vld [vmem:[%s0 + $0x20] sm:$0xf]
  %v63 = vld [vmem:[%s0 + $0x24] sm:$0xf]
  %v64 = vld [vmem:[%s0 + $0x28] sm:$0xf]
  %v65 = vld [vmem:[%s0 + $0x2c] sm:$0xf]
  %v66 = vld [vmem:[%s0 + $0x30] sm:$0xf]
  %v67 = vld [vmem:[%s0 + $0x34] sm:$0xf]
  %v68 = vld [vmem:[%s0 + $0x38] sm:$0xf]
  %v69 = vld [vmem:[%s0 + $0x3c] sm:$0xf]
  %v70 = vld [vmem:[%s1] sm:$0xf]
  %v71 = vld [vmem:[%s1 + $0x4] sm:$0xf]
  %v72 = vld [vmem:[%s1 + $0x8] sm:$0xf]
  %v73 = vld [vmem:[%s1 + $0xc] sm:$0xf]
  %v74 = vld [vmem:[%s1 + $0x10] sm:$0xf]
  %v75 = vld [vmem:[%s1 + $0x14] sm:$0xf]
  %v76 = vld [vmem:[%s1 + $0x18] sm:$0xf]
  %v77 = vld [vmem:[%s1 + $0x1c] sm:$0xf]
  %v78 = vld [vmem:[%s1 + $0x20] sm:$0xf]
  %v79 = vld [vmem:[%s1 + $0x24] sm:$0xf]
  %v80 = vld [vmem:[%s1 + $0x28] sm:$0xf]
  %v81 = vld [vmem:[%s1 + $0x2c] sm:$0xf]
  %v82 = vld [vmem:[%s1 + $0x30] sm:$0xf]
  %v83 = vld [vmem:[%s1 + $0x34] sm:$0xf]
  %v84 = vld [vmem:[%s1 + $0x38] sm:$0xf]
  %v85 = vld [vmem:[%s1 + $0x3c] sm:$0xf]
  %v102 = vunpack.c.l.b16 %v54
  %v103 = vunpack.c.l.b16 %v55
  %v104 = vunpack.c.l.b16 %v56
  %v105 = vunpack.c.l.b16 %v57
  %v106 = vunpack.c.l.b16 %v58
  %v107 = vunpack.c.l.b16 %v59
  %v108 = vunpack.c.l.b16 %v60
  %v109 = vunpack.c.l.b16 %v61
  %v110 = vunpack.c.l.b16 %v62
  %v111 = vunpack.c.l.b16 %v63
  %v112 = vunpack.c.l.b16 %v64
  %v113 = vunpack.c.l.b16 %v65
  %v114 = vunpack.c.l.b16 %v66
  %v115 = vunpack.c.l.b16 %v67
  %v116 = vunpack.c.l.b16 %v68
  %v117 = vunpack.c.l.b16 %v69
  %v118 = vpack.c.b16 %v103, %v102
  %v119 = vpack.c.b16 %v105, %v104
  %v120 = vpack.c.b16 %v107, %v106
  %v121 = vpack.c.b16 %v109, %v108
  %v122 = vpack.c.b16 %v111, %v110
  %v123 = vpack.c.b16 %v113, %v112
  %v124 = vpack.c.b16 %v115, %v114
  %v125 = vpack.c.b16 %v117, %v116
  %v150 = vunpack.c.l.b16 %v70
  %v151 = vunpack.c.l.b16 %v71
  %v152 = vunpack.c.l.b16 %v72
  %v153 = vunpack.c.l.b16 %v73
  %v154 = vunpack.c.l.b16 %v74
  %v155 = vunpack.c.l.b16 %v75
  %v156 = vunpack.c.l.b16 %v76
  %v157 = vunpack.c.l.b16 %v77
  %v158 = vunpack.c.l.b16 %v78
  %v159 = vunpack.c.l.b16 %v79
  %v160 = vunpack.c.l.b16 %v80
  %v161 = vunpack.c.l.b16 %v81
  %v162 = vunpack.c.l.b16 %v82
  %v163 = vunpack.c.l.b16 %v83
  %v164 = vunpack.c.l.b16 %v84
  %v165 = vunpack.c.l.b16 %v85
  %v166 = vpack.c.b16 %v151, %v150
  %v167 = vpack.c.b16 %v153, %v152
  %v168 = vpack.c.b16 %v155, %v154
  %v169 = vpack.c.b16 %v157, %v156
  %v170 = vpack.c.b16 %v159, %v158
  %v171 = vpack.c.b16 %v161, %v160
  %v172 = vpack.c.b16 %v163, %v162
  %v173 = vpack.c.b16 %v165, %v164
  %182 = vmatprep.subr.bf16.mxu0 0
  %183 = vmatpush1.bf16.msra.mxu0 %v166
  %184 = vmatprep.subr.bf16.mxu0 0
  %185 = vmatpush1.bf16.msra.mxu0 %v167
  %186 = vmatprep.subr.bf16.mxu0 0
  %187 = vmatpush1.bf16.msra.mxu0 %v168
  %188 = vmatprep.subr.bf16.mxu0 0
  %189 = vmatpush1.bf16.msra.mxu0 %v169
  %190 = vmatprep.subr.bf16.mxu0 0
  %191 = vmatpush1.bf16.msra.mxu0 %v170
  %192 = vmatprep.subr.bf16.mxu0 0
  %193 = vmatpush1.bf16.msra.mxu0 %v171
  %194 = vmatprep.subr.bf16.mxu0 0
  %195 = vmatpush1.bf16.msra.mxu0 %v172
  %196 = vmatprep.subr.bf16.mxu0 0
  %197 = vmatpush1.bf16.msra.mxu0 %v173
  %198 = vmatprep.subr.bf16.mxu0 0
  %199 = vmatpush1.bf16.msra.mxu0 0
  %200 = vmatprep.subr.bf16.mxu0 0
  %201 = vmatpush1.bf16.msra.mxu0 0
  %202 = vmatprep.subr.bf16.mxu0 0
  %203 = vmatpush1.bf16.msra.mxu0 0
  %204 = vmatprep.subr.bf16.mxu0 0
  %205 = vmatpush1.bf16.msra.mxu0 0
  %206 = vmatprep.subr.bf16.mxu0 0
  %207 = vmatpush1.bf16.msra.mxu0 0
  %208 = vmatprep.subr.bf16.mxu0 0
  %209 = vmatpush1.bf16.msra.mxu0 0
  %210 = vmatprep.subr.bf16.mxu0 0
  %211 = vmatpush1.bf16.msra.mxu0 0
  %212 = vmatprep.subr.bf16.mxu0 0
  %213 = vmatpush1.bf16.msra.mxu0 0
  %214 = vmatprep.mubr.bf16.mxu0 0
  %215 = vmatmul.mubr.bf16.gmra.mrb[0].mxu0 %v118
  %v216 = vpop.f32.mrb[0].mxu0
  %v217 = vadd.f32 0.0, %v216
  %v218 = vpop.f32.mrb[0].mxu0
  %v219 = vpop.f32.mrb[0].mxu0
  %v220 = vadd.f32 0.0, %v219
  %v221 = vpop.f32.mrb[0].mxu0
  %222 = vmatprep.mubr.bf16.mxu0 0
  %223 = vmatmul.mubr.bf16.gmra.mrb[0].mxu0 %v119
  %v224 = vpop.f32.mrb[0].mxu0
  %v225 = vadd.f32 0.0, %v224
  %v226 = vpop.f32.mrb[0].mxu0
  %v227 = vpop.f32.mrb[0].mxu0
  %v228 = vadd.f32 0.0, %v227
  %v229 = vpop.f32.mrb[0].mxu0
  %230 = vmatprep.mubr.bf16.mxu0 0
  %231 = vmatmul.mubr.bf16.gmra.mrb[0].mxu0 %v120
  %v232 = vpop.f32.mrb[0].mxu0
  %v233 = vadd.f32 0.0, %v232
  %v234 = vpop.f32.mrb[0].mxu0
  %v235 = vpop.f32.mrb[0].mxu0
  %v236 = vadd.f32 0.0, %v235
  %v237 = vpop.f32.mrb[0].mxu0
  %238 = vmatprep.mubr.bf16.mxu0 0
  %239 = vmatmul.mubr.bf16.gmra.mrb[0].mxu0 %v121
  %v240 = vpop.f32.mrb[0].mxu0
  %v241 = vadd.f32 0.0, %v240
  %v242 = vpop.f32.mrb[0].mxu0
  %v243 = vpop.f32.mrb[0].mxu0
  %v244 = vadd.f32 0.0, %v243
  %v245 = vpop.f32.mrb[0].mxu0
  %246 = vmatprep.mubr.bf16.mxu0 0
  %247 = vmatmul.mubr.bf16.gmra.mrb[0].mxu0 %v122
  %v248 = vpop.f32.mrb[0].mxu0
  %v249 = vadd.f32 0.0, %v248
  %v250 = vpop.f32.mrb[0].mxu0
  %v251 = vpop.f32.mrb[0].mxu0
  %v252 = vadd.f32 0.0, %v251
  %v253 = vpop.f32.mrb[0].mxu0
  %254 = vmatprep.mubr.bf16.mxu0 0
  %255 = vmatmul.mubr.bf16.gmra.mrb[0].mxu0 %v123
  %v256 = vpop.f32.mrb[0].mxu0
  %v257 = vadd.f32 0.0, %v256
  %v258 = vpop.f32.mrb[0].mxu0
  %v259 = vpop.f32.mrb[0].mxu0
  %v260 = vadd.f32 0.0, %v259
  %v261 = vpop.f32.mrb[0].mxu0
  %262 = vmatprep.mubr.bf16.mxu0 0
  %263 = vmatmul.mubr.bf16.gmra.mrb[0].mxu0 %v124
  %v264 = vpop.f32.mrb[0].mxu0
  %v265 = vadd.f32 0.0, %v264
  %v266 = vpop.f32.mrb[0].mxu0
  %v267 = vpop.f32.mrb[0].mxu0
  %v268 = vadd.f32 0.0, %v267
  %v269 = vpop.f32.mrb[0].mxu0
  %270 = vmatprep.mubr.bf16.mxu0 0
  %271 = vmatmul.mubr.bf16.gmra.mrb[0].mxu0 %v125
  %v272 = vpop.f32.mrb[0].mxu0
  %v273 = vadd.f32 0.0, %v272
  %v274 = vpop.f32.mrb[0].mxu0
  %v275 = vpop.f32.mrb[0].mxu0
  %v276 = vadd.f32 0.0, %v275
  %v277 = vpop.f32.mrb[0].mxu0
  %278 = vdwg.mxu0
  %v279 = vadd.f32 %v38, %v217
  %v280 = vadd.f32 %v39, %v220
  %v281 = vadd.f32 %v40, %v225
  %v282 = vadd.f32 %v41, %v228
  %v283 = vadd.f32 %v42, %v233
  %v284 = vadd.f32 %v43, %v236
  %v285 = vadd.f32 %v44, %v241
  %v286 = vadd.f32 %v45, %v244
  %v287 = vadd.f32 %v46, %v249
  %v288 = vadd.f32 %v47, %v252
  %v289 = vadd.f32 %v48, %v257
  %v290 = vadd.f32 %v49, %v260
  %v291 = vadd.f32 %v50, %v265
  %v292 = vadd.f32 %v51, %v268
  %v293 = vadd.f32 %v52, %v273
  %v294 = vadd.f32 %v53, %v276
  %295 = vst [vmem:[#allocation2] sm:$0xff] %v279
  %296 = vst [vmem:[#allocation2 + $0x8] sm:$0xff] %v280
  %297 = vst [vmem:[#allocation2 + $0x10] sm:$0xff] %v281
  %298 = vst [vmem:[#allocation2 + $0x18] sm:$0xff] %v282
  %299 = vst [vmem:[#allocation2 + $0x20] sm:$0xff] %v283
  %300 = vst [vmem:[#allocation2 + $0x28] sm:$0xff] %v284
  %301 = vst [vmem:[#allocation2 + $0x30] sm:$0xff] %v285
  %302 = vst [vmem:[#allocation2 + $0x38] sm:$0xff] %v286
  %303 = vst [vmem:[#allocation2 + $0x40] sm:$0xff] %v287
  %304 = vst [vmem:[#allocation2 + $0x48] sm:$0xff] %v288
  %305 = vst [vmem:[#allocation2 + $0x50] sm:$0xff] %v289
  %306 = vst [vmem:[#allocation2 + $0x58] sm:$0xff] %v290
  %307 = vst [vmem:[#allocation2 + $0x60] sm:$0xff] %v291
  %308 = vst [vmem:[#allocation2 + $0x68] sm:$0xff] %v292
  %309 = vst [vmem:[#allocation2 + $0x70] sm:$0xff] %v293
  %310 = vst [vmem:[#allocation2 + $0x78] sm:$0xff] %v294
  // Predicated region
  $region22: #{hicfl_forward.7} parent=0 // pred_check
    %p311 = pneg %p18
  $region23: #{hicfl_forward.7} parent=0 // pred_check_branch
    %313 = sbr.rel (%p311) target = $region25
  $region24: #{hicfl_forward.7} parent=0 // pred_region
    %v314 = vld [vmem:[#allocation2] sm:$0xff]
    %v315 = vld [vmem:[#allocation2 + $0x8] sm:$0xff]
    %v316 = vld [vmem:[#allocation2 + $0x10] sm:$0xff]
    %v317 = vld [vmem:[#allocation2 + $0x18] sm:$0xff]
    %v318 = vld [vmem:[#allocation2 + $0x20] sm:$0xff]
    %v319 = vld [vmem:[#allocation2 + $0x28] sm:$0xff]
    %v320 = vld [vmem:[#allocation2 + $0x30] sm:$0xff]
    %v321 = vld [vmem:[#allocation2 + $0x38] sm:$0xff]
    %v322 = vld [vmem:[#allocation2 + $0x40] sm:$0xff]
    %v323 = vld [vmem:[#allocation2 + $0x48] sm:$0xff]
    %v324 = vld [vmem:[#allocation2 + $0x50] sm:$0xff]
    %v325 = vld [vmem:[#allocation2 + $0x58] sm:$0xff]
    %v326 = vld [vmem:[#allocation2 + $0x60] sm:$0xff]
    %v327 = vld [vmem:[#allocation2 + $0x68] sm:$0xff]
    %v328 = vld [vmem:[#allocation2 + $0x70] sm:$0xff]
    %v329 = vld [vmem:[#allocation2 + $0x78] sm:$0xff]
    %v330 = vld [vmem:[%s2] sm:$0x1]
    %v332 = vlaneseq
    %v333 = vshrl.u32 %v332, 7
    %v334 = vsub.s32 0, %v333
    %v335 = vrot.slane %v330, %v334
    %v337 = vmul.f32 %v314, %v335
    %v338 = vmul.f32 %v315, %v335
    %v339 = vmul.f32 %v316, %v335
    %v340 = vmul.f32 %v317, %v335
    %v341 = vmul.f32 %v318, %v335
    %v342 = vmul.f32 %v319, %v335
    %v343 = vmul.f32 %v320, %v335
    %v344 = vmul.f32 %v321, %v335
    %v345 = vmul.f32 %v322, %v335
    %v346 = vmul.f32 %v323, %v335
    %v347 = vmul.f32 %v324, %v335
    %v348 = vmul.f32 %v325, %v335
    %v349 = vmul.f32 %v326, %v335
    %v350 = vmul.f32 %v327, %v335
    %v351 = vmul.f32 %v328, %v335
    %v352 = vmul.f32 %v329, %v335
    %v353 = vld [vmem:[%s3] sm:$0x1]
    %v355 = vlaneseq
    %v356 = vshrl.u32 %v355, 7
    %v357 = vsub.s32 0, %v356
    %v358 = vrot.slane %v353, %v357
    %v360 = vadd.f32 %v337, %v358
    %v361 = vadd.f32 %v338, %v358
    %v362 = vadd.f32 %v339, %v358
    %v363 = vadd.f32 %v340, %v358
    %v364 = vadd.f32 %v341, %v358
    %v365 = vadd.f32 %v342, %v358
    %v366 = vadd.f32 %v343, %v358
    %v367 = vadd.f32 %v344, %v358
    %v368 = vadd.f32 %v345, %v358
    %v369 = vadd.f32 %v346, %v358
    %v370 = vadd.f32 %v347, %v358
    %v371 = vadd.f32 %v348, %v358
    %v372 = vadd.f32 %v349, %v358
    %v373 = vadd.f32 %v350, %v358
    %v374 = vadd.f32 %v351, %v358
    %v375 = vadd.f32 %v352, %v358
    %v376 = vmax.f32 %v360, 0.0
    %v377 = vmax.f32 %v361, 0.0
    %v378 = vmax.f32 %v362, 0.0
    %v379 = vmax.f32 %v363, 0.0
    %v380 = vmax.f32 %v364, 0.0
    %v381 = vmax.f32 %v365, 0.0
    %v382 = vmax.f32 %v366, 0.0
    %v383 = vmax.f32 %v367, 0.0
    %v384 = vmax.f32 %v368, 0.0
    %v385 = vmax.f32 %v369, 0.0
    %v386 = vmax.f32 %v370, 0.0
    %v387 = vmax.f32 %v371, 0.0
    %v388 = vmax.f32 %v372, 0.0
    %v389 = vmax.f32 %v373, 0.0
    %v390 = vmax.f32 %v374, 0.0
    %v391 = vmax.f32 %v375, 0.0
    %v392 = vpack.c.bf16 %v377, %v376
    %v393 = vpack.c.bf16 %v379, %v378
    %v394 = vpack.c.bf16 %v381, %v380
    %v395 = vpack.c.bf16 %v383, %v382
    %v396 = vpack.c.bf16 %v385, %v384
    %v397 = vpack.c.bf16 %v387, %v386
    %v398 = vpack.c.bf16 %v389, %v388
    %v399 = vpack.c.bf16 %v391, %v390
    %v408 = vunpack.c.l.b16 %v392
    %v409 = vunpack.c.h.b16 %v392
    %v410 = vunpack.c.l.b16 %v393
    %v411 = vunpack.c.h.b16 %v393
    %v412 = vunpack.c.l.b16 %v394
    %v413 = vunpack.c.h.b16 %v394
    %v414 = vunpack.c.l.b16 %v395
    %v415 = vunpack.c.h.b16 %v395
    %v416 = vunpack.c.l.b16 %v396
    %v417 = vunpack.c.h.b16 %v396
    %v418 = vunpack.c.l.b16 %v397
    %v419 = vunpack.c.h.b16 %v397
    %v420 = vunpack.c.l.b16 %v398
    %v421 = vunpack.c.h.b16 %v398
    %v422 = vunpack.c.l.b16 %v399
    %v423 = vunpack.c.h.b16 %v399
    %v424 = vpack.c.b16 %v408, %v408
    %v425 = vpack.c.b16 %v409, %v409
    %v426 = vpack.c.b16 %v410, %v410
    %v427 = vpack.c.b16 %v411, %v411
    %v428 = vpack.c.b16 %v412, %v412
    %v429 = vpack.c.b16 %v413, %v413
    %v430 = vpack.c.b16 %v414, %v414
    %v431 = vpack.c.b16 %v415, %v415
    %v432 = vpack.c.b16 %v416, %v416
    %v433 = vpack.c.b16 %v417, %v417
    %v434 = vpack.c.b16 %v418, %v418
    %v435 = vpack.c.b16 %v419, %v419
    %v436 = vpack.c.b16 %v420, %v420
    %v437 = vpack.c.b16 %v421, %v421
    %v438 = vpack.c.b16 %v422, %v422
    %v439 = vpack.c.b16 %v423, %v423
    %456 = vst [vmem:[%s4] sm:$0xf] %v424
    %457 = vst [vmem:[%s4 + $0x4] sm:$0xf] %v425
    %458 = vst [vmem:[%s4 + $0x8] sm:$0xf] %v426
    %459 = vst [vmem:[%s4 + $0xc] sm:$0xf] %v427
    %460 = vst [vmem:[%s4 + $0x10] sm:$0xf] %v428
    %461 = vst [vmem:[%s4 + $0x14] sm:$0xf] %v429
    %462 = vst [vmem:[%s4 + $0x18] sm:$0xf] %v430
    %463 = vst [vmem:[%s4 + $0x1c] sm:$0xf] %v431
    %464 = vst [vmem:[%s4 + $0x20] sm:$0xf] %v432
    %465 = vst [vmem:[%s4 + $0x24] sm:$0xf] %v433
    %466 = vst [vmem:[%s4 + $0x28] sm:$0xf] %v434
    %467 = vst [vmem:[%s4 + $0x2c] sm:$0xf] %v435
    %468 = vst [vmem:[%s4 + $0x30] sm:$0xf] %v436
    %469 = vst [vmem:[%s4 + $0x34] sm:$0xf] %v437
    %470 = vst [vmem:[%s4 + $0x38] sm:$0xf] %v438
    %471 = vst [vmem:[%s4 + $0x3c] sm:$0xf] %v439
  $region25: #{hicfl_forward.7} parent=0 // pred_fallthru
    _
  // Predicated region
  $region26: #{hicfl_forward.7} parent=0 // pred_check
    _
  $region27: #{hicfl_forward.7} parent=0 // pred_check_branch
    %473 = sbr.rel (0) target = $region29
  $region28: #{hicfl_forward.7} parent=0 // pred_region
    _
  $region29: #{hicfl_forward.7} parent=0 // pred_fallthru
    _
  // Predicated region
  $region30: #{hicfl_forward.7} parent=0 // pred_check
    _
  $region31: #{hicfl_forward.7} parent=0 // pred_check_branch
    %475 = sbr.rel (0) target = $region33
  $region32: #{hicfl_forward.7} parent=0 // pred_region
    _
  $region33: #{hicfl_forward.7} parent=0 // pred_fallthru
    _

// kernel: hicfl_forward.5
$region0: #{hicfl_forward.5}
  #allocation0 [shape = 'u32[]', space=smem, size = 0x4, offset = 0x4, fixed_abs, tag = 'smem constant byte address 0x4 - core index']
  #allocation1 [shape = 'u32[144,128]{1,0:T(1,128)}', space=vmem, size = 0x12000, scoped, tag = 'internal scratch']
  %s0 = inlined_call_operand.vmem [shape: f32[128,128], index: 0, kind: input, shape index: {}]
  %s1 = inlined_call_operand.vmem [shape: f32[128,1], index: 1, kind: input, shape index: {}]
  %s2 = inlined_call_operand.vmem [shape: f32[1,128], index: 2, kind: input, shape index: {}]
  %s3 = inlined_call_operand.vmem [shape: bf16[128,128], index: 3, kind: output, shape index: {}]
  %s4 = sld [smem:[#allocation0]]
  $region22: #{hicfl_forward.5} parent=0
    _
  %s6 = ssub.s32 1, %s4
  %s7 = scalar_select 0, %s6, %s4
  // Predicated region
  $region2: #{hicfl_forward.5} parent=0 // pred_check
    _
  $region3: #{hicfl_forward.5} parent=0 // pred_check_branch
    %9 = sbr.rel (0) target = $region5
  $region4: #{hicfl_forward.5} parent=0 // pred_region
    _
  $region5: #{hicfl_forward.5} parent=0 // pred_fallthru
    _
  // Predicated region
  $region6: #{hicfl_forward.5} parent=0 // pred_check
    _
  $region7: #{hicfl_forward.5} parent=0 // pred_check_branch
    %11 = sbr.rel (0) target = $region9
  $region8: #{hicfl_forward.5} parent=0 // pred_region
    _
  $region9: #{hicfl_forward.5} parent=0 // pred_fallthru
    _
  // Predicated region
  $region10: #{hicfl_forward.5} parent=0 // pred_check
    _
  $region11: #{hicfl_forward.5} parent=0 // pred_check_branch
    %13 = sbr.rel (0) target = $region13
  $region12: #{hicfl_forward.5} parent=0 // pred_region
    _
  $region13: #{hicfl_forward.5} parent=0 // pred_fallthru
    _
  %v14 = vlaneseq
  %v15 = vshrl.u32 %v14, 7
  %v16 = vadd.s32 %v15, 8
  %v17 = vadd.s32 %v15, 16
  %v18 = vadd.s32 %v15, 24
  %v19 = vadd.s32 %v15, 32
  %v20 = vadd.s32 %v15, 40
  %v21 = vadd.s32 %v15, 48
  %v22 = vadd.s32 %v15, 56
  %v23 = vadd.s32 %v15, 64
  %v24 = vadd.s32 %v15, 72
  %v25 = vadd.s32 %v15, 80
  %v26 = vadd.s32 %v15, 88
  %v27 = vadd.s32 %v15, 96
  %v28 = vadd.s32 %v15, 104
  %v29 = vadd.s32 %v15, 112
  %v30 = vadd.s32 %v15, 120
  %s31 = smul.u32 0, 128
  %v32 = vstv %s31
  %v33 = vadd.s32 %v15, %v32
  %v34 = vadd.s32 %v16, %v32
  %v35 = vadd.s32 %v17, %v32
  %v36 = vadd.s32 %v18, %v32
  %v37 = vadd.s32 %v19, %v32
  %v38 = vadd.s32 %v20, %v32
  %v39 = vadd.s32 %v21, %v32
  %v40 = vadd.s32 %v22, %v32
  %v41 = vadd.s32 %v23, %v32
  %v42 = vadd.s32 %v24, %v32
  %v43 = vadd.s32 %v25, %v32
  %v44 = vadd.s32 %v26, %v32
  %v45 = vadd.s32 %v27, %v32
  %v46 = vadd.s32 %v28, %v32
  %v47 = vadd.s32 %v29, %v32
  %v48 = vadd.s32 %v30, %v32
  %v49 = vlaneseq
  %v50 = vand.u32 %v49, 127
  %s51 = smul.u32 0, 128
  %v52 = vstv %s51
  %v53 = vadd.s32 %v50, %v52
  %vm54 = vcmp.eq.s32.totalorder %v33, %v53
  %vm55 = vcmp.eq.s32.totalorder %v34, %v53
  %vm56 = vcmp.eq.s32.totalorder %v35, %v53
  %vm57 = vcmp.eq.s32.totalorder %v36, %v53
  %vm58 = vcmp.eq.s32.totalorder %v37, %v53
  %vm59 = vcmp.eq.s32.totalorder %v38, %v53
  %vm60 = vcmp.eq.s32.totalorder %v39, %v53
  %vm61 = vcmp.eq.s32.totalorder %v40, %v53
  %vm62 = vcmp.eq.s32.totalorder %v41, %v53
  %vm63 = vcmp.eq.s32.totalorder %v42, %v53
  %vm64 = vcmp.eq.s32.totalorder %v43, %v53
  %vm65 = vcmp.eq.s32.totalorder %v44, %v53
  %vm66 = vcmp.eq.s32.totalorder %v45, %v53
  %vm67 = vcmp.eq.s32.totalorder %v46, %v53
  %vm68 = vcmp.eq.s32.totalorder %v47, %v53
  %vm69 = vcmp.eq.s32.totalorder %v48, %v53
  %vm70 = vcmp.lt.s32.totalorder %v33, 128
  %vm71 = vcmp.lt.s32.totalorder %v34, 128
  %vm72 = vcmp.lt.s32.totalorder %v35, 128
  %vm73 = vcmp.lt.s32.totalorder %v36, 128
  %vm74 = vcmp.lt.s32.totalorder %v37, 128
  %vm75 = vcmp.lt.s32.totalorder %v38, 128
  %vm76 = vcmp.lt.s32.totalorder %v39, 128
  %vm77 = vcmp.lt.s32.totalorder %v40, 128
  %vm78 = vcmp.lt.s32.totalorder %v41, 128
  %vm79 = vcmp.lt.s32.totalorder %v42, 128
  %vm80 = vcmp.lt.s32.totalorder %v43, 128
  %vm81 = vcmp.lt.s32.totalorder %v44, 128
  %vm82 = vcmp.lt.s32.totalorder %v45, 128
  %vm83 = vcmp.lt.s32.totalorder %v46, 128
  %vm84 = vcmp.lt.s32.totalorder %v47, 128
  %vm85 = vcmp.lt.s32.totalorder %v48, 128
  %vm86 = vmand %vm54, %vm70
  %vm87 = vmand %vm55, %vm71
  %vm88 = vmand %vm56, %vm72
  %vm89 = vmand %vm57, %vm73
  %vm90 = vmand %vm58, %vm74
  %vm91 = vmand %vm59, %vm75
  %vm92 = vmand %vm60, %vm76
  %vm93 = vmand %vm61, %vm77
  %vm94 = vmand %vm62, %vm78
  %vm95 = vmand %vm63, %vm79
  %vm96 = vmand %vm64, %vm80
  %vm97 = vmand %vm65, %vm81
  %vm98 = vmand %vm66, %vm82
  %vm99 = vmand %vm67, %vm83
  %vm100 = vmand %vm68, %vm84
  %vm101 = vmand %vm69, %vm85
  %v102 = vsel %vm86, 1.0, 0.0
  %v103 = vsel %vm87, 1.0, 0.0
  %v104 = vsel %vm88, 1.0, 0.0
  %v105 = vsel %vm89, 1.0, 0.0
  %v106 = vsel %vm90, 1.0, 0.0
  %v107 = vsel %vm91, 1.0, 0.0
  %v108 = vsel %vm92, 1.0, 0.0
  %v109 = vsel %vm93, 1.0, 0.0
  %v110 = vsel %vm94, 1.0, 0.0
  %v111 = vsel %vm95, 1.0, 0.0
  %v112 = vsel %vm96, 1.0, 0.0
  %v113 = vsel %vm97, 1.0, 0.0
  %v114 = vsel %vm98, 1.0, 0.0
  %v115 = vsel %vm99, 1.0, 0.0
  %v116 = vsel %vm100, 1.0, 0.0
  %v117 = vsel %vm101, 1.0, 0.0
  %v118 = vld [vmem:[%s0] sm:$0xff]
  %v119 = vld [vmem:[%s0 + $0x8] sm:$0xff]
  %v120 = vld [vmem:[%s0 + $0x10] sm:$0xff]
  %v121 = vld [vmem:[%s0 + $0x18] sm:$0xff]
  %v122 = vld [vmem:[%s0 + $0x20] sm:$0xff]
  %v123 = vld [vmem:[%s0 + $0x28] sm:$0xff]
  %v124 = vld [vmem:[%s0 + $0x30] sm:$0xff]
  %v125 = vld [vmem:[%s0 + $0x38] sm:$0xff]
  %v126 = vld [vmem:[%s0 + $0x40] sm:$0xff]
  %v127 = vld [vmem:[%s0 + $0x48] sm:$0xff]
  %v128 = vld [vmem:[%s0 + $0x50] sm:$0xff]
  %v129 = vld [vmem:[%s0 + $0x58] sm:$0xff]
  %v130 = vld [vmem:[%s0 + $0x60] sm:$0xff]
  %v131 = vld [vmem:[%s0 + $0x68] sm:$0xff]
  %v132 = vld [vmem:[%s0 + $0x70] sm:$0xff]
  %v133 = vld [vmem:[%s0 + $0x78] sm:$0xff]
  %v134 = vadd.f32 %v118, %v102
  %v135 = vadd.f32 %v119, %v103
  %v136 = vadd.f32 %v120, %v104
  %v137 = vadd.f32 %v121, %v105
  %v138 = vadd.f32 %v122, %v106
  %v139 = vadd.f32 %v123, %v107
  %v140 = vadd.f32 %v124, %v108
  %v141 = vadd.f32 %v125, %v109
  %v142 = vadd.f32 %v126, %v110
  %v143 = vadd.f32 %v127, %v111
  %v144 = vadd.f32 %v128, %v112
  %v145 = vadd.f32 %v129, %v113
  %v146 = vadd.f32 %v130, %v114
  %v147 = vadd.f32 %v131, %v115
  %v148 = vadd.f32 %v132, %v116
  %v149 = vadd.f32 %v133, %v117
  %v150 = vld [vmem:[%s1] sm:$0xff]
  %v151 = vld [vmem:[%s1 + $0x8] sm:$0xff]
  %v152 = vld [vmem:[%s1 + $0x10] sm:$0xff]
  %v153 = vld [vmem:[%s1 + $0x18] sm:$0xff]
  %v154 = vld [vmem:[%s1 + $0x20] sm:$0xff]
  %v155 = vld [vmem:[%s1 + $0x28] sm:$0xff]
  %v156 = vld [vmem:[%s1 + $0x30] sm:$0xff]
  %v157 = vld [vmem:[%s1 + $0x38] sm:$0xff]
  %v158 = vld [vmem:[%s1 + $0x40] sm:$0xff]
  %v159 = vld [vmem:[%s1 + $0x48] sm:$0xff]
  %v160 = vld [vmem:[%s1 + $0x50] sm:$0xff]
  %v161 = vld [vmem:[%s1 + $0x58] sm:$0xff]
  %v162 = vld [vmem:[%s1 + $0x60] sm:$0xff]
  %v163 = vld [vmem:[%s1 + $0x68] sm:$0xff]
  %v164 = vld [vmem:[%s1 + $0x70] sm:$0xff]
  %v165 = vld [vmem:[%s1 + $0x78] sm:$0xff]
  %167 = vset.pattern.permute.xlu0 0
  %168 = vperm.xlu0 %167, %v150
  %v169 = vpop.permute.xlu0 %168
  %172 = vset.pattern.permute.xlu0 0
  %173 = vperm.xlu0 %172, %v151
  %v174 = vpop.permute.xlu0 %173
  %177 = vset.pattern.permute.xlu0 0
  %178 = vperm.xlu0 %177, %v152
  %v179 = vpop.permute.xlu0 %178
  %182 = vset.pattern.permute.xlu0 0
  %183 = vperm.xlu0 %182, %v153
  %v184 = vpop.permute.xlu0 %183
  %187 = vset.pattern.permute.xlu0 0
  %188 = vperm.xlu0 %187, %v154
  %v189 = vpop.permute.xlu0 %188
  %192 = vset.pattern.permute.xlu0 0
  %193 = vperm.xlu0 %192, %v155
  %v194 = vpop.permute.xlu0 %193
  %197 = vset.pattern.permute.xlu0 0
  %198 = vperm.xlu0 %197, %v156
  %v199 = vpop.permute.xlu0 %198
  %202 = vset.pattern.permute.xlu0 0
  %203 = vperm.xlu0 %202, %v157
  %v204 = vpop.permute.xlu0 %203
  %207 = vset.pattern.permute.xlu0 0
  %208 = vperm.xlu0 %207, %v158
  %v209 = vpop.permute.xlu0 %208
  %212 = vset.pattern.permute.xlu0 0
  %213 = vperm.xlu0 %212, %v159
  %v214 = vpop.permute.xlu0 %213
  %217 = vset.pattern.permute.xlu0 0
  %218 = vperm.xlu0 %217, %v160
  %v219 = vpop.permute.xlu0 %218
  %222 = vset.pattern.permute.xlu0 0
  %223 = vperm.xlu0 %222, %v161
  %v224 = vpop.permute.xlu0 %223
  %227 = vset.pattern.permute.xlu0 0
  %228 = vperm.xlu0 %227, %v162
  %v229 = vpop.permute.xlu0 %228
  %232 = vset.pattern.permute.xlu0 0
  %233 = vperm.xlu0 %232, %v163
  %v234 = vpop.permute.xlu0 %233
  %237 = vset.pattern.permute.xlu0 0
  %238 = vperm.xlu0 %237, %v164
  %v239 = vpop.permute.xlu0 %238
  %242 = vset.pattern.permute.xlu0 0
  %243 = vperm.xlu0 %242, %v165
  %v244 = vpop.permute.xlu0 %243
  %v246 = vmul.f32 %v134, %v169
  %v247 = vmul.f32 %v135, %v174
  %v248 = vmul.f32 %v136, %v179
  %v249 = vmul.f32 %v137, %v184
  %v250 = vmul.f32 %v138, %v189
  %v251 = vmul.f32 %v139, %v194
  %v252 = vmul.f32 %v140, %v199
  %v253 = vmul.f32 %v141, %v204
  %v254 = vmul.f32 %v142, %v209
  %v255 = vmul.f32 %v143, %v214
  %v256 = vmul.f32 %v144, %v219
  %v257 = vmul.f32 %v145, %v224
  %v258 = vmul.f32 %v146, %v229
  %v259 = vmul.f32 %v147, %v234
  %v260 = vmul.f32 %v148, %v239
  %v261 = vmul.f32 %v149, %v244
  %v262 = vld [vmem:[%s2] sm:$0x1]
  %v264 = vlaneseq
  %v265 = vshrl.u32 %v264, 7
  %v266 = vsub.s32 0, %v265
  %v267 = vrot.slane %v262, %v266
  %v269 = vmul.f32 %v246, %v267
  %v270 = vmul.f32 %v247, %v267
  %v271 = vmul.f32 %v248, %v267
  %v272 = vmul.f32 %v249, %v267
  %v273 = vmul.f32 %v250, %v267
  %v274 = vmul.f32 %v251, %v267
  %v275 = vmul.f32 %v252, %v267
  %v276 = vmul.f32 %v253, %v267
  %v277 = vmul.f32 %v254, %v267
  %v278 = vmul.f32 %v255, %v267
  %v279 = vmul.f32 %v256, %v267
  %v280 = vmul.f32 %v257, %v267
  %v281 = vmul.f32 %v258, %v267
  %v282 = vmul.f32 %v259, %v267
  %v283 = vmul.f32 %v260, %v267
  %v284 = vmul.f32 %v261, %v267
  %v285 = vpack.c.bf16 %v270, %v269
  %v286 = vpack.c.bf16 %v272, %v271
  %v287 = vpack.c.bf16 %v274, %v273
  %v288 = vpack.c.bf16 %v276, %v275
  %v289 = vpack.c.bf16 %v278, %v277
  %v290 = vpack.c.bf16 %v280, %v279
  %v291 = vpack.c.bf16 %v282, %v281
  %v292 = vpack.c.bf16 %v284, %v283
  %v301 = vunpack.c.l.b16 %v285
  %v302 = vunpack.c.h.b16 %v285
  %v303 = vunpack.c.l.b16 %v286
  %v304 = vunpack.c.h.b16 %v286
  %v305 = vunpack.c.l.b16 %v287
  %v306 = vunpack.c.h.b16 %v287
  %v307 = vunpack.c.l.b16 %v288
  %v308 = vunpack.c.h.b16 %v288
  %v309 = vunpack.c.l.b16 %v289
  %v310 = vunpack.c.h.b16 %v289
  %v311 = vunpack.c.l.b16 %v290
  %v312 = vunpack.c.h.b16 %v290
  %v313 = vunpack.c.l.b16 %v291
  %v314 = vunpack.c.h.b16 %v291
  %v315 = vunpack.c.l.b16 %v292
  %v316 = vunpack.c.h.b16 %v292
  %v317 = vpack.c.b16 %v301, %v301
  %v318 = vpack.c.b16 %v302, %v302
  %v319 = vpack.c.b16 %v303, %v303
  %v320 = vpack.c.b16 %v304, %v304
  %v321 = vpack.c.b16 %v305, %v305
  %v322 = vpack.c.b16 %v306, %v306
  %v323 = vpack.c.b16 %v307, %v307
  %v324 = vpack.c.b16 %v308, %v308
  %v325 = vpack.c.b16 %v309, %v309
  %v326 = vpack.c.b16 %v310, %v310
  %v327 = vpack.c.b16 %v311, %v311
  %v328 = vpack.c.b16 %v312, %v312
  %v329 = vpack.c.b16 %v313, %v313
  %v330 = vpack.c.b16 %v314, %v314
  %v331 = vpack.c.b16 %v315, %v315
  %v332 = vpack.c.b16 %v316, %v316
  %349 = vst [vmem:[%s3] sm:$0xf] %v317
  %350 = vst [vmem:[%s3 + $0x4] sm:$0xf] %v318
  %351 = vst [vmem:[%s3 + $0x8] sm:$0xf] %v319
  %352 = vst [vmem:[%s3 + $0xc] sm:$0xf] %v320
  %353 = vst [vmem:[%s3 + $0x10] sm:$0xf] %v321
  %354 = vst [vmem:[%s3 + $0x14] sm:$0xf] %v322
  %355 = vst [vmem:[%s3 + $0x18] sm:$0xf] %v323
  %356 = vst [vmem:[%s3 + $0x1c] sm:$0xf] %v324
  %357 = vst [vmem:[%s3 + $0x20] sm:$0xf] %v325
  %358 = vst [vmem:[%s3 + $0x24] sm:$0xf] %v326
  %359 = vst [vmem:[%s3 + $0x28] sm:$0xf] %v327
  %360 = vst [vmem:[%s3 + $0x2c] sm:$0xf] %v328
  %361 = vst [vmem:[%s3 + $0x30] sm:$0xf] %v329
  %362 = vst [vmem:[%s3 + $0x34] sm:$0xf] %v330
  %363 = vst [vmem:[%s3 + $0x38] sm:$0xf] %v331
  %364 = vst [vmem:[%s3 + $0x3c] sm:$0xf] %v332
  // Predicated region
  $region14: #{hicfl_forward.5} parent=0 // pred_check
    _
  $region15: #{hicfl_forward.5} parent=0 // pred_check_branch
    %366 = sbr.rel (0) target = $region17
  $region16: #{hicfl_forward.5} parent=0 // pred_region
    _
  $region17: #{hicfl_forward.5} parent=0 // pred_fallthru
    _
  // Predicated region
  $region18: #{hicfl_forward.5} parent=0 // pred_check
    _
  $region19: #{hicfl_forward.5} parent=0 // pred_check_branch
    %368 = sbr.rel (0) target = $region21
  $region20: #{hicfl_forward.5} parent=0 // pred_region
    _
  $region21: #{hicfl_forward.5} parent=0 // pred_fallthru
    _

// kernel: hicfl_forward.8
$region0: #{hicfl_forward.8}
  #allocation0 [shape = 'u32[]', space=smem, size = 0x4, offset = 0x4, fixed_abs, tag = 'smem constant byte address 0x4 - core index']
  #allocation1 [shape = 'u32[144,128]{1,0:T(1,128)}', space=vmem, size = 0x12000, scoped, tag = 'internal scratch']
  #allocation2 [shape = 'f32[128,128]{1,0:T(8,128)}', space=vmem, size = 0x10000, scoped, tag = 'scratch operand']
  %s0 = inlined_call_operand.vmem [shape: bf16[128,128], index: 0, kind: input, shape index: {}]
  %s1 = inlined_call_operand.vmem [shape: bf16[128,128], index: 1, kind: input, shape index: {}]
  %s2 = inlined_call_operand.vmem [shape: bf16[128,128], index: 2, kind: input, shape index: {}]
  %s3 = inlined_call_operand.vmem [shape: f32[1,128], index: 3, kind: input, shape index: {}]
  %s4 = inlined_call_operand.vmem [shape: f32[1,128], index: 4, kind: input, shape index: {}]
  %s5 = inlined_call_operand.vmem [shape: bf16[128,128], index: 5, kind: output, shape index: {}]
  %s6 = sld [smem:[#allocation0]]
  $region38: #{hicfl_forward.8} parent=0
    _
  %s8 = ssub.s32 1, %s6
  %s9 = scalar_select 0, %s8, %s6
  // Predicated region
  $region2: #{hicfl_forward.8} parent=0 // pred_check
    _
  $region3: #{hicfl_forward.8} parent=0 // pred_check_branch
    %11 = sbr.rel (0) target = $region5
  $region4: #{hicfl_forward.8} parent=0 // pred_region
    _
  $region5: #{hicfl_forward.8} parent=0 // pred_fallthru
    _
  // Predicated region
  $region6: #{hicfl_forward.8} parent=0 // pred_check
    _
  $region7: #{hicfl_forward.8} parent=0 // pred_check_branch
    %13 = sbr.rel (0) target = $region9
  $region8: #{hicfl_forward.8} parent=0 // pred_region
    _
  $region9: #{hicfl_forward.8} parent=0 // pred_fallthru
    _
  // Predicated region
  $region10: #{hicfl_forward.8} parent=0 // pred_check
    _
  $region11: #{hicfl_forward.8} parent=0 // pred_check_branch
    %15 = sbr.rel (0) target = $region13
  $region12: #{hicfl_forward.8} parent=0 // pred_region
    _
  $region13: #{hicfl_forward.8} parent=0 // pred_fallthru
    _
  // Predicated region
  $region14: #{hicfl_forward.8} parent=0 // pred_check
    _
  $region15: #{hicfl_forward.8} parent=0 // pred_check_branch
    %17 = sbr.rel (0) target = $region17
  $region16: #{hicfl_forward.8} parent=0 // pred_region
    _
  $region17: #{hicfl_forward.8} parent=0 // pred_fallthru
    _
  // Predicated region
  $region18: #{hicfl_forward.8} parent=0 // pred_check
    _
  $region19: #{hicfl_forward.8} parent=0 // pred_check_branch
    %19 = sbr.rel (0) target = $region21
  $region20: #{hicfl_forward.8} parent=0 // pred_region
    _
  $region21: #{hicfl_forward.8} parent=0 // pred_fallthru
    _
  %p21 = scmp.eq.s32.totalorder 0, 0
  // Predicated region
  $region22: #{hicfl_forward.8} parent=0 // pred_check
    %p22 = pneg %p21
  $region23: #{hicfl_forward.8} parent=0 // pred_check_branch
    %24 = sbr.rel (%p22) target = $region25
  $region24: #{hicfl_forward.8} parent=0 // pred_region
    %25 = vst [vmem:[#allocation2] sm:$0xff] 0.0
    %26 = vst [vmem:[#allocation2 + $0x8] sm:$0xff] 0.0
    %27 = vst [vmem:[#allocation2 + $0x10] sm:$0xff] 0.0
    %28 = vst [vmem:[#allocation2 + $0x18] sm:$0xff] 0.0
    %29 = vst [vmem:[#allocation2 + $0x20] sm:$0xff] 0.0
    %30 = vst [vmem:[#allocation2 + $0x28] sm:$0xff] 0.0
    %31 = vst [vmem:[#allocation2 + $0x30] sm:$0xff] 0.0
    %32 = vst [vmem:[#allocation2 + $0x38] sm:$0xff] 0.0
    %33 = vst [vmem:[#allocation2 + $0x40] sm:$0xff] 0.0
    %34 = vst [vmem:[#allocation2 + $0x48] sm:$0xff] 0.0
    %35 = vst [vmem:[#allocation2 + $0x50] sm:$0xff] 0.0
    %36 = vst [vmem:[#allocation2 + $0x58] sm:$0xff] 0.0
    %37 = vst [vmem:[#allocation2 + $0x60] sm:$0xff] 0.0
    %38 = vst [vmem:[#allocation2 + $0x68] sm:$0xff] 0.0
    %39 = vst [vmem:[#allocation2 + $0x70] sm:$0xff] 0.0
    %40 = vst [vmem:[#allocation2 + $0x78] sm:$0xff] 0.0
  $region25: #{hicfl_forward.8} parent=0 // pred_fallthru
    _
  %v41 = vld [vmem:[%s1] sm:$0xf]
  %v42 = vld [vmem:[%s1 + $0x4] sm:$0xf]
  %v43 = vld [vmem:[%s1 + $0x8] sm:$0xf]
  %v44 = vld [vmem:[%s1 + $0xc] sm:$0xf]
  %v45 = vld [vmem:[%s1 + $0x10] sm:$0xf]
  %v46 = vld [vmem:[%s1 + $0x14] sm:$0xf]
  %v47 = vld [vmem:[%s1 + $0x18] sm:$0xf]
  %v48 = vld [vmem:[%s1 + $0x1c] sm:$0xf]
  %v49 = vld [vmem:[%s1 + $0x20] sm:$0xf]
  %v50 = vld [vmem:[%s1 + $0x24] sm:$0xf]
  %v51 = vld [vmem:[%s1 + $0x28] sm:$0xf]
  %v52 = vld [vmem:[%s1 + $0x2c] sm:$0xf]
  %v53 = vld [vmem:[%s1 + $0x30] sm:$0xf]
  %v54 = vld [vmem:[%s1 + $0x34] sm:$0xf]
  %v55 = vld [vmem:[%s1 + $0x38] sm:$0xf]
  %v56 = vld [vmem:[%s1 + $0x3c] sm:$0xf]
  %v57 = vld [vmem:[%s2] sm:$0xf]
  %v58 = vld [vmem:[%s2 + $0x4] sm:$0xf]
  %v59 = vld [vmem:[%s2 + $0x8] sm:$0xf]
  %v60 = vld [vmem:[%s2 + $0xc] sm:$0xf]
  %v61 = vld [vmem:[%s2 + $0x10] sm:$0xf]
  %v62 = vld [vmem:[%s2 + $0x14] sm:$0xf]
  %v63 = vld [vmem:[%s2 + $0x18] sm:$0xf]
  %v64 = vld [vmem:[%s2 + $0x1c] sm:$0xf]
  %v65 = vld [vmem:[%s2 + $0x20] sm:$0xf]
  %v66 = vld [vmem:[%s2 + $0x24] sm:$0xf]
  %v67 = vld [vmem:[%s2 + $0x28] sm:$0xf]
  %v68 = vld [vmem:[%s2 + $0x2c] sm:$0xf]
  %v69 = vld [vmem:[%s2 + $0x30] sm:$0xf]
  %v70 = vld [vmem:[%s2 + $0x34] sm:$0xf]
  %v71 = vld [vmem:[%s2 + $0x38] sm:$0xf]
  %v72 = vld [vmem:[%s2 + $0x3c] sm:$0xf]
  %v89 = vunpack.c.l.b16 %v41
  %v90 = vunpack.c.l.b16 %v42
  %v91 = vunpack.c.l.b16 %v43
  %v92 = vunpack.c.l.b16 %v44
  %v93 = vunpack.c.l.b16 %v45
  %v94 = vunpack.c.l.b16 %v46
  %v95 = vunpack.c.l.b16 %v47
  %v96 = vunpack.c.l.b16 %v48
  %v97 = vunpack.c.l.b16 %v49
  %v98 = vunpack.c.l.b16 %v50
  %v99 = vunpack.c.l.b16 %v51
  %v100 = vunpack.c.l.b16 %v52
  %v101 = vunpack.c.l.b16 %v53
  %v102 = vunpack.c.l.b16 %v54
  %v103 = vunpack.c.l.b16 %v55
  %v104 = vunpack.c.l.b16 %v56
  %v105 = vpack.c.b16 %v90, %v89
  %v106 = vpack.c.b16 %v92, %v91
  %v107 = vpack.c.b16 %v94, %v93
  %v108 = vpack.c.b16 %v96, %v95
  %v109 = vpack.c.b16 %v98, %v97
  %v110 = vpack.c.b16 %v100, %v99
  %v111 = vpack.c.b16 %v102, %v101
  %v112 = vpack.c.b16 %v104, %v103
  %v137 = vunpack.c.l.b16 %v57
  %v138 = vunpack.c.l.b16 %v58
  %v139 = vunpack.c.l.b16 %v59
  %v140 = vunpack.c.l.b16 %v60
  %v141 = vunpack.c.l.b16 %v61
  %v142 = vunpack.c.l.b16 %v62
  %v143 = vunpack.c.l.b16 %v63
  %v144 = vunpack.c.l.b16 %v64
  %v145 = vunpack.c.l.b16 %v65
  %v146 = vunpack.c.l.b16 %v66
  %v147 = vunpack.c.l.b16 %v67
  %v148 = vunpack.c.l.b16 %v68
  %v149 = vunpack.c.l.b16 %v69
  %v150 = vunpack.c.l.b16 %v70
  %v151 = vunpack.c.l.b16 %v71
  %v152 = vunpack.c.l.b16 %v72
  %v153 = vpack.c.b16 %v138, %v137
  %v154 = vpack.c.b16 %v140, %v139
  %v155 = vpack.c.b16 %v142, %v141
  %v156 = vpack.c.b16 %v144, %v143
  %v157 = vpack.c.b16 %v146, %v145
  %v158 = vpack.c.b16 %v148, %v147
  %v159 = vpack.c.b16 %v150, %v149
  %v160 = vpack.c.b16 %v152, %v151
  %169 = vmatprep.subr.bf16.mxu0 0
  %170 = vmatpush1.bf16.msra.mxu0 %v153
  %171 = vmatprep.subr.bf16.mxu0 0
  %172 = vmatpush1.bf16.msra.mxu0 %v154
  %173 = vmatprep.subr.bf16.mxu0 0
  %174 = vmatpush1.bf16.msra.mxu0 %v155
  %175 = vmatprep.subr.bf16.mxu0 0
  %176 = vmatpush1.bf16.msra.mxu0 %v156
  %177 = vmatprep.subr.bf16.mxu0 0
  %178 = vmatpush1.bf16.msra.mxu0 %v157
  %179 = vmatprep.subr.bf16.mxu0 0
  %180 = vmatpush1.bf16.msra.mxu0 %v158
  %181 = vmatprep.subr.bf16.mxu0 0
  %182 = vmatpush1.bf16.msra.mxu0 %v159
  %183 = vmatprep.subr.bf16.mxu0 0
  %184 = vmatpush1.bf16.msra.mxu0 %v160
  %185 = vmatprep.subr.bf16.mxu0 0
  %186 = vmatpush1.bf16.msra.mxu0 0
  %187 = vmatprep.subr.bf16.mxu0 0
  %188 = vmatpush1.bf16.msra.mxu0 0
  %189 = vmatprep.subr.bf16.mxu0 0
  %190 = vmatpush1.bf16.msra.mxu0 0
  %191 = vmatprep.subr.bf16.mxu0 0
  %192 = vmatpush1.bf16.msra.mxu0 0
  %193 = vmatprep.subr.bf16.mxu0 0
  %194 = vmatpush1.bf16.msra.mxu0 0
  %195 = vmatprep.subr.bf16.mxu0 0
  %196 = vmatpush1.bf16.msra.mxu0 0
  %197 = vmatprep.subr.bf16.mxu0 0
  %198 = vmatpush1.bf16.msra.mxu0 0
  %199 = vmatprep.subr.bf16.mxu0 0
  %200 = vmatpush1.bf16.msra.mxu0 0
  %201 = vmatprep.mubr.bf16.mxu0 0
  %202 = vmatmul.mubr.bf16.gmra.mrb[0].mxu0 %v105
  %v203 = vpop.f32.mrb[0].mxu0
  %v204 = vadd.f32 0.0, %v203
  %v205 = vpop.f32.mrb[0].mxu0
  %v206 = vpop.f32.mrb[0].mxu0
  %v207 = vadd.f32 0.0, %v206
  %v208 = vpop.f32.mrb[0].mxu0
  %209 = vmatprep.mubr.bf16.mxu0 0
  %210 = vmatmul.mubr.bf16.gmra.mrb[0].mxu0 %v106
  %v211 = vpop.f32.mrb[0].mxu0
  %v212 = vadd.f32 0.0, %v211
  %v213 = vpop.f32.mrb[0].mxu0
  %v214 = vpop.f32.mrb[0].mxu0
  %v215 = vadd.f32 0.0, %v214
  %v216 = vpop.f32.mrb[0].mxu0
  %217 = vmatprep.mubr.bf16.mxu0 0
  %218 = vmatmul.mubr.bf16.gmra.mrb[0].mxu0 %v107
  %v219 = vpop.f32.mrb[0].mxu0
  %v220 = vadd.f32 0.0, %v219
  %v221 = vpop.f32.mrb[0].mxu0
  %v222 = vpop.f32.mrb[0].mxu0
  %v223 = vadd.f32 0.0, %v222
  %v224 = vpop.f32.mrb[0].mxu0
  %225 = vmatprep.mubr.bf16.mxu0 0
  %226 = vmatmul.mubr.bf16.gmra.mrb[0].mxu0 %v108
  %v227 = vpop.f32.mrb[0].mxu0
  %v228 = vadd.f32 0.0, %v227
  %v229 = vpop.f32.mrb[0].mxu0
  %v230 = vpop.f32.mrb[0].mxu0
  %v231 = vadd.f32 0.0, %v230
  %v232 = vpop.f32.mrb[0].mxu0
  %233 = vmatprep.mubr.bf16.mxu0 0
  %234 = vmatmul.mubr.bf16.gmra.mrb[0].mxu0 %v109
  %v235 = vpop.f32.mrb[0].mxu0
  %v236 = vadd.f32 0.0, %v235
  %v237 = vpop.f32.mrb[0].mxu0
  %v238 = vpop.f32.mrb[0].mxu0
  %v239 = vadd.f32 0.0, %v238
  %v240 = vpop.f32.mrb[0].mxu0
  %241 = vmatprep.mubr.bf16.mxu0 0
  %242 = vmatmul.mubr.bf16.gmra.mrb[0].mxu0 %v110
  %v243 = vpop.f32.mrb[0].mxu0
  %v244 = vadd.f32 0.0, %v243
  %v245 = vpop.f32.mrb[0].mxu0
  %v246 = vpop.f32.mrb[0].mxu0
  %v247 = vadd.f32 0.0, %v246
  %v248 = vpop.f32.mrb[0].mxu0
  %249 = vmatprep.mubr.bf16.mxu0 0
  %250 = vmatmul.mubr.bf16.gmra.mrb[0].mxu0 %v111
  %v251 = vpop.f32.mrb[0].mxu0
  %v252 = vadd.f32 0.0, %v251
  %v253 = vpop.f32.mrb[0].mxu0
  %v254 = vpop.f32.mrb[0].mxu0
  %v255 = vadd.f32 0.0, %v254
  %v256 = vpop.f32.mrb[0].mxu0
  %257 = vmatprep.mubr.bf16.mxu0 0
  %258 = vmatmul.mubr.bf16.gmra.mrb[0].mxu0 %v112
  %v259 = vpop.f32.mrb[0].mxu0
  %v260 = vadd.f32 0.0, %v259
  %v261 = vpop.f32.mrb[0].mxu0
  %v262 = vpop.f32.mrb[0].mxu0
  %v263 = vadd.f32 0.0, %v262
  %v264 = vpop.f32.mrb[0].mxu0
  %265 = vdwg.mxu0
  %v266 = vld [vmem:[#allocation2] sm:$0xff]
  %v267 = vld [vmem:[#allocation2 + $0x8] sm:$0xff]
  %v268 = vld [vmem:[#allocation2 + $0x10] sm:$0xff]
  %v269 = vld [vmem:[#allocation2 + $0x18] sm:$0xff]
  %v270 = vld [vmem:[#allocation2 + $0x20] sm:$0xff]
  %v271 = vld [vmem:[#allocation2 + $0x28] sm:$0xff]
  %v272 = vld [vmem:[#allocation2 + $0x30] sm:$0xff]
  %v273 = vld [vmem:[#allocation2 + $0x38] sm:$0xff]
  %v274 = vld [vmem:[#allocation2 + $0x40] sm:$0xff]
  %v275 = vld [vmem:[#allocation2 + $0x48] sm:$0xff]
  %v276 = vld [vmem:[#allocation2 + $0x50] sm:$0xff]
  %v277 = vld [vmem:[#allocation2 + $0x58] sm:$0xff]
  %v278 = vld [vmem:[#allocation2 + $0x60] sm:$0xff]
  %v279 = vld [vmem:[#allocation2 + $0x68] sm:$0xff]
  %v280 = vld [vmem:[#allocation2 + $0x70] sm:$0xff]
  %v281 = vld [vmem:[#allocation2 + $0x78] sm:$0xff]
  %v282 = vld [vmem:[%s0] sm:$0xf]
  %v283 = vld [vmem:[%s0 + $0x4] sm:$0xf]
  %v284 = vld [vmem:[%s0 + $0x8] sm:$0xf]
  %v285 = vld [vmem:[%s0 + $0xc] sm:$0xf]
  %v286 = vld [vmem:[%s0 + $0x10] sm:$0xf]
  %v287 = vld [vmem:[%s0 + $0x14] sm:$0xf]
  %v288 = vld [vmem:[%s0 + $0x18] sm:$0xf]
  %v289 = vld [vmem:[%s0 + $0x1c] sm:$0xf]
  %v290 = vld [vmem:[%s0 + $0x20] sm:$0xf]
  %v291 = vld [vmem:[%s0 + $0x24] sm:$0xf]
  %v292 = vld [vmem:[%s0 + $0x28] sm:$0xf]
  %v293 = vld [vmem:[%s0 + $0x2c] sm:$0xf]
  %v294 = vld [vmem:[%s0 + $0x30] sm:$0xf]
  %v295 = vld [vmem:[%s0 + $0x34] sm:$0xf]
  %v296 = vld [vmem:[%s0 + $0x38] sm:$0xf]
  %v297 = vld [vmem:[%s0 + $0x3c] sm:$0xf]
  %v298 = vpack.c.bf16 %v207, %v204
  %v299 = vpack.c.bf16 %v215, %v212
  %v300 = vpack.c.bf16 %v223, %v220
  %v301 = vpack.c.bf16 %v231, %v228
  %v302 = vpack.c.bf16 %v239, %v236
  %v303 = vpack.c.bf16 %v247, %v244
  %v304 = vpack.c.bf16 %v255, %v252
  %v305 = vpack.c.bf16 %v263, %v260
  %v322 = vunpack.c.l.b16 %v282
  %v323 = vunpack.c.l.b16 %v283
  %v324 = vunpack.c.l.b16 %v284
  %v325 = vunpack.c.l.b16 %v285
  %v326 = vunpack.c.l.b16 %v286
  %v327 = vunpack.c.l.b16 %v287
  %v328 = vunpack.c.l.b16 %v288
  %v329 = vunpack.c.l.b16 %v289
  %v330 = vunpack.c.l.b16 %v290
  %v331 = vunpack.c.l.b16 %v291
  %v332 = vunpack.c.l.b16 %v292
  %v333 = vunpack.c.l.b16 %v293
  %v334 = vunpack.c.l.b16 %v294
  %v335 = vunpack.c.l.b16 %v295
  %v336 = vunpack.c.l.b16 %v296
  %v337 = vunpack.c.l.b16 %v297
  %v338 = vpack.c.b16 %v323, %v322
  %v339 = vpack.c.b16 %v325, %v324
  %v340 = vpack.c.b16 %v327, %v326
  %v341 = vpack.c.b16 %v329, %v328
  %v342 = vpack.c.b16 %v331, %v330
  %v343 = vpack.c.b16 %v333, %v332
  %v344 = vpack.c.b16 %v335, %v334
  %v345 = vpack.c.b16 %v337, %v336
  %354 = vmatprep.subr.bf16.mxu0 0
  %355 = vmatpush1.bf16.msra.mxu0 %v298
  %356 = vmatprep.subr.bf16.mxu0 0
  %357 = vmatpush1.bf16.msra.mxu0 %v299
  %358 = vmatprep.subr.bf16.mxu0 0
  %359 = vmatpush1.bf16.msra.mxu0 %v300
  %360 = vmatprep.subr.bf16.mxu0 0
  %361 = vmatpush1.bf16.msra.mxu0 %v301
  %362 = vmatprep.subr.bf16.mxu0 0
  %363 = vmatpush1.bf16.msra.mxu0 %v302
  %364 = vmatprep.subr.bf16.mxu0 0
  %365 = vmatpush1.bf16.msra.mxu0 %v303
  %366 = vmatprep.subr.bf16.mxu0 0
  %367 = vmatpush1.bf16.msra.mxu0 %v304
  %368 = vmatprep.subr.bf16.mxu0 0
  %369 = vmatpush1.bf16.msra.mxu0 %v305
  %370 = vmatprep.subr.bf16.mxu0 0
  %371 = vmatpush1.bf16.msra.mxu0 0
  %372 = vmatprep.subr.bf16.mxu0 0
  %373 = vmatpush1.bf16.msra.mxu0 0
  %374 = vmatprep.subr.bf16.mxu0 0
  %375 = vmatpush1.bf16.msra.mxu0 0
  %376 = vmatprep.subr.bf16.mxu0 0
  %377 = vmatpush1.bf16.msra.mxu0 0
  %378 = vmatprep.subr.bf16.mxu0 0
  %379 = vmatpush1.bf16.msra.mxu0 0
  %380 = vmatprep.subr.bf16.mxu0 0
  %381 = vmatpush1.bf16.msra.mxu0 0
  %382 = vmatprep.subr.bf16.mxu0 0
  %383 = vmatpush1.bf16.msra.mxu0 0
  %384 = vmatprep.subr.bf16.mxu0 0
  %385 = vmatpush1.bf16.msra.mxu0 0
  %386 = vmatprep.mubr.bf16.mxu0 0
  %387 = vmatmul.mubr.bf16.gmra.mrb[0].mxu0 %v338
  %v388 = vpop.f32.mrb[0].mxu0
  %v389 = vadd.f32 0.0, %v388
  %v390 = vpop.f32.mrb[0].mxu0
  %v391 = vpop.f32.mrb[0].mxu0
  %v392 = vadd.f32 0.0, %v391
  %v393 = vpop.f32.mrb[0].mxu0
  %394 = vmatprep.mubr.bf16.mxu0 0
  %395 = vmatmul.mubr.bf16.gmra.mrb[0].mxu0 %v339
  %v396 = vpop.f32.mrb[0].mxu0
  %v397 = vadd.f32 0.0, %v396
  %v398 = vpop.f32.mrb[0].mxu0
  %v399 = vpop.f32.mrb[0].mxu0
  %v400 = vadd.f32 0.0, %v399
  %v401 = vpop.f32.mrb[0].mxu0
  %402 = vmatprep.mubr.bf16.mxu0 0
  %403 = vmatmul.mubr.bf16.gmra.mrb[0].mxu0 %v340
  %v404 = vpop.f32.mrb[0].mxu0
  %v405 = vadd.f32 0.0, %v404
  %v406 = vpop.f32.mrb[0].mxu0
  %v407 = vpop.f32.mrb[0].mxu0
  %v408 = vadd.f32 0.0, %v407
  %v409 = vpop.f32.mrb[0].mxu0
  %410 = vmatprep.mubr.bf16.mxu0 0
  %411 = vmatmul.mubr.bf16.gmra.mrb[0].mxu0 %v341
  %v412 = vpop.f32.mrb[0].mxu0
  %v413 = vadd.f32 0.0, %v412
  %v414 = vpop.f32.mrb[0].mxu0
  %v415 = vpop.f32.mrb[0].mxu0
  %v416 = vadd.f32 0.0, %v415
  %v417 = vpop.f32.mrb[0].mxu0
  %418 = vmatprep.mubr.bf16.mxu0 0
  %419 = vmatmul.mubr.bf16.gmra.mrb[0].mxu0 %v342
  %v420 = vpop.f32.mrb[0].mxu0
  %v421 = vadd.f32 0.0, %v420
  %v422 = vpop.f32.mrb[0].mxu0
  %v423 = vpop.f32.mrb[0].mxu0
  %v424 = vadd.f32 0.0, %v423
  %v425 = vpop.f32.mrb[0].mxu0
  %426 = vmatprep.mubr.bf16.mxu0 0
  %427 = vmatmul.mubr.bf16.gmra.mrb[0].mxu0 %v343
  %v428 = vpop.f32.mrb[0].mxu0
  %v429 = vadd.f32 0.0, %v428
  %v430 = vpop.f32.mrb[0].mxu0
  %v431 = vpop.f32.mrb[0].mxu0
  %v432 = vadd.f32 0.0, %v431
  %v433 = vpop.f32.mrb[0].mxu0
  %434 = vmatprep.mubr.bf16.mxu0 0
  %435 = vmatmul.mubr.bf16.gmra.mrb[0].mxu0 %v344
  %v436 = vpop.f32.mrb[0].mxu0
  %v437 = vadd.f32 0.0, %v436
  %v438 = vpop.f32.mrb[0].mxu0
  %v439 = vpop.f32.mrb[0].mxu0
  %v440 = vadd.f32 0.0, %v439
  %v441 = vpop.f32.mrb[0].mxu0
  %442 = vmatprep.mubr.bf16.mxu0 0
  %443 = vmatmul.mubr.bf16.gmra.mrb[0].mxu0 %v345
  %v444 = vpop.f32.mrb[0].mxu0
  %v445 = vadd.f32 0.0, %v444
  %v446 = vpop.f32.mrb[0].mxu0
  %v447 = vpop.f32.mrb[0].mxu0
  %v448 = vadd.f32 0.0, %v447
  %v449 = vpop.f32.mrb[0].mxu0
  %450 = vdwg.mxu0
  %v451 = vadd.f32 %v266, %v389
  %v452 = vadd.f32 %v267, %v392
  %v453 = vadd.f32 %v268, %v397
  %v454 = vadd.f32 %v269, %v400
  %v455 = vadd.f32 %v270, %v405
  %v456 = vadd.f32 %v271, %v408
  %v457 = vadd.f32 %v272, %v413
  %v458 = vadd.f32 %v273, %v416
  %v459 = vadd.f32 %v274, %v421
  %v460 = vadd.f32 %v275, %v424
  %v461 = vadd.f32 %v276, %v429
  %v462 = vadd.f32 %v277, %v432
  %v463 = vadd.f32 %v278, %v437
  %v464 = vadd.f32 %v279, %v440
  %v465 = vadd.f32 %v280, %v445
  %v466 = vadd.f32 %v281, %v448
  %467 = vst [vmem:[#allocation2] sm:$0xff] %v451
  %468 = vst [vmem:[#allocation2 + $0x8] sm:$0xff] %v452
  %469 = vst [vmem:[#allocation2 + $0x10] sm:$0xff] %v453
  %470 = vst [vmem:[#allocation2 + $0x18] sm:$0xff] %v454
  %471 = vst [vmem:[#allocation2 + $0x20] sm:$0xff] %v455
  %472 = vst [vmem:[#allocation2 + $0x28] sm:$0xff] %v456
  %473 = vst [vmem:[#allocation2 + $0x30] sm:$0xff] %v457
  %474 = vst [vmem:[#allocation2 + $0x38] sm:$0xff] %v458
  %475 = vst [vmem:[#allocation2 + $0x40] sm:$0xff] %v459
  %476 = vst [vmem:[#allocation2 + $0x48] sm:$0xff] %v460
  %477 = vst [vmem:[#allocation2 + $0x50] sm:$0xff] %v461
  %478 = vst [vmem:[#allocation2 + $0x58] sm:$0xff] %v462
  %479 = vst [vmem:[#allocation2 + $0x60] sm:$0xff] %v463
  %480 = vst [vmem:[#allocation2 + $0x68] sm:$0xff] %v464
  %481 = vst [vmem:[#allocation2 + $0x70] sm:$0xff] %v465
  %482 = vst [vmem:[#allocation2 + $0x78] sm:$0xff] %v466
  // Predicated region
  $region26: #{hicfl_forward.8} parent=0 // pred_check
    %p483 = pneg %p21
  $region27: #{hicfl_forward.8} parent=0 // pred_check_branch
    %485 = sbr.rel (%p483) target = $region29
  $region28: #{hicfl_forward.8} parent=0 // pred_region
    %v486 = vld [vmem:[#allocation2] sm:$0xff]
    %v487 = vld [vmem:[#allocation2 + $0x8] sm:$0xff]
    %v488 = vld [vmem:[#allocation2 + $0x10] sm:$0xff]
    %v489 = vld [vmem:[#allocation2 + $0x18] sm:$0xff]
    %v490 = vld [vmem:[#allocation2 + $0x20] sm:$0xff]
    %v491 = vld [vmem:[#allocation2 + $0x28] sm:$0xff]
    %v492 = vld [vmem:[#allocation2 + $0x30] sm:$0xff]
    %v493 = vld [vmem:[#allocation2 + $0x38] sm:$0xff]
    %v494 = vld [vmem:[#allocation2 + $0x40] sm:$0xff]
    %v495 = vld [vmem:[#allocation2 + $0x48] sm:$0xff]
    %v496 = vld [vmem:[#allocation2 + $0x50] sm:$0xff]
    %v497 = vld [vmem:[#allocation2 + $0x58] sm:$0xff]
    %v498 = vld [vmem:[#allocation2 + $0x60] sm:$0xff]
    %v499 = vld [vmem:[#allocation2 + $0x68] sm:$0xff]
    %v500 = vld [vmem:[#allocation2 + $0x70] sm:$0xff]
    %v501 = vld [vmem:[#allocation2 + $0x78] sm:$0xff]
    %v502 = vld [vmem:[%s3] sm:$0x1]
    %v504 = vlaneseq
    %v505 = vshrl.u32 %v504, 7
    %v506 = vsub.s32 0, %v505
    %v507 = vrot.slane %v502, %v506
    %v509 = vmul.f32 %v486, %v507
    %v510 = vmul.f32 %v487, %v507
    %v511 = vmul.f32 %v488, %v507
    %v512 = vmul.f32 %v489, %v507
    %v513 = vmul.f32 %v490, %v507
    %v514 = vmul.f32 %v491, %v507
    %v515 = vmul.f32 %v492, %v507
    %v516 = vmul.f32 %v493, %v507
    %v517 = vmul.f32 %v494, %v507
    %v518 = vmul.f32 %v495, %v507
    %v519 = vmul.f32 %v496, %v507
    %v520 = vmul.f32 %v497, %v507
    %v521 = vmul.f32 %v498, %v507
    %v522 = vmul.f32 %v499, %v507
    %v523 = vmul.f32 %v500, %v507
    %v524 = vmul.f32 %v501, %v507
    %v525 = vld [vmem:[%s4] sm:$0x1]
    %v527 = vlaneseq
    %v528 = vshrl.u32 %v527, 7
    %v529 = vsub.s32 0, %v528
    %v530 = vrot.slane %v525, %v529
    %v532 = vadd.f32 %v509, %v530
    %v533 = vadd.f32 %v510, %v530
    %v534 = vadd.f32 %v511, %v530
    %v535 = vadd.f32 %v512, %v530
    %v536 = vadd.f32 %v513, %v530
    %v537 = vadd.f32 %v514, %v530
    %v538 = vadd.f32 %v515, %v530
    %v539 = vadd.f32 %v516, %v530
    %v540 = vadd.f32 %v517, %v530
    %v541 = vadd.f32 %v518, %v530
    %v542 = vadd.f32 %v519, %v530
    %v543 = vadd.f32 %v520, %v530
    %v544 = vadd.f32 %v521, %v530
    %v545 = vadd.f32 %v522, %v530
    %v546 = vadd.f32 %v523, %v530
    %v547 = vadd.f32 %v524, %v530
    %v548 = vmax.f32 %v532, 0.0
    %v549 = vmax.f32 %v533, 0.0
    %v550 = vmax.f32 %v534, 0.0
    %v551 = vmax.f32 %v535, 0.0
    %v552 = vmax.f32 %v536, 0.0
    %v553 = vmax.f32 %v537, 0.0
    %v554 = vmax.f32 %v538, 0.0
    %v555 = vmax.f32 %v539, 0.0
    %v556 = vmax.f32 %v540, 0.0
    %v557 = vmax.f32 %v541, 0.0
    %v558 = vmax.f32 %v542, 0.0
    %v559 = vmax.f32 %v543, 0.0
    %v560 = vmax.f32 %v544, 0.0
    %v561 = vmax.f32 %v545, 0.0
    %v562 = vmax.f32 %v546, 0.0
    %v563 = vmax.f32 %v547, 0.0
    %v564 = vpack.c.bf16 %v549, %v548
    %v565 = vpack.c.bf16 %v551, %v550
    %v566 = vpack.c.bf16 %v553, %v552
    %v567 = vpack.c.bf16 %v555, %v554
    %v568 = vpack.c.bf16 %v557, %v556
    %v569 = vpack.c.bf16 %v559, %v558
    %v570 = vpack.c.bf16 %v561, %v560
    %v571 = vpack.c.bf16 %v563, %v562
    %v580 = vunpack.c.l.b16 %v564
    %v581 = vunpack.c.h.b16 %v564
    %v582 = vunpack.c.l.b16 %v565
    %v583 = vunpack.c.h.b16 %v565
    %v584 = vunpack.c.l.b16 %v566
    %v585 = vunpack.c.h.b16 %v566
    %v586 = vunpack.c.l.b16 %v567
    %v587 = vunpack.c.h.b16 %v567
    %v588 = vunpack.c.l.b16 %v568
    %v589 = vunpack.c.h.b16 %v568
    %v590 = vunpack.c.l.b16 %v569
    %v591 = vunpack.c.h.b16 %v569
    %v592 = vunpack.c.l.b16 %v570
    %v593 = vunpack.c.h.b16 %v570
    %v594 = vunpack.c.l.b16 %v571
    %v595 = vunpack.c.h.b16 %v571
    %v596 = vpack.c.b16 %v580, %v580
    %v597 = vpack.c.b16 %v581, %v581
    %v598 = vpack.c.b16 %v582, %v582
    %v599 = vpack.c.b16 %v583, %v583
    %v600 = vpack.c.b16 %v584, %v584
    %v601 = vpack.c.b16 %v585, %v585
    %v602 = vpack.c.b16 %v586, %v586
    %v603 = vpack.c.b16 %v587, %v587
    %v604 = vpack.c.b16 %v588, %v588
    %v605 = vpack.c.b16 %v589, %v589
    %v606 = vpack.c.b16 %v590, %v590
    %v607 = vpack.c.b16 %v591, %v591
    %v608 = vpack.c.b16 %v592, %v592
    %v609 = vpack.c.b16 %v593, %v593
    %v610 = vpack.c.b16 %v594, %v594
    %v611 = vpack.c.b16 %v595, %v595
    %628 = vst [vmem:[%s5] sm:$0xf] %v596
    %629 = vst [vmem:[%s5 + $0x4] sm:$0xf] %v597
    %630 = vst [vmem:[%s5 + $0x8] sm:$0xf] %v598
    %631 = vst [vmem:[%s5 + $0xc] sm:$0xf] %v599
    %632 = vst [vmem:[%s5 + $0x10] sm:$0xf] %v600
    %633 = vst [vmem:[%s5 + $0x14] sm:$0xf] %v601
    %634 = vst [vmem:[%s5 + $0x18] sm:$0xf] %v602
    %635 = vst [vmem:[%s5 + $0x1c] sm:$0xf] %v603
    %636 = vst [vmem:[%s5 + $0x20] sm:$0xf] %v604
    %637 = vst [vmem:[%s5 + $0x24] sm:$0xf] %v605
    %638 = vst [vmem:[%s5 + $0x28] sm:$0xf] %v606
    %639 = vst [vmem:[%s5 + $0x2c] sm:$0xf] %v607
    %640 = vst [vmem:[%s5 + $0x30] sm:$0xf] %v608
    %641 = vst [vmem:[%s5 + $0x34] sm:$0xf] %v609
    %642 = vst [vmem:[%s5 + $0x38] sm:$0xf] %v610
    %643 = vst [vmem:[%s5 + $0x3c] sm:$0xf] %v611
  $region29: #{hicfl_forward.8} parent=0 // pred_fallthru
    _
  // Predicated region
  $region30: #{hicfl_forward.8} parent=0 // pred_check
    _
  $region31: #{hicfl_forward.8} parent=0 // pred_check_branch
    %645 = sbr.rel (0) target = $region33
  $region32: #{hicfl_forward.8} parent=0 // pred_region
    _
  $region33: #{hicfl_forward.8} parent=0 // pred_fallthru
    _
  // Predicated region
  $region34: #{hicfl_forward.8} parent=0 // pred_check
    _
  $region35: #{hicfl_forward.8} parent=0 // pred_check_branch
    %647 = sbr.rel (0) target = $region37
  $region36: #{hicfl_forward.8} parent=0 // pred_region
    _
  $region37: #{hicfl_forward.8} parent=0 // pred_fallthru
    _

// kernel: hicfl_forward.9
$region0: #{hicfl_forward.9}
  #allocation0 [shape = 'u32[]', space=smem, size = 0x4, offset = 0x4, fixed_abs, tag = 'smem constant byte address 0x4 - core index']
  #allocation1 [shape = 'u32[144,128]{1,0:T(1,128)}', space=vmem, size = 0x12000, scoped, tag = 'internal scratch']
  %s0 = inlined_call_operand.smem [shape: u32[33], index: -1, kind: input, shape index: {}]
  %s1 = sld [smem:[%s0]]
  %s2 = scalar_lea.smem %s0, 1
  %s3 = sld [smem:[%s2]]
  %s4 = scalar_lea.smem %s0, 2
  %s5 = sld [smem:[%s4]]
  %s6 = scalar_lea.smem %s0, 3
  %s7 = sld [smem:[%s6]]
  %s8 = scalar_lea.smem %s0, 4
  %s9 = sld [smem:[%s8]]
  %s10 = scalar_lea.smem %s0, 5
  %s11 = sld [smem:[%s10]]
  %s12 = scalar_lea.smem %s0, 6
  %s13 = sld [smem:[%s12]]
  %s14 = scalar_lea.smem %s0, 7
  %s15 = sld [smem:[%s14]]
  %s16 = scalar_lea.smem %s0, 8
  %s17 = sld [smem:[%s16]]
  %s18 = scalar_lea.smem %s0, 9
  %s19 = sld [smem:[%s18]]
  %s20 = scalar_lea.smem %s0, 10
  %s21 = sld [smem:[%s20]]
  %s22 = scalar_lea.smem %s0, 11
  %s23 = sld [smem:[%s22]]
  %s24 = scalar_lea.smem %s0, 12
  %s25 = sld [smem:[%s24]]
  %s26 = scalar_lea.smem %s0, 13
  %s27 = sld [smem:[%s26]]
  %s28 = scalar_lea.smem %s0, 14
  %s29 = sld [smem:[%s28]]
  %s30 = scalar_lea.smem %s0, 15
  %s31 = sld [smem:[%s30]]
  %s32 = scalar_lea.smem %s0, 16
  %s33 = sld [smem:[%s32]]
  %s34 = scalar_lea.smem %s0, 17
  %s35 = sld [smem:[%s34]]
  %s36 = scalar_lea.smem %s0, 18
  %s37 = sld [smem:[%s36]]
  %s38 = scalar_lea.smem %s0, 19
  %s39 = sld [smem:[%s38]]
  %s40 = scalar_lea.smem %s0, 20
  %s41 = sld [smem:[%s40]]
  %s42 = scalar_lea.smem %s0, 21
  %s43 = sld [smem:[%s42]]
  %s44 = scalar_lea.smem %s0, 22
  %s45 = sld [smem:[%s44]]
  %s46 = scalar_lea.smem %s0, 23
  %s47 = sld [smem:[%s46]]
  %s48 = scalar_lea.smem %s0, 24
  %s49 = sld [smem:[%s48]]
  %s50 = scalar_lea.smem %s0, 25
  %s51 = sld [smem:[%s50]]
  %s52 = scalar_lea.smem %s0, 26
  %s53 = sld [smem:[%s52]]
  %s54 = scalar_lea.smem %s0, 27
  %s55 = sld [smem:[%s54]]
  %s56 = scalar_lea.smem %s0, 28
  %s57 = sld [smem:[%s56]]
  %s58 = scalar_lea.smem %s0, 29
  %s59 = sld [smem:[%s58]]
  %s60 = scalar_lea.smem %s0, 30
  %s61 = sld [smem:[%s60]]
  %s62 = scalar_lea.smem %s0, 31
  %s63 = sld [smem:[%s62]]
  %s64 = scalar_lea.smem %s0, 32
  %s65 = sld [smem:[%s64]]
  %66 = xla_tuple %s59, %s61, %s63, %s65
  %s67 = sld [smem:[#allocation0]]
  $region150: #{hicfl_forward.9} parent=0
    _
  %s69 = ssub.s32 1, %s67
  %s70 = scalar_select 0, %s69, %s67
  // Predicated region
  $region2: #{hicfl_forward.9} parent=0 // pred_check
    _
  $region3: #{hicfl_forward.9} parent=0 // pred_check_branch
    %72 = sbr.rel (0) target = $region5
  $region4: #{hicfl_forward.9} parent=0 // pred_region
    _
  $region5: #{hicfl_forward.9} parent=0 // pred_fallthru
    _
  // Predicated region
  $region6: #{hicfl_forward.9} parent=0 // pred_check
    _
  $region7: #{hicfl_forward.9} parent=0 // pred_check_branch
    %74 = sbr.rel (0) target = $region9
  $region8: #{hicfl_forward.9} parent=0 // pred_region
    _
  $region9: #{hicfl_forward.9} parent=0 // pred_fallthru
    _
  // Predicated region
  $region10: #{hicfl_forward.9} parent=0 // pred_check
    _
  $region11: #{hicfl_forward.9} parent=0 // pred_check_branch
    %76 = sbr.rel (0) target = $region13
  $region12: #{hicfl_forward.9} parent=0 // pred_region
    _
  $region13: #{hicfl_forward.9} parent=0 // pred_fallthru
    _
  // Predicated region
  $region14: #{hicfl_forward.9} parent=0 // pred_check
    _
  $region15: #{hicfl_forward.9} parent=0 // pred_check_branch
    %78 = sbr.rel (0) target = $region17
  $region16: #{hicfl_forward.9} parent=0 // pred_region
    _
  $region17: #{hicfl_forward.9} parent=0 // pred_fallthru
    _
  // Predicated region
  $region18: #{hicfl_forward.9} parent=0 // pred_check
    _
  $region19: #{hicfl_forward.9} parent=0 // pred_check_branch
    %80 = sbr.rel (0) target = $region21
  $region20: #{hicfl_forward.9} parent=0 // pred_region
    _
  $region21: #{hicfl_forward.9} parent=0 // pred_fallthru
    _
  // Predicated region
  $region22: #{hicfl_forward.9} parent=0 // pred_check
    _
  $region23: #{hicfl_forward.9} parent=0 // pred_check_branch
    %82 = sbr.rel (0) target = $region25
  $region24: #{hicfl_forward.9} parent=0 // pred_region
    _
  $region25: #{hicfl_forward.9} parent=0 // pred_fallthru
    _
  // Predicated region
  $region26: #{hicfl_forward.9} parent=0 // pred_check
    _
  $region27: #{hicfl_forward.9} parent=0 // pred_check_branch
    %84 = sbr.rel (0) target = $region29
  $region28: #{hicfl_forward.9} parent=0 // pred_region
    _
  $region29: #{hicfl_forward.9} parent=0 // pred_fallthru
    _
  // Predicated region
  $region30: #{hicfl_forward.9} parent=0 // pred_check
    _
  $region31: #{hicfl_forward.9} parent=0 // pred_check_branch
    %86 = sbr.rel (0) target = $region33
  $region32: #{hicfl_forward.9} parent=0 // pred_region
    _
  $region33: #{hicfl_forward.9} parent=0 // pred_fallthru
    _
  // Predicated region
  $region34: #{hicfl_forward.9} parent=0 // pred_check
    _
  $region35: #{hicfl_forward.9} parent=0 // pred_check_branch
    %88 = sbr.rel (0) target = $region37
  $region36: #{hicfl_forward.9} parent=0 // pred_region
    _
  $region37: #{hicfl_forward.9} parent=0 // pred_fallthru
    _
  // Predicated region
  $region38: #{hicfl_forward.9} parent=0 // pred_check
    _
  $region39: #{hicfl_forward.9} parent=0 // pred_check_branch
    %90 = sbr.rel (0) target = $region41
  $region40: #{hicfl_forward.9} parent=0 // pred_region
    _
  $region41: #{hicfl_forward.9} parent=0 // pred_fallthru
    _
  // Predicated region
  $region42: #{hicfl_forward.9} parent=0 // pred_check
    _
  $region43: #{hicfl_forward.9} parent=0 // pred_check_branch
    %92 = sbr.rel (0) target = $region45
  $region44: #{hicfl_forward.9} parent=0 // pred_region
    _
  $region45: #{hicfl_forward.9} parent=0 // pred_fallthru
    _
  // Predicated region
  $region46: #{hicfl_forward.9} parent=0 // pred_check
    _
  $region47: #{hicfl_forward.9} parent=0 // pred_check_branch
    %94 = sbr.rel (0) target = $region49
  $region48: #{hicfl_forward.9} parent=0 // pred_region
    _
  $region49: #{hicfl_forward.9} parent=0 // pred_fallthru
    _
  // Predicated region
  $region50: #{hicfl_forward.9} parent=0 // pred_check
    _
  $region51: #{hicfl_forward.9} parent=0 // pred_check_branch
    %96 = sbr.rel (0) target = $region53
  $region52: #{hicfl_forward.9} parent=0 // pred_region
    _
  $region53: #{hicfl_forward.9} parent=0 // pred_fallthru
    _
  // Predicated region
  $region54: #{hicfl_forward.9} parent=0 // pred_check
    _
  $region55: #{hicfl_forward.9} parent=0 // pred_check_branch
    %98 = sbr.rel (0) target = $region57
  $region56: #{hicfl_forward.9} parent=0 // pred_region
    _
  $region57: #{hicfl_forward.9} parent=0 // pred_fallthru
    _
  // Predicated region
  $region58: #{hicfl_forward.9} parent=0 // pred_check
    _
  $region59: #{hicfl_forward.9} parent=0 // pred_check_branch
    %100 = sbr.rel (0) target = $region61
  $region60: #{hicfl_forward.9} parent=0 // pred_region
    _
  $region61: #{hicfl_forward.9} parent=0 // pred_fallthru
    _
  // Predicated region
  $region62: #{hicfl_forward.9} parent=0 // pred_check
    _
  $region63: #{hicfl_forward.9} parent=0 // pred_check_branch
    %102 = sbr.rel (0) target = $region65
  $region64: #{hicfl_forward.9} parent=0 // pred_region
    _
  $region65: #{hicfl_forward.9} parent=0 // pred_fallthru
    _
  // Predicated region
  $region66: #{hicfl_forward.9} parent=0 // pred_check
    _
  $region67: #{hicfl_forward.9} parent=0 // pred_check_branch
    %104 = sbr.rel (0) target = $region69
  $region68: #{hicfl_forward.9} parent=0 // pred_region
    _
  $region69: #{hicfl_forward.9} parent=0 // pred_fallthru
    _
  // Predicated region
  $region70: #{hicfl_forward.9} parent=0 // pred_check
    _
  $region71: #{hicfl_forward.9} parent=0 // pred_check_branch
    %106 = sbr.rel (0) target = $region73
  $region72: #{hicfl_forward.9} parent=0 // pred_region
    _
  $region73: #{hicfl_forward.9} parent=0 // pred_fallthru
    _
  // Predicated region
  $region74: #{hicfl_forward.9} parent=0 // pred_check
    _
  $region75: #{hicfl_forward.9} parent=0 // pred_check_branch
    %108 = sbr.rel (0) target = $region77
  $region76: #{hicfl_forward.9} parent=0 // pred_region
    _
  $region77: #{hicfl_forward.9} parent=0 // pred_fallthru
    _
  // Predicated region
  $region78: #{hicfl_forward.9} parent=0 // pred_check
    _
  $region79: #{hicfl_forward.9} parent=0 // pred_check_branch
    %110 = sbr.rel (0) target = $region81
  $region80: #{hicfl_forward.9} parent=0 // pred_region
    _
  $region81: #{hicfl_forward.9} parent=0 // pred_fallthru
    _
  // Predicated region
  $region82: #{hicfl_forward.9} parent=0 // pred_check
    _
  $region83: #{hicfl_forward.9} parent=0 // pred_check_branch
    %112 = sbr.rel (0) target = $region85
  $region84: #{hicfl_forward.9} parent=0 // pred_region
    _
  $region85: #{hicfl_forward.9} parent=0 // pred_fallthru
    _
  // Predicated region
  $region86: #{hicfl_forward.9} parent=0 // pred_check
    _
  $region87: #{hicfl_forward.9} parent=0 // pred_check_branch
    %114 = sbr.rel (0) target = $region89
  $region88: #{hicfl_forward.9} parent=0 // pred_region
    _
  $region89: #{hicfl_forward.9} parent=0 // pred_fallthru
    _
  // Predicated region
  $region90: #{hicfl_forward.9} parent=0 // pred_check
    _
  $region91: #{hicfl_forward.9} parent=0 // pred_check_branch
    %116 = sbr.rel (0) target = $region93
  $region92: #{hicfl_forward.9} parent=0 // pred_region
    _
  $region93: #{hicfl_forward.9} parent=0 // pred_fallthru
    _
  // Predicated region
  $region94: #{hicfl_forward.9} parent=0 // pred_check
    _
  $region95: #{hicfl_forward.9} parent=0 // pred_check_branch
    %118 = sbr.rel (0) target = $region97
  $region96: #{hicfl_forward.9} parent=0 // pred_region
    _
  $region97: #{hicfl_forward.9} parent=0 // pred_fallthru
    _
  // Predicated region
  $region98: #{hicfl_forward.9} parent=0 // pred_check
    _
  $region99: #{hicfl_forward.9} parent=0 // pred_check_branch
    %120 = sbr.rel (0) target = $region101
  $region100: #{hicfl_forward.9} parent=0 // pred_region
    _
  $region101: #{hicfl_forward.9} parent=0 // pred_fallthru
    _
  // Predicated region
  $region102: #{hicfl_forward.9} parent=0 // pred_check
    _
  $region103: #{hicfl_forward.9} parent=0 // pred_check_branch
    %122 = sbr.rel (0) target = $region105
  $region104: #{hicfl_forward.9} parent=0 // pred_region
    _
  $region105: #{hicfl_forward.9} parent=0 // pred_fallthru
    _
  // Predicated region
  $region106: #{hicfl_forward.9} parent=0 // pred_check
    _
  $region107: #{hicfl_forward.9} parent=0 // pred_check_branch
    %124 = sbr.rel (0) target = $region109
  $region108: #{hicfl_forward.9} parent=0 // pred_region
    _
  $region109: #{hicfl_forward.9} parent=0 // pred_fallthru
    _
  // Predicated region
  $region110: #{hicfl_forward.9} parent=0 // pred_check
    _
  $region111: #{hicfl_forward.9} parent=0 // pred_check_branch
    %126 = sbr.rel (0) target = $region113
  $region112: #{hicfl_forward.9} parent=0 // pred_region
    _
  $region113: #{hicfl_forward.9} parent=0 // pred_fallthru
    _
  // Predicated region
  $region114: #{hicfl_forward.9} parent=0 // pred_check
    _
  $region115: #{hicfl_forward.9} parent=0 // pred_check_branch
    %128 = sbr.rel (0) target = $region117
  $region116: #{hicfl_forward.9} parent=0 // pred_region
    _
  $region117: #{hicfl_forward.9} parent=0 // pred_fallthru
    _
  %v130 = vld [vmem:[%s1] sm:$0xf]
  %v131 = vld [vmem:[%s1 + $0x4] sm:$0xf]
  %v132 = vld [vmem:[%s1 + $0x8] sm:$0xf]
  %v133 = vld [vmem:[%s1 + $0xc] sm:$0xf]
  %v134 = vld [vmem:[%s1 + $0x10] sm:$0xf]
  %v135 = vld [vmem:[%s1 + $0x14] sm:$0xf]
  %v136 = vld [vmem:[%s1 + $0x18] sm:$0xf]
  %v137 = vld [vmem:[%s1 + $0x1c] sm:$0xf]
  %v138 = vld [vmem:[%s1 + $0x20] sm:$0xf]
  %v139 = vld [vmem:[%s1 + $0x24] sm:$0xf]
  %v140 = vld [vmem:[%s1 + $0x28] sm:$0xf]
  %v141 = vld [vmem:[%s1 + $0x2c] sm:$0xf]
  %v142 = vld [vmem:[%s1 + $0x30] sm:$0xf]
  %v143 = vld [vmem:[%s1 + $0x34] sm:$0xf]
  %v144 = vld [vmem:[%s1 + $0x38] sm:$0xf]
  %v145 = vld [vmem:[%s1 + $0x3c] sm:$0xf]
  %v146 = vld [vmem:[%s3] sm:$0xf]
  %v147 = vld [vmem:[%s3 + $0x4] sm:$0xf]
  %v148 = vld [vmem:[%s3 + $0x8] sm:$0xf]
  %v149 = vld [vmem:[%s3 + $0xc] sm:$0xf]
  %v150 = vld [vmem:[%s3 + $0x10] sm:$0xf]
  %v151 = vld [vmem:[%s3 + $0x14] sm:$0xf]
  %v152 = vld [vmem:[%s3 + $0x18] sm:$0xf]
  %v153 = vld [vmem:[%s3 + $0x1c] sm:$0xf]
  %v154 = vld [vmem:[%s3 + $0x20] sm:$0xf]
  %v155 = vld [vmem:[%s3 + $0x24] sm:$0xf]
  %v156 = vld [vmem:[%s3 + $0x28] sm:$0xf]
  %v157 = vld [vmem:[%s3 + $0x2c] sm:$0xf]
  %v158 = vld [vmem:[%s3 + $0x30] sm:$0xf]
  %v159 = vld [vmem:[%s3 + $0x34] sm:$0xf]
  %v160 = vld [vmem:[%s3 + $0x38] sm:$0xf]
  %v161 = vld [vmem:[%s3 + $0x3c] sm:$0xf]
  %v178 = vunpack.c.l.b16 %v130
  %v179 = vunpack.c.l.b16 %v131
  %v180 = vunpack.c.l.b16 %v132
  %v181 = vunpack.c.l.b16 %v133
  %v182 = vunpack.c.l.b16 %v134
  %v183 = vunpack.c.l.b16 %v135
  %v184 = vunpack.c.l.b16 %v136
  %v185 = vunpack.c.l.b16 %v137
  %v186 = vunpack.c.l.b16 %v138
  %v187 = vunpack.c.l.b16 %v139
  %v188 = vunpack.c.l.b16 %v140
  %v189 = vunpack.c.l.b16 %v141
  %v190 = vunpack.c.l.b16 %v142
  %v191 = vunpack.c.l.b16 %v143
  %v192 = vunpack.c.l.b16 %v144
  %v193 = vunpack.c.l.b16 %v145
  %v194 = vpack.c.b16 %v179, %v178
  %v195 = vpack.c.b16 %v181, %v180
  %v196 = vpack.c.b16 %v183, %v182
  %v197 = vpack.c.b16 %v185, %v184
  %v198 = vpack.c.b16 %v187, %v186
  %v199 = vpack.c.b16 %v189, %v188
  %v200 = vpack.c.b16 %v191, %v190
  %v201 = vpack.c.b16 %v193, %v192
  %v226 = vunpack.c.l.b16 %v146
  %v227 = vunpack.c.l.b16 %v147
  %v228 = vunpack.c.l.b16 %v148
  %v229 = vunpack.c.l.b16 %v149
  %v230 = vunpack.c.l.b16 %v150
  %v231 = vunpack.c.l.b16 %v151
  %v232 = vunpack.c.l.b16 %v152
  %v233 = vunpack.c.l.b16 %v153
  %v234 = vunpack.c.l.b16 %v154
  %v235 = vunpack.c.l.b16 %v155
  %v236 = vunpack.c.l.b16 %v156
  %v237 = vunpack.c.l.b16 %v157
  %v238 = vunpack.c.l.b16 %v158
  %v239 = vunpack.c.l.b16 %v159
  %v240 = vunpack.c.l.b16 %v160
  %v241 = vunpack.c.l.b16 %v161
  %v242 = vpack.c.b16 %v227, %v226
  %v243 = vpack.c.b16 %v229, %v228
  %v244 = vpack.c.b16 %v231, %v230
  %v245 = vpack.c.b16 %v233, %v232
  %v246 = vpack.c.b16 %v235, %v234
  %v247 = vpack.c.b16 %v237, %v236
  %v248 = vpack.c.b16 %v239, %v238
  %v249 = vpack.c.b16 %v241, %v240
  %258 = vmatprep.subr.bf16.mxu0 0
  %259 = vmatpush1.bf16.msra.mxu0 %v242
  %260 = vmatprep.subr.bf16.mxu0 0
  %261 = vmatpush1.bf16.msra.mxu0 %v243
  %262 = vmatprep.subr.bf16.mxu0 0
  %263 = vmatpush1.bf16.msra.mxu0 %v244
  %264 = vmatprep.subr.bf16.mxu0 0
  %265 = vmatpush1.bf16.msra.mxu0 %v245
  %266 = vmatprep.subr.bf16.mxu0 0
  %267 = vmatpush1.bf16.msra.mxu0 %v246
  %268 = vmatprep.subr.bf16.mxu0 0
  %269 = vmatpush1.bf16.msra.mxu0 %v247
  %270 = vmatprep.subr.bf16.mxu0 0
  %271 = vmatpush1.bf16.msra.mxu0 %v248
  %272 = vmatprep.subr.bf16.mxu0 0
  %273 = vmatpush1.bf16.msra.mxu0 %v249
  %274 = vmatprep.subr.bf16.mxu0 0
  %275 = vmatpush1.bf16.msra.mxu0 0
  %276 = vmatprep.subr.bf16.mxu0 0
  %277 = vmatpush1.bf16.msra.mxu0 0
  %278 = vmatprep.subr.bf16.mxu0 0
  %279 = vmatpush1.bf16.msra.mxu0 0
  %280 = vmatprep.subr.bf16.mxu0 0
  %281 = vmatpush1.bf16.msra.mxu0 0
  %282 = vmatprep.subr.bf16.mxu0 0
  %283 = vmatpush1.bf16.msra.mxu0 0
  %284 = vmatprep.subr.bf16.mxu0 0
  %285 = vmatpush1.bf16.msra.mxu0 0
  %286 = vmatprep.subr.bf16.mxu0 0
  %287 = vmatpush1.bf16.msra.mxu0 0
  %288 = vmatprep.subr.bf16.mxu0 0
  %289 = vmatpush1.bf16.msra.mxu0 0
  %290 = vmatprep.mubr.bf16.mxu0 0
  %291 = vmatmul.mubr.bf16.gmra.mrb[0].mxu0 %v194
  %v292 = vpop.f32.mrb[0].mxu0
  %v293 = vadd.f32 0.0, %v292
  %v294 = vpop.f32.mrb[0].mxu0
  %v295 = vpop.f32.mrb[0].mxu0
  %v296 = vadd.f32 0.0, %v295
  %v297 = vpop.f32.mrb[0].mxu0
  %298 = vmatprep.mubr.bf16.mxu0 0
  %299 = vmatmul.mubr.bf16.gmra.mrb[0].mxu0 %v195
  %v300 = vpop.f32.mrb[0].mxu0
  %v301 = vadd.f32 0.0, %v300
  %v302 = vpop.f32.mrb[0].mxu0
  %v303 = vpop.f32.mrb[0].mxu0
  %v304 = vadd.f32 0.0, %v303
  %v305 = vpop.f32.mrb[0].mxu0
  %306 = vmatprep.mubr.bf16.mxu0 0
  %307 = vmatmul.mubr.bf16.gmra.mrb[0].mxu0 %v196
  %v308 = vpop.f32.mrb[0].mxu0
  %v309 = vadd.f32 0.0, %v308
  %v310 = vpop.f32.mrb[0].mxu0
  %v311 = vpop.f32.mrb[0].mxu0
  %v312 = vadd.f32 0.0, %v311
  %v313 = vpop.f32.mrb[0].mxu0
  %314 = vmatprep.mubr.bf16.mxu0 0
  %315 = vmatmul.mubr.bf16.gmra.mrb[0].mxu0 %v197
  %v316 = vpop.f32.mrb[0].mxu0
  %v317 = vadd.f32 0.0, %v316
  %v318 = vpop.f32.mrb[0].mxu0
  %v319 = vpop.f32.mrb[0].mxu0
  %v320 = vadd.f32 0.0, %v319
  %v321 = vpop.f32.mrb[0].mxu0
  %322 = vmatprep.mubr.bf16.mxu0 0
  %323 = vmatmul.mubr.bf16.gmra.mrb[0].mxu0 %v198
  %v324 = vpop.f32.mrb[0].mxu0
  %v325 = vadd.f32 0.0, %v324
  %v326 = vpop.f32.mrb[0].mxu0
  %v327 = vpop.f32.mrb[0].mxu0
  %v328 = vadd.f32 0.0, %v327
  %v329 = vpop.f32.mrb[0].mxu0
  %330 = vmatprep.mubr.bf16.mxu0 0
  %331 = vmatmul.mubr.bf16.gmra.mrb[0].mxu0 %v199
  %v332 = vpop.f32.mrb[0].mxu0
  %v333 = vadd.f32 0.0, %v332
  %v334 = vpop.f32.mrb[0].mxu0
  %v335 = vpop.f32.mrb[0].mxu0
  %v336 = vadd.f32 0.0, %v335
  %v337 = vpop.f32.mrb[0].mxu0
  %338 = vmatprep.mubr.bf16.mxu0 0
  %339 = vmatmul.mubr.bf16.gmra.mrb[0].mxu0 %v200
  %v340 = vpop.f32.mrb[0].mxu0
  %v341 = vadd.f32 0.0, %v340
  %v342 = vpop.f32.mrb[0].mxu0
  %v343 = vpop.f32.mrb[0].mxu0
  %v344 = vadd.f32 0.0, %v343
  %v345 = vpop.f32.mrb[0].mxu0
  %346 = vmatprep.mubr.bf16.mxu0 0
  %347 = vmatmul.mubr.bf16.gmra.mrb[0].mxu0 %v201
  %v348 = vpop.f32.mrb[0].mxu0
  %v349 = vadd.f32 0.0, %v348
  %v350 = vpop.f32.mrb[0].mxu0
  %v351 = vpop.f32.mrb[0].mxu0
  %v352 = vadd.f32 0.0, %v351
  %v353 = vpop.f32.mrb[0].mxu0
  %354 = vdwg.mxu0
  %v355 = vld [vmem:[%s5] sm:$0x1]
  %v357 = vlaneseq
  %v358 = vshrl.u32 %v357, 7
  %v359 = vsub.s32 0, %v358
  %v360 = vrot.slane %v355, %v359
  %v362 = vmul.f32 %v293, %v360
  %v363 = vmul.f32 %v296, %v360
  %v364 = vmul.f32 %v301, %v360
  %v365 = vmul.f32 %v304, %v360
  %v366 = vmul.f32 %v309, %v360
  %v367 = vmul.f32 %v312, %v360
  %v368 = vmul.f32 %v317, %v360
  %v369 = vmul.f32 %v320, %v360
  %v370 = vmul.f32 %v325, %v360
  %v371 = vmul.f32 %v328, %v360
  %v372 = vmul.f32 %v333, %v360
  %v373 = vmul.f32 %v336, %v360
  %v374 = vmul.f32 %v341, %v360
  %v375 = vmul.f32 %v344, %v360
  %v376 = vmul.f32 %v349, %v360
  %v377 = vmul.f32 %v352, %v360
  %v378 = vld [vmem:[%s7] sm:$0x1]
  %v380 = vlaneseq
  %v381 = vshrl.u32 %v380, 7
  %v382 = vsub.s32 0, %v381
  %v383 = vrot.slane %v378, %v382
  %v385 = vadd.f32 %v362, %v383
  %v386 = vadd.f32 %v363, %v383
  %v387 = vadd.f32 %v364, %v383
  %v388 = vadd.f32 %v365, %v383
  %v389 = vadd.f32 %v366, %v383
  %v390 = vadd.f32 %v367, %v383
  %v391 = vadd.f32 %v368, %v383
  %v392 = vadd.f32 %v369, %v383
  %v393 = vadd.f32 %v370, %v383
  %v394 = vadd.f32 %v371, %v383
  %v395 = vadd.f32 %v372, %v383
  %v396 = vadd.f32 %v373, %v383
  %v397 = vadd.f32 %v374, %v383
  %v398 = vadd.f32 %v375, %v383
  %v399 = vadd.f32 %v376, %v383
  %v400 = vadd.f32 %v377, %v383
  %v401 = vmax.f32 %v385, 0.0
  %v402 = vmax.f32 %v386, 0.0
  %v403 = vmax.f32 %v387, 0.0
  %v404 = vmax.f32 %v388, 0.0
  %v405 = vmax.f32 %v389, 0.0
  %v406 = vmax.f32 %v390, 0.0
  %v407 = vmax.f32 %v391, 0.0
  %v408 = vmax.f32 %v392, 0.0
  %v409 = vmax.f32 %v393, 0.0
  %v410 = vmax.f32 %v394, 0.0
  %v411 = vmax.f32 %v395, 0.0
  %v412 = vmax.f32 %v396, 0.0
  %v413 = vmax.f32 %v397, 0.0
  %v414 = vmax.f32 %v398, 0.0
  %v415 = vmax.f32 %v399, 0.0
  %v416 = vmax.f32 %v400, 0.0
  %v417 = vpack.c.bf16 %v402, %v401
  %v418 = vpack.c.bf16 %v404, %v403
  %v419 = vpack.c.bf16 %v406, %v405
  %v420 = vpack.c.bf16 %v408, %v407
  %v421 = vpack.c.bf16 %v410, %v409
  %v422 = vpack.c.bf16 %v412, %v411
  %v423 = vpack.c.bf16 %v414, %v413
  %v424 = vpack.c.bf16 %v416, %v415
  %v425 = vld [vmem:[%s9] sm:$0xf]
  %v426 = vld [vmem:[%s9 + $0x4] sm:$0xf]
  %v427 = vld [vmem:[%s9 + $0x8] sm:$0xf]
  %v428 = vld [vmem:[%s9 + $0xc] sm:$0xf]
  %v429 = vld [vmem:[%s9 + $0x10] sm:$0xf]
  %v430 = vld [vmem:[%s9 + $0x14] sm:$0xf]
  %v431 = vld [vmem:[%s9 + $0x18] sm:$0xf]
  %v432 = vld [vmem:[%s9 + $0x1c] sm:$0xf]
  %v433 = vld [vmem:[%s9 + $0x20] sm:$0xf]
  %v434 = vld [vmem:[%s9 + $0x24] sm:$0xf]
  %v435 = vld [vmem:[%s9 + $0x28] sm:$0xf]
  %v436 = vld [vmem:[%s9 + $0x2c] sm:$0xf]
  %v437 = vld [vmem:[%s9 + $0x30] sm:$0xf]
  %v438 = vld [vmem:[%s9 + $0x34] sm:$0xf]
  %v439 = vld [vmem:[%s9 + $0x38] sm:$0xf]
  %v440 = vld [vmem:[%s9 + $0x3c] sm:$0xf]
  %v441 = vld [vmem:[%s11] sm:$0xf]
  %v442 = vld [vmem:[%s11 + $0x4] sm:$0xf]
  %v443 = vld [vmem:[%s11 + $0x8] sm:$0xf]
  %v444 = vld [vmem:[%s11 + $0xc] sm:$0xf]
  %v445 = vld [vmem:[%s11 + $0x10] sm:$0xf]
  %v446 = vld [vmem:[%s11 + $0x14] sm:$0xf]
  %v447 = vld [vmem:[%s11 + $0x18] sm:$0xf]
  %v448 = vld [vmem:[%s11 + $0x1c] sm:$0xf]
  %v449 = vld [vmem:[%s11 + $0x20] sm:$0xf]
  %v450 = vld [vmem:[%s11 + $0x24] sm:$0xf]
  %v451 = vld [vmem:[%s11 + $0x28] sm:$0xf]
  %v452 = vld [vmem:[%s11 + $0x2c] sm:$0xf]
  %v453 = vld [vmem:[%s11 + $0x30] sm:$0xf]
  %v454 = vld [vmem:[%s11 + $0x34] sm:$0xf]
  %v455 = vld [vmem:[%s11 + $0x38] sm:$0xf]
  %v456 = vld [vmem:[%s11 + $0x3c] sm:$0xf]
  %v473 = vunpack.c.l.b16 %v441
  %v474 = vunpack.c.l.b16 %v442
  %v475 = vunpack.c.l.b16 %v443
  %v476 = vunpack.c.l.b16 %v444
  %v477 = vunpack.c.l.b16 %v445
  %v478 = vunpack.c.l.b16 %v446
  %v479 = vunpack.c.l.b16 %v447
  %v480 = vunpack.c.l.b16 %v448
  %v481 = vunpack.c.l.b16 %v449
  %v482 = vunpack.c.l.b16 %v450
  %v483 = vunpack.c.l.b16 %v451
  %v484 = vunpack.c.l.b16 %v452
  %v485 = vunpack.c.l.b16 %v453
  %v486 = vunpack.c.l.b16 %v454
  %v487 = vunpack.c.l.b16 %v455
  %v488 = vunpack.c.l.b16 %v456
  %v489 = vpack.c.b16 %v474, %v473
  %v490 = vpack.c.b16 %v476, %v475
  %v491 = vpack.c.b16 %v478, %v477
  %v492 = vpack.c.b16 %v480, %v479
  %v493 = vpack.c.b16 %v482, %v481
  %v494 = vpack.c.b16 %v484, %v483
  %v495 = vpack.c.b16 %v486, %v485
  %v496 = vpack.c.b16 %v488, %v487
  %505 = vmatprep.subr.bf16.mxu0 0
  %506 = vmatpush1.bf16.msra.mxu0 %v489
  %507 = vmatprep.subr.bf16.mxu0 0
  %508 = vmatpush1.bf16.msra.mxu0 %v490
  %509 = vmatprep.subr.bf16.mxu0 0
  %510 = vmatpush1.bf16.msra.mxu0 %v491
  %511 = vmatprep.subr.bf16.mxu0 0
  %512 = vmatpush1.bf16.msra.mxu0 %v492
  %513 = vmatprep.subr.bf16.mxu0 0
  %514 = vmatpush1.bf16.msra.mxu0 %v493
  %515 = vmatprep.subr.bf16.mxu0 0
  %516 = vmatpush1.bf16.msra.mxu0 %v494
  %517 = vmatprep.subr.bf16.mxu0 0
  %518 = vmatpush1.bf16.msra.mxu0 %v495
  %519 = vmatprep.subr.bf16.mxu0 0
  %520 = vmatpush1.bf16.msra.mxu0 %v496
  %521 = vmatprep.subr.bf16.mxu0 0
  %522 = vmatpush1.bf16.msra.mxu0 0
  %523 = vmatprep.subr.bf16.mxu0 0
  %524 = vmatpush1.bf16.msra.mxu0 0
  %525 = vmatprep.subr.bf16.mxu0 0
  %526 = vmatpush1.bf16.msra.mxu0 0
  %527 = vmatprep.subr.bf16.mxu0 0
  %528 = vmatpush1.bf16.msra.mxu0 0
  %529 = vmatprep.subr.bf16.mxu0 0
  %530 = vmatpush1.bf16.msra.mxu0 0
  %531 = vmatprep.subr.bf16.mxu0 0
  %532 = vmatpush1.bf16.msra.mxu0 0
  %533 = vmatprep.subr.bf16.mxu0 0
  %534 = vmatpush1.bf16.msra.mxu0 0
  %535 = vmatprep.subr.bf16.mxu0 0
  %536 = vmatpush1.bf16.msra.mxu0 0
  %537 = vmatprep.mubr.bf16.mxu0 0
  %538 = vmatmul.mubr.bf16.gmra.mrb[0].mxu0 %v194
  %v539 = vpop.f32.mrb[0].mxu0
  %v540 = vadd.f32 0.0, %v539
  %v541 = vpop.f32.mrb[0].mxu0
  %v542 = vpop.f32.mrb[0].mxu0
  %v543 = vadd.f32 0.0, %v542
  %v544 = vpop.f32.mrb[0].mxu0
  %545 = vmatprep.mubr.bf16.mxu0 0
  %546 = vmatmul.mubr.bf16.gmra.mrb[0].mxu0 %v195
  %v547 = vpop.f32.mrb[0].mxu0
  %v548 = vadd.f32 0.0, %v547
  %v549 = vpop.f32.mrb[0].mxu0
  %v550 = vpop.f32.mrb[0].mxu0
  %v551 = vadd.f32 0.0, %v550
  %v552 = vpop.f32.mrb[0].mxu0
  %553 = vmatprep.mubr.bf16.mxu0 0
  %554 = vmatmul.mubr.bf16.gmra.mrb[0].mxu0 %v196
  %v555 = vpop.f32.mrb[0].mxu0
  %v556 = vadd.f32 0.0, %v555
  %v557 = vpop.f32.mrb[0].mxu0
  %v558 = vpop.f32.mrb[0].mxu0
  %v559 = vadd.f32 0.0, %v558
  %v560 = vpop.f32.mrb[0].mxu0
  %561 = vmatprep.mubr.bf16.mxu0 0
  %562 = vmatmul.mubr.bf16.gmra.mrb[0].mxu0 %v197
  %v563 = vpop.f32.mrb[0].mxu0
  %v564 = vadd.f32 0.0, %v563
  %v565 = vpop.f32.mrb[0].mxu0
  %v566 = vpop.f32.mrb[0].mxu0
  %v567 = vadd.f32 0.0, %v566
  %v568 = vpop.f32.mrb[0].mxu0
  %569 = vmatprep.mubr.bf16.mxu0 0
  %570 = vmatmul.mubr.bf16.gmra.mrb[0].mxu0 %v198
  %v571 = vpop.f32.mrb[0].mxu0
  %v572 = vadd.f32 0.0, %v571
  %v573 = vpop.f32.mrb[0].mxu0
  %v574 = vpop.f32.mrb[0].mxu0
  %v575 = vadd.f32 0.0, %v574
  %v576 = vpop.f32.mrb[0].mxu0
  %577 = vmatprep.mubr.bf16.mxu0 0
  %578 = vmatmul.mubr.bf16.gmra.mrb[0].mxu0 %v199
  %v579 = vpop.f32.mrb[0].mxu0
  %v580 = vadd.f32 0.0, %v579
  %v581 = vpop.f32.mrb[0].mxu0
  %v582 = vpop.f32.mrb[0].mxu0
  %v583 = vadd.f32 0.0, %v582
  %v584 = vpop.f32.mrb[0].mxu0
  %585 = vmatprep.mubr.bf16.mxu0 0
  %586 = vmatmul.mubr.bf16.gmra.mrb[0].mxu0 %v200
  %v587 = vpop.f32.mrb[0].mxu0
  %v588 = vadd.f32 0.0, %v587
  %v589 = vpop.f32.mrb[0].mxu0
  %v590 = vpop.f32.mrb[0].mxu0
  %v591 = vadd.f32 0.0, %v590
  %v592 = vpop.f32.mrb[0].mxu0
  %593 = vmatprep.mubr.bf16.mxu0 0
  %594 = vmatmul.mubr.bf16.gmra.mrb[0].mxu0 %v201
  %v595 = vpop.f32.mrb[0].mxu0
  %v596 = vadd.f32 0.0, %v595
  %v597 = vpop.f32.mrb[0].mxu0
  %v598 = vpop.f32.mrb[0].mxu0
  %v599 = vadd.f32 0.0, %v598
  %v600 = vpop.f32.mrb[0].mxu0
  %601 = vdwg.mxu0
  %v618 = vunpack.c.l.b16 %v425
  %v619 = vunpack.c.l.b16 %v426
  %v620 = vunpack.c.l.b16 %v427
  %v621 = vunpack.c.l.b16 %v428
  %v622 = vunpack.c.l.b16 %v429
  %v623 = vunpack.c.l.b16 %v430
  %v624 = vunpack.c.l.b16 %v431
  %v625 = vunpack.c.l.b16 %v432
  %v626 = vunpack.c.l.b16 %v433
  %v627 = vunpack.c.l.b16 %v434
  %v628 = vunpack.c.l.b16 %v435
  %v629 = vunpack.c.l.b16 %v436
  %v630 = vunpack.c.l.b16 %v437
  %v631 = vunpack.c.l.b16 %v438
  %v632 = vunpack.c.l.b16 %v439
  %v633 = vunpack.c.l.b16 %v440
  %v634 = vpack.c.b16 %v619, %v618
  %v635 = vpack.c.b16 %v621, %v620
  %v636 = vpack.c.b16 %v623, %v622
  %v637 = vpack.c.b16 %v625, %v624
  %v638 = vpack.c.b16 %v627, %v626
  %v639 = vpack.c.b16 %v629, %v628
  %v640 = vpack.c.b16 %v631, %v630
  %v641 = vpack.c.b16 %v633, %v632
  %650 = vmatprep.subr.bf16.mxu0 0
  %651 = vmatpush1.bf16.msra.mxu0 %v634
  %652 = vmatprep.subr.bf16.mxu0 0
  %653 = vmatpush1.bf16.msra.mxu0 %v635
  %654 = vmatprep.subr.bf16.mxu0 0
  %655 = vmatpush1.bf16.msra.mxu0 %v636
  %656 = vmatprep.subr.bf16.mxu0 0
  %657 = vmatpush1.bf16.msra.mxu0 %v637
  %658 = vmatprep.subr.bf16.mxu0 0
  %659 = vmatpush1.bf16.msra.mxu0 %v638
  %660 = vmatprep.subr.bf16.mxu0 0
  %661 = vmatpush1.bf16.msra.mxu0 %v639
  %662 = vmatprep.subr.bf16.mxu0 0
  %663 = vmatpush1.bf16.msra.mxu0 %v640
  %664 = vmatprep.subr.bf16.mxu0 0
  %665 = vmatpush1.bf16.msra.mxu0 %v641
  %666 = vmatprep.subr.bf16.mxu0 0
  %667 = vmatpush1.bf16.msra.mxu0 0
  %668 = vmatprep.subr.bf16.mxu0 0
  %669 = vmatpush1.bf16.msra.mxu0 0
  %670 = vmatprep.subr.bf16.mxu0 0
  %671 = vmatpush1.bf16.msra.mxu0 0
  %672 = vmatprep.subr.bf16.mxu0 0
  %673 = vmatpush1.bf16.msra.mxu0 0
  %674 = vmatprep.subr.bf16.mxu0 0
  %675 = vmatpush1.bf16.msra.mxu0 0
  %676 = vmatprep.subr.bf16.mxu0 0
  %677 = vmatpush1.bf16.msra.mxu0 0
  %678 = vmatprep.subr.bf16.mxu0 0
  %679 = vmatpush1.bf16.msra.mxu0 0
  %680 = vmatprep.subr.bf16.mxu0 0
  %681 = vmatpush1.bf16.msra.mxu0 0
  %682 = vmatprep.mubr.bf16.mxu0 0
  %683 = vmatmul.mubr.bf16.gmra.mrb[0].mxu0 %v417
  %v684 = vpop.f32.mrb[0].mxu0
  %v685 = vadd.f32 %v540, %v684
  %v686 = vpop.f32.mrb[0].mxu0
  %v687 = vpop.f32.mrb[0].mxu0
  %v688 = vadd.f32 %v543, %v687
  %v689 = vpop.f32.mrb[0].mxu0
  %690 = vmatprep.mubr.bf16.mxu0 0
  %691 = vmatmul.mubr.bf16.gmra.mrb[0].mxu0 %v418
  %v692 = vpop.f32.mrb[0].mxu0
  %v693 = vadd.f32 %v548, %v692
  %v694 = vpop.f32.mrb[0].mxu0
  %v695 = vpop.f32.mrb[0].mxu0
  %v696 = vadd.f32 %v551, %v695
  %v697 = vpop.f32.mrb[0].mxu0
  %698 = vmatprep.mubr.bf16.mxu0 0
  %699 = vmatmul.mubr.bf16.gmra.mrb[0].mxu0 %v419
  %v700 = vpop.f32.mrb[0].mxu0
  %v701 = vadd.f32 %v556, %v700
  %v702 = vpop.f32.mrb[0].mxu0
  %v703 = vpop.f32.mrb[0].mxu0
  %v704 = vadd.f32 %v559, %v703
  %v705 = vpop.f32.mrb[0].mxu0
  %706 = vmatprep.mubr.bf16.mxu0 0
  %707 = vmatmul.mubr.bf16.gmra.mrb[0].mxu0 %v420
  %v708 = vpop.f32.mrb[0].mxu0
  %v709 = vadd.f32 %v564, %v708
  %v710 = vpop.f32.mrb[0].mxu0
  %v711 = vpop.f32.mrb[0].mxu0
  %v712 = vadd.f32 %v567, %v711
  %v713 = vpop.f32.mrb[0].mxu0
  %714 = vmatprep.mubr.bf16.mxu0 0
  %715 = vmatmul.mubr.bf16.gmra.mrb[0].mxu0 %v421
  %v716 = vpop.f32.mrb[0].mxu0
  %v717 = vadd.f32 %v572, %v716
  %v718 = vpop.f32.mrb[0].mxu0
  %v719 = vpop.f32.mrb[0].mxu0
  %v720 = vadd.f32 %v575, %v719
  %v721 = vpop.f32.mrb[0].mxu0
  %722 = vmatprep.mubr.bf16.mxu0 0
  %723 = vmatmul.mubr.bf16.gmra.mrb[0].mxu0 %v422
  %v724 = vpop.f32.mrb[0].mxu0
  %v725 = vadd.f32 %v580, %v724
  %v726 = vpop.f32.mrb[0].mxu0
  %v727 = vpop.f32.mrb[0].mxu0
  %v728 = vadd.f32 %v583, %v727
  %v729 = vpop.f32.mrb[0].mxu0
  %730 = vmatprep.mubr.bf16.mxu0 0
  %731 = vmatmul.mubr.bf16.gmra.mrb[0].mxu0 %v423
  %v732 = vpop.f32.mrb[0].mxu0
  %v733 = vadd.f32 %v588, %v732
  %v734 = vpop.f32.mrb[0].mxu0
  %v735 = vpop.f32.mrb[0].mxu0
  %v736 = vadd.f32 %v591, %v735
  %v737 = vpop.f32.mrb[0].mxu0
  %738 = vmatprep.mubr.bf16.mxu0 0
  %739 = vmatmul.mubr.bf16.gmra.mrb[0].mxu0 %v424
  %v740 = vpop.f32.mrb[0].mxu0
  %v741 = vadd.f32 %v596, %v740
  %v742 = vpop.f32.mrb[0].mxu0
  %v743 = vpop.f32.mrb[0].mxu0
  %v744 = vadd.f32 %v599, %v743
  %v745 = vpop.f32.mrb[0].mxu0
  %746 = vdwg.mxu0
  %v747 = vld [vmem:[%s13] sm:$0x1]
  %v749 = vlaneseq
  %v750 = vshrl.u32 %v749, 7
  %v751 = vsub.s32 0, %v750
  %v752 = vrot.slane %v747, %v751
  %v754 = vmul.f32 %v685, %v752
  %v755 = vmul.f32 %v688, %v752
  %v756 = vmul.f32 %v693, %v752
  %v757 = vmul.f32 %v696, %v752
  %v758 = vmul.f32 %v701, %v752
  %v759 = vmul.f32 %v704, %v752
  %v760 = vmul.f32 %v709, %v752
  %v761 = vmul.f32 %v712, %v752
  %v762 = vmul.f32 %v717, %v752
  %v763 = vmul.f32 %v720, %v752
  %v764 = vmul.f32 %v725, %v752
  %v765 = vmul.f32 %v728, %v752
  %v766 = vmul.f32 %v733, %v752
  %v767 = vmul.f32 %v736, %v752
  %v768 = vmul.f32 %v741, %v752
  %v769 = vmul.f32 %v744, %v752
  %v770 = vld [vmem:[%s15] sm:$0x1]
  %v772 = vlaneseq
  %v773 = vshrl.u32 %v772, 7
  %v774 = vsub.s32 0, %v773
  %v775 = vrot.slane %v770, %v774
  %v777 = vadd.f32 %v754, %v775
  %v778 = vadd.f32 %v755, %v775
  %v779 = vadd.f32 %v756, %v775
  %v780 = vadd.f32 %v757, %v775
  %v781 = vadd.f32 %v758, %v775
  %v782 = vadd.f32 %v759, %v775
  %v783 = vadd.f32 %v760, %v775
  %v784 = vadd.f32 %v761, %v775
  %v785 = vadd.f32 %v762, %v775
  %v786 = vadd.f32 %v763, %v775
  %v787 = vadd.f32 %v764, %v775
  %v788 = vadd.f32 %v765, %v775
  %v789 = vadd.f32 %v766, %v775
  %v790 = vadd.f32 %v767, %v775
  %v791 = vadd.f32 %v768, %v775
  %v792 = vadd.f32 %v769, %v775
  %v793 = vmax.f32 %v777, 0.0
  %v794 = vmax.f32 %v778, 0.0
  %v795 = vmax.f32 %v779, 0.0
  %v796 = vmax.f32 %v780, 0.0
  %v797 = vmax.f32 %v781, 0.0
  %v798 = vmax.f32 %v782, 0.0
  %v799 = vmax.f32 %v783, 0.0
  %v800 = vmax.f32 %v784, 0.0
  %v801 = vmax.f32 %v785, 0.0
  %v802 = vmax.f32 %v786, 0.0
  %v803 = vmax.f32 %v787, 0.0
  %v804 = vmax.f32 %v788, 0.0
  %v805 = vmax.f32 %v789, 0.0
  %v806 = vmax.f32 %v790, 0.0
  %v807 = vmax.f32 %v791, 0.0
  %v808 = vmax.f32 %v792, 0.0
  %v809 = vpack.c.bf16 %v794, %v793
  %v810 = vpack.c.bf16 %v796, %v795
  %v811 = vpack.c.bf16 %v798, %v797
  %v812 = vpack.c.bf16 %v800, %v799
  %v813 = vpack.c.bf16 %v802, %v801
  %v814 = vpack.c.bf16 %v804, %v803
  %v815 = vpack.c.bf16 %v806, %v805
  %v816 = vpack.c.bf16 %v808, %v807
  %v817 = vld [vmem:[%s17] sm:$0xf]
  %v818 = vld [vmem:[%s17 + $0x4] sm:$0xf]
  %v819 = vld [vmem:[%s17 + $0x8] sm:$0xf]
  %v820 = vld [vmem:[%s17 + $0xc] sm:$0xf]
  %v821 = vld [vmem:[%s17 + $0x10] sm:$0xf]
  %v822 = vld [vmem:[%s17 + $0x14] sm:$0xf]
  %v823 = vld [vmem:[%s17 + $0x18] sm:$0xf]
  %v824 = vld [vmem:[%s17 + $0x1c] sm:$0xf]
  %v825 = vld [vmem:[%s17 + $0x20] sm:$0xf]
  %v826 = vld [vmem:[%s17 + $0x24] sm:$0xf]
  %v827 = vld [vmem:[%s17 + $0x28] sm:$0xf]
  %v828 = vld [vmem:[%s17 + $0x2c] sm:$0xf]
  %v829 = vld [vmem:[%s17 + $0x30] sm:$0xf]
  %v830 = vld [vmem:[%s17 + $0x34] sm:$0xf]
  %v831 = vld [vmem:[%s17 + $0x38] sm:$0xf]
  %v832 = vld [vmem:[%s17 + $0x3c] sm:$0xf]
  %v833 = vld [vmem:[%s19] sm:$0xf]
  %v834 = vld [vmem:[%s19 + $0x4] sm:$0xf]
  %v835 = vld [vmem:[%s19 + $0x8] sm:$0xf]
  %v836 = vld [vmem:[%s19 + $0xc] sm:$0xf]
  %v837 = vld [vmem:[%s19 + $0x10] sm:$0xf]
  %v838 = vld [vmem:[%s19 + $0x14] sm:$0xf]
  %v839 = vld [vmem:[%s19 + $0x18] sm:$0xf]
  %v840 = vld [vmem:[%s19 + $0x1c] sm:$0xf]
  %v841 = vld [vmem:[%s19 + $0x20] sm:$0xf]
  %v842 = vld [vmem:[%s19 + $0x24] sm:$0xf]
  %v843 = vld [vmem:[%s19 + $0x28] sm:$0xf]
  %v844 = vld [vmem:[%s19 + $0x2c] sm:$0xf]
  %v845 = vld [vmem:[%s19 + $0x30] sm:$0xf]
  %v846 = vld [vmem:[%s19 + $0x34] sm:$0xf]
  %v847 = vld [vmem:[%s19 + $0x38] sm:$0xf]
  %v848 = vld [vmem:[%s19 + $0x3c] sm:$0xf]
  %v865 = vunpack.c.l.b16 %v833
  %v866 = vunpack.c.l.b16 %v834
  %v867 = vunpack.c.l.b16 %v835
  %v868 = vunpack.c.l.b16 %v836
  %v869 = vunpack.c.l.b16 %v837
  %v870 = vunpack.c.l.b16 %v838
  %v871 = vunpack.c.l.b16 %v839
  %v872 = vunpack.c.l.b16 %v840
  %v873 = vunpack.c.l.b16 %v841
  %v874 = vunpack.c.l.b16 %v842
  %v875 = vunpack.c.l.b16 %v843
  %v876 = vunpack.c.l.b16 %v844
  %v877 = vunpack.c.l.b16 %v845
  %v878 = vunpack.c.l.b16 %v846
  %v879 = vunpack.c.l.b16 %v847
  %v880 = vunpack.c.l.b16 %v848
  %v881 = vpack.c.b16 %v866, %v865
  %v882 = vpack.c.b16 %v868, %v867
  %v883 = vpack.c.b16 %v870, %v869
  %v884 = vpack.c.b16 %v872, %v871
  %v885 = vpack.c.b16 %v874, %v873
  %v886 = vpack.c.b16 %v876, %v875
  %v887 = vpack.c.b16 %v878, %v877
  %v888 = vpack.c.b16 %v880, %v879
  %897 = vmatprep.subr.bf16.mxu0 0
  %898 = vmatpush1.bf16.msra.mxu0 %v881
  %899 = vmatprep.subr.bf16.mxu0 0
  %900 = vmatpush1.bf16.msra.mxu0 %v882
  %901 = vmatprep.subr.bf16.mxu0 0
  %902 = vmatpush1.bf16.msra.mxu0 %v883
  %903 = vmatprep.subr.bf16.mxu0 0
  %904 = vmatpush1.bf16.msra.mxu0 %v884
  %905 = vmatprep.subr.bf16.mxu0 0
  %906 = vmatpush1.bf16.msra.mxu0 %v885
  %907 = vmatprep.subr.bf16.mxu0 0
  %908 = vmatpush1.bf16.msra.mxu0 %v886
  %909 = vmatprep.subr.bf16.mxu0 0
  %910 = vmatpush1.bf16.msra.mxu0 %v887
  %911 = vmatprep.subr.bf16.mxu0 0
  %912 = vmatpush1.bf16.msra.mxu0 %v888
  %913 = vmatprep.subr.bf16.mxu0 0
  %914 = vmatpush1.bf16.msra.mxu0 0
  %915 = vmatprep.subr.bf16.mxu0 0
  %916 = vmatpush1.bf16.msra.mxu0 0
  %917 = vmatprep.subr.bf16.mxu0 0
  %918 = vmatpush1.bf16.msra.mxu0 0
  %919 = vmatprep.subr.bf16.mxu0 0
  %920 = vmatpush1.bf16.msra.mxu0 0
  %921 = vmatprep.subr.bf16.mxu0 0
  %922 = vmatpush1.bf16.msra.mxu0 0
  %923 = vmatprep.subr.bf16.mxu0 0
  %924 = vmatpush1.bf16.msra.mxu0 0
  %925 = vmatprep.subr.bf16.mxu0 0
  %926 = vmatpush1.bf16.msra.mxu0 0
  %927 = vmatprep.subr.bf16.mxu0 0
  %928 = vmatpush1.bf16.msra.mxu0 0
  %929 = vmatprep.mubr.bf16.mxu0 0
  %930 = vmatmul.mubr.bf16.gmra.mrb[0].mxu0 %v194
  %v931 = vpop.f32.mrb[0].mxu0
  %v932 = vadd.f32 0.0, %v931
  %v933 = vpop.f32.mrb[0].mxu0
  %v934 = vpop.f32.mrb[0].mxu0
  %v935 = vadd.f32 0.0, %v934
  %v936 = vpop.f32.mrb[0].mxu0
  %937 = vmatprep.mubr.bf16.mxu0 0
  %938 = vmatmul.mubr.bf16.gmra.mrb[0].mxu0 %v195
  %v939 = vpop.f32.mrb[0].mxu0
  %v940 = vadd.f32 0.0, %v939
  %v941 = vpop.f32.mrb[0].mxu0
  %v942 = vpop.f32.mrb[0].mxu0
  %v943 = vadd.f32 0.0, %v942
  %v944 = vpop.f32.mrb[0].mxu0
  %945 = vmatprep.mubr.bf16.mxu0 0
  %946 = vmatmul.mubr.bf16.gmra.mrb[0].mxu0 %v196
  %v947 = vpop.f32.mrb[0].mxu0
  %v948 = vadd.f32 0.0, %v947
  %v949 = vpop.f32.mrb[0].mxu0
  %v950 = vpop.f32.mrb[0].mxu0
  %v951 = vadd.f32 0.0, %v950
  %v952 = vpop.f32.mrb[0].mxu0
  %953 = vmatprep.mubr.bf16.mxu0 0
  %954 = vmatmul.mubr.bf16.gmra.mrb[0].mxu0 %v197
  %v955 = vpop.f32.mrb[0].mxu0
  %v956 = vadd.f32 0.0, %v955
  %v957 = vpop.f32.mrb[0].mxu0
  %v958 = vpop.f32.mrb[0].mxu0
  %v959 = vadd.f32 0.0, %v958
  %v960 = vpop.f32.mrb[0].mxu0
  %961 = vmatprep.mubr.bf16.mxu0 0
  %962 = vmatmul.mubr.bf16.gmra.mrb[0].mxu0 %v198
  %v963 = vpop.f32.mrb[0].mxu0
  %v964 = vadd.f32 0.0, %v963
  %v965 = vpop.f32.mrb[0].mxu0
  %v966 = vpop.f32.mrb[0].mxu0
  %v967 = vadd.f32 0.0, %v966
  %v968 = vpop.f32.mrb[0].mxu0
  %969 = vmatprep.mubr.bf16.mxu0 0
  %970 = vmatmul.mubr.bf16.gmra.mrb[0].mxu0 %v199
  %v971 = vpop.f32.mrb[0].mxu0
  %v972 = vadd.f32 0.0, %v971
  %v973 = vpop.f32.mrb[0].mxu0
  %v974 = vpop.f32.mrb[0].mxu0
  %v975 = vadd.f32 0.0, %v974
  %v976 = vpop.f32.mrb[0].mxu0
  %977 = vmatprep.mubr.bf16.mxu0 0
  %978 = vmatmul.mubr.bf16.gmra.mrb[0].mxu0 %v200
  %v979 = vpop.f32.mrb[0].mxu0
  %v980 = vadd.f32 0.0, %v979
  %v981 = vpop.f32.mrb[0].mxu0
  %v982 = vpop.f32.mrb[0].mxu0
  %v983 = vadd.f32 0.0, %v982
  %v984 = vpop.f32.mrb[0].mxu0
  %985 = vmatprep.mubr.bf16.mxu0 0
  %986 = vmatmul.mubr.bf16.gmra.mrb[0].mxu0 %v201
  %v987 = vpop.f32.mrb[0].mxu0
  %v988 = vadd.f32 0.0, %v987
  %v989 = vpop.f32.mrb[0].mxu0
  %v990 = vpop.f32.mrb[0].mxu0
  %v991 = vadd.f32 0.0, %v990
  %v992 = vpop.f32.mrb[0].mxu0
  %993 = vdwg.mxu0
  %v1010 = vunpack.c.l.b16 %v817
  %v1011 = vunpack.c.l.b16 %v818
  %v1012 = vunpack.c.l.b16 %v819
  %v1013 = vunpack.c.l.b16 %v820
  %v1014 = vunpack.c.l.b16 %v821
  %v1015 = vunpack.c.l.b16 %v822
  %v1016 = vunpack.c.l.b16 %v823
  %v1017 = vunpack.c.l.b16 %v824
  %v1018 = vunpack.c.l.b16 %v825
  %v1019 = vunpack.c.l.b16 %v826
  %v1020 = vunpack.c.l.b16 %v827
  %v1021 = vunpack.c.l.b16 %v828
  %v1022 = vunpack.c.l.b16 %v829
  %v1023 = vunpack.c.l.b16 %v830
  %v1024 = vunpack.c.l.b16 %v831
  %v1025 = vunpack.c.l.b16 %v832
  %v1026 = vpack.c.b16 %v1011, %v1010
  %v1027 = vpack.c.b16 %v1013, %v1012
  %v1028 = vpack.c.b16 %v1015, %v1014
  %v1029 = vpack.c.b16 %v1017, %v1016
  %v1030 = vpack.c.b16 %v1019, %v1018
  %v1031 = vpack.c.b16 %v1021, %v1020
  %v1032 = vpack.c.b16 %v1023, %v1022
  %v1033 = vpack.c.b16 %v1025, %v1024
  %1042 = vmatprep.subr.bf16.mxu0 0
  %1043 = vmatpush1.bf16.msra.mxu0 %v1026
  %1044 = vmatprep.subr.bf16.mxu0 0
  %1045 = vmatpush1.bf16.msra.mxu0 %v1027
  %1046 = vmatprep.subr.bf16.mxu0 0
  %1047 = vmatpush1.bf16.msra.mxu0 %v1028
  %1048 = vmatprep.subr.bf16.mxu0 0
  %1049 = vmatpush1.bf16.msra.mxu0 %v1029
  %1050 = vmatprep.subr.bf16.mxu0 0
  %1051 = vmatpush1.bf16.msra.mxu0 %v1030
  %1052 = vmatprep.subr.bf16.mxu0 0
  %1053 = vmatpush1.bf16.msra.mxu0 %v1031
  %1054 = vmatprep.subr.bf16.mxu0 0
  %1055 = vmatpush1.bf16.msra.mxu0 %v1032
  %1056 = vmatprep.subr.bf16.mxu0 0
  %1057 = vmatpush1.bf16.msra.mxu0 %v1033
  %1058 = vmatprep.subr.bf16.mxu0 0
  %1059 = vmatpush1.bf16.msra.mxu0 0
  %1060 = vmatprep.subr.bf16.mxu0 0
  %1061 = vmatpush1.bf16.msra.mxu0 0
  %1062 = vmatprep.subr.bf16.mxu0 0
  %1063 = vmatpush1.bf16.msra.mxu0 0
  %1064 = vmatprep.subr.bf16.mxu0 0
  %1065 = vmatpush1.bf16.msra.mxu0 0
  %1066 = vmatprep.subr.bf16.mxu0 0
  %1067 = vmatpush1.bf16.msra.mxu0 0
  %1068 = vmatprep.subr.bf16.mxu0 0
  %1069 = vmatpush1.bf16.msra.mxu0 0
  %1070 = vmatprep.subr.bf16.mxu0 0
  %1071 = vmatpush1.bf16.msra.mxu0 0
  %1072 = vmatprep.subr.bf16.mxu0 0
  %1073 = vmatpush1.bf16.msra.mxu0 0
  %1074 = vmatprep.mubr.bf16.mxu0 0
  %1075 = vmatmul.mubr.bf16.gmra.mrb[0].mxu0 %v809
  %v1076 = vpop.f32.mrb[0].mxu0
  %v1077 = vadd.f32 %v932, %v1076
  %v1078 = vpop.f32.mrb[0].mxu0
  %v1079 = vpop.f32.mrb[0].mxu0
  %v1080 = vadd.f32 %v935, %v1079
  %v1081 = vpop.f32.mrb[0].mxu0
  %1082 = vmatprep.mubr.bf16.mxu0 0
  %1083 = vmatmul.mubr.bf16.gmra.mrb[0].mxu0 %v810
  %v1084 = vpop.f32.mrb[0].mxu0
  %v1085 = vadd.f32 %v940, %v1084
  %v1086 = vpop.f32.mrb[0].mxu0
  %v1087 = vpop.f32.mrb[0].mxu0
  %v1088 = vadd.f32 %v943, %v1087
  %v1089 = vpop.f32.mrb[0].mxu0
  %1090 = vmatprep.mubr.bf16.mxu0 0
  %1091 = vmatmul.mubr.bf16.gmra.mrb[0].mxu0 %v811
  %v1092 = vpop.f32.mrb[0].mxu0
  %v1093 = vadd.f32 %v948, %v1092
  %v1094 = vpop.f32.mrb[0].mxu0
  %v1095 = vpop.f32.mrb[0].mxu0
  %v1096 = vadd.f32 %v951, %v1095
  %v1097 = vpop.f32.mrb[0].mxu0
  %1098 = vmatprep.mubr.bf16.mxu0 0
  %1099 = vmatmul.mubr.bf16.gmra.mrb[0].mxu0 %v812
  %v1100 = vpop.f32.mrb[0].mxu0
  %v1101 = vadd.f32 %v956, %v1100
  %v1102 = vpop.f32.mrb[0].mxu0
  %v1103 = vpop.f32.mrb[0].mxu0
  %v1104 = vadd.f32 %v959, %v1103
  %v1105 = vpop.f32.mrb[0].mxu0
  %1106 = vmatprep.mubr.bf16.mxu0 0
  %1107 = vmatmul.mubr.bf16.gmra.mrb[0].mxu0 %v813
  %v1108 = vpop.f32.mrb[0].mxu0
  %v1109 = vadd.f32 %v964, %v1108
  %v1110 = vpop.f32.mrb[0].mxu0
  %v1111 = vpop.f32.mrb[0].mxu0
  %v1112 = vadd.f32 %v967, %v1111
  %v1113 = vpop.f32.mrb[0].mxu0
  %1114 = vmatprep.mubr.bf16.mxu0 0
  %1115 = vmatmul.mubr.bf16.gmra.mrb[0].mxu0 %v814
  %v1116 = vpop.f32.mrb[0].mxu0
  %v1117 = vadd.f32 %v972, %v1116
  %v1118 = vpop.f32.mrb[0].mxu0
  %v1119 = vpop.f32.mrb[0].mxu0
  %v1120 = vadd.f32 %v975, %v1119
  %v1121 = vpop.f32.mrb[0].mxu0
  %1122 = vmatprep.mubr.bf16.mxu0 0
  %1123 = vmatmul.mubr.bf16.gmra.mrb[0].mxu0 %v815
  %v1124 = vpop.f32.mrb[0].mxu0
  %v1125 = vadd.f32 %v980, %v1124
  %v1126 = vpop.f32.mrb[0].mxu0
  %v1127 = vpop.f32.mrb[0].mxu0
  %v1128 = vadd.f32 %v983, %v1127
  %v1129 = vpop.f32.mrb[0].mxu0
  %1130 = vmatprep.mubr.bf16.mxu0 0
  %1131 = vmatmul.mubr.bf16.gmra.mrb[0].mxu0 %v816
  %v1132 = vpop.f32.mrb[0].mxu0
  %v1133 = vadd.f32 %v988, %v1132
  %v1134 = vpop.f32.mrb[0].mxu0
  %v1135 = vpop.f32.mrb[0].mxu0
  %v1136 = vadd.f32 %v991, %v1135
  %v1137 = vpop.f32.mrb[0].mxu0
  %1138 = vdwg.mxu0
  %v1139 = vld [vmem:[%s21] sm:$0x1]
  %v1141 = vlaneseq
  %v1142 = vshrl.u32 %v1141, 7
  %v1143 = vsub.s32 0, %v1142
  %v1144 = vrot.slane %v1139, %v1143
  %v1146 = vmul.f32 %v1077, %v1144
  %v1147 = vmul.f32 %v1080, %v1144
  %v1148 = vmul.f32 %v1085, %v1144
  %v1149 = vmul.f32 %v1088, %v1144
  %v1150 = vmul.f32 %v1093, %v1144
  %v1151 = vmul.f32 %v1096, %v1144
  %v1152 = vmul.f32 %v1101, %v1144
  %v1153 = vmul.f32 %v1104, %v1144
  %v1154 = vmul.f32 %v1109, %v1144
  %v1155 = vmul.f32 %v1112, %v1144
  %v1156 = vmul.f32 %v1117, %v1144
  %v1157 = vmul.f32 %v1120, %v1144
  %v1158 = vmul.f32 %v1125, %v1144
  %v1159 = vmul.f32 %v1128, %v1144
  %v1160 = vmul.f32 %v1133, %v1144
  %v1161 = vmul.f32 %v1136, %v1144
  %v1162 = vld [vmem:[%s23] sm:$0x1]
  %v1164 = vlaneseq
  %v1165 = vshrl.u32 %v1164, 7
  %v1166 = vsub.s32 0, %v1165
  %v1167 = vrot.slane %v1162, %v1166
  %v1169 = vadd.f32 %v1146, %v1167
  %v1170 = vadd.f32 %v1147, %v1167
  %v1171 = vadd.f32 %v1148, %v1167
  %v1172 = vadd.f32 %v1149, %v1167
  %v1173 = vadd.f32 %v1150, %v1167
  %v1174 = vadd.f32 %v1151, %v1167
  %v1175 = vadd.f32 %v1152, %v1167
  %v1176 = vadd.f32 %v1153, %v1167
  %v1177 = vadd.f32 %v1154, %v1167
  %v1178 = vadd.f32 %v1155, %v1167
  %v1179 = vadd.f32 %v1156, %v1167
  %v1180 = vadd.f32 %v1157, %v1167
  %v1181 = vadd.f32 %v1158, %v1167
  %v1182 = vadd.f32 %v1159, %v1167
  %v1183 = vadd.f32 %v1160, %v1167
  %v1184 = vadd.f32 %v1161, %v1167
  %v1185 = vmax.f32 %v1169, 0.0
  %v1186 = vmax.f32 %v1170, 0.0
  %v1187 = vmax.f32 %v1171, 0.0
  %v1188 = vmax.f32 %v1172, 0.0
  %v1189 = vmax.f32 %v1173, 0.0
  %v1190 = vmax.f32 %v1174, 0.0
  %v1191 = vmax.f32 %v1175, 0.0
  %v1192 = vmax.f32 %v1176, 0.0
  %v1193 = vmax.f32 %v1177, 0.0
  %v1194 = vmax.f32 %v1178, 0.0
  %v1195 = vmax.f32 %v1179, 0.0
  %v1196 = vmax.f32 %v1180, 0.0
  %v1197 = vmax.f32 %v1181, 0.0
  %v1198 = vmax.f32 %v1182, 0.0
  %v1199 = vmax.f32 %v1183, 0.0
  %v1200 = vmax.f32 %v1184, 0.0
  %v1201 = vpack.c.bf16 %v1186, %v1185
  %v1202 = vpack.c.bf16 %v1188, %v1187
  %v1203 = vpack.c.bf16 %v1190, %v1189
  %v1204 = vpack.c.bf16 %v1192, %v1191
  %v1205 = vpack.c.bf16 %v1194, %v1193
  %v1206 = vpack.c.bf16 %v1196, %v1195
  %v1207 = vpack.c.bf16 %v1198, %v1197
  %v1208 = vpack.c.bf16 %v1200, %v1199
  %v1209 = vld [vmem:[%s25] sm:$0xf]
  %v1210 = vld [vmem:[%s25 + $0x4] sm:$0xf]
  %v1211 = vld [vmem:[%s25 + $0x8] sm:$0xf]
  %v1212 = vld [vmem:[%s25 + $0xc] sm:$0xf]
  %v1213 = vld [vmem:[%s25 + $0x10] sm:$0xf]
  %v1214 = vld [vmem:[%s25 + $0x14] sm:$0xf]
  %v1215 = vld [vmem:[%s25 + $0x18] sm:$0xf]
  %v1216 = vld [vmem:[%s25 + $0x1c] sm:$0xf]
  %v1217 = vld [vmem:[%s25 + $0x20] sm:$0xf]
  %v1218 = vld [vmem:[%s25 + $0x24] sm:$0xf]
  %v1219 = vld [vmem:[%s25 + $0x28] sm:$0xf]
  %v1220 = vld [vmem:[%s25 + $0x2c] sm:$0xf]
  %v1221 = vld [vmem:[%s25 + $0x30] sm:$0xf]
  %v1222 = vld [vmem:[%s25 + $0x34] sm:$0xf]
  %v1223 = vld [vmem:[%s25 + $0x38] sm:$0xf]
  %v1224 = vld [vmem:[%s25 + $0x3c] sm:$0xf]
  %v1225 = vld [vmem:[%s27] sm:$0x1]
  %v1227 = vlaneseq
  %v1228 = vshrl.u32 %v1227, 7
  %v1229 = vsub.s32 0, %v1228
  %v1230 = vrot.slane %v1225, %v1229
  %v1248 = vunpack.c.l.b16 %v1209
  %v1249 = vunpack.c.l.b16 %v1210
  %v1250 = vunpack.c.l.b16 %v1211
  %v1251 = vunpack.c.l.b16 %v1212
  %v1252 = vunpack.c.l.b16 %v1213
  %v1253 = vunpack.c.l.b16 %v1214
  %v1254 = vunpack.c.l.b16 %v1215
  %v1255 = vunpack.c.l.b16 %v1216
  %v1256 = vunpack.c.l.b16 %v1217
  %v1257 = vunpack.c.l.b16 %v1218
  %v1258 = vunpack.c.l.b16 %v1219
  %v1259 = vunpack.c.l.b16 %v1220
  %v1260 = vunpack.c.l.b16 %v1221
  %v1261 = vunpack.c.l.b16 %v1222
  %v1262 = vunpack.c.l.b16 %v1223
  %v1263 = vunpack.c.l.b16 %v1224
  %v1264 = vpack.c.b16 %v1249, %v1248
  %v1265 = vpack.c.b16 %v1251, %v1250
  %v1266 = vpack.c.b16 %v1253, %v1252
  %v1267 = vpack.c.b16 %v1255, %v1254
  %v1268 = vpack.c.b16 %v1257, %v1256
  %v1269 = vpack.c.b16 %v1259, %v1258
  %v1270 = vpack.c.b16 %v1261, %v1260
  %v1271 = vpack.c.b16 %v1263, %v1262
  %1280 = vmatprep.subr.bf16.mxu0 0
  %1281 = vmatpush1.bf16.msra.mxu0 %v1264
  %1282 = vmatprep.subr.bf16.mxu0 0
  %1283 = vmatpush1.bf16.msra.mxu0 %v1265
  %1284 = vmatprep.subr.bf16.mxu0 0
  %1285 = vmatpush1.bf16.msra.mxu0 %v1266
  %1286 = vmatprep.subr.bf16.mxu0 0
  %1287 = vmatpush1.bf16.msra.mxu0 %v1267
  %1288 = vmatprep.subr.bf16.mxu0 0
  %1289 = vmatpush1.bf16.msra.mxu0 %v1268
  %1290 = vmatprep.subr.bf16.mxu0 0
  %1291 = vmatpush1.bf16.msra.mxu0 %v1269
  %1292 = vmatprep.subr.bf16.mxu0 0
  %1293 = vmatpush1.bf16.msra.mxu0 %v1270
  %1294 = vmatprep.subr.bf16.mxu0 0
  %1295 = vmatpush1.bf16.msra.mxu0 %v1271
  %1296 = vmatprep.subr.bf16.mxu0 0
  %1297 = vmatpush1.bf16.msra.mxu0 0
  %1298 = vmatprep.subr.bf16.mxu0 0
  %1299 = vmatpush1.bf16.msra.mxu0 0
  %1300 = vmatprep.subr.bf16.mxu0 0
  %1301 = vmatpush1.bf16.msra.mxu0 0
  %1302 = vmatprep.subr.bf16.mxu0 0
  %1303 = vmatpush1.bf16.msra.mxu0 0
  %1304 = vmatprep.subr.bf16.mxu0 0
  %1305 = vmatpush1.bf16.msra.mxu0 0
  %1306 = vmatprep.subr.bf16.mxu0 0
  %1307 = vmatpush1.bf16.msra.mxu0 0
  %1308 = vmatprep.subr.bf16.mxu0 0
  %1309 = vmatpush1.bf16.msra.mxu0 0
  %1310 = vmatprep.subr.bf16.mxu0 0
  %1311 = vmatpush1.bf16.msra.mxu0 0
  %1312 = vmatprep.mubr.bf16.mxu0 0
  %1313 = vmatmul.mubr.bf16.gmra.mrb[0].mxu0 %v1201
  %v1314 = vpop.f32.mrb[0].mxu0
  %v1315 = vadd.f32 %v1230, %v1314
  %v1316 = vpop.f32.mrb[0].mxu0
  %v1317 = vpop.f32.mrb[0].mxu0
  %v1318 = vadd.f32 %v1230, %v1317
  %v1319 = vpop.f32.mrb[0].mxu0
  %1320 = vmatprep.mubr.bf16.mxu0 0
  %1321 = vmatmul.mubr.bf16.gmra.mrb[0].mxu0 %v1202
  %v1322 = vpop.f32.mrb[0].mxu0
  %v1323 = vadd.f32 %v1230, %v1322
  %v1324 = vpop.f32.mrb[0].mxu0
  %v1325 = vpop.f32.mrb[0].mxu0
  %v1326 = vadd.f32 %v1230, %v1325
  %v1327 = vpop.f32.mrb[0].mxu0
  %1328 = vmatprep.mubr.bf16.mxu0 0
  %1329 = vmatmul.mubr.bf16.gmra.mrb[0].mxu0 %v1203
  %v1330 = vpop.f32.mrb[0].mxu0
  %v1331 = vadd.f32 %v1230, %v1330
  %v1332 = vpop.f32.mrb[0].mxu0
  %v1333 = vpop.f32.mrb[0].mxu0
  %v1334 = vadd.f32 %v1230, %v1333
  %v1335 = vpop.f32.mrb[0].mxu0
  %1336 = vmatprep.mubr.bf16.mxu0 0
  %1337 = vmatmul.mubr.bf16.gmra.mrb[0].mxu0 %v1204
  %v1338 = vpop.f32.mrb[0].mxu0
  %v1339 = vadd.f32 %v1230, %v1338
  %v1340 = vpop.f32.mrb[0].mxu0
  %v1341 = vpop.f32.mrb[0].mxu0
  %v1342 = vadd.f32 %v1230, %v1341
  %v1343 = vpop.f32.mrb[0].mxu0
  %1344 = vmatprep.mubr.bf16.mxu0 0
  %1345 = vmatmul.mubr.bf16.gmra.mrb[0].mxu0 %v1205
  %v1346 = vpop.f32.mrb[0].mxu0
  %v1347 = vadd.f32 %v1230, %v1346
  %v1348 = vpop.f32.mrb[0].mxu0
  %v1349 = vpop.f32.mrb[0].mxu0
  %v1350 = vadd.f32 %v1230, %v1349
  %v1351 = vpop.f32.mrb[0].mxu0
  %1352 = vmatprep.mubr.bf16.mxu0 0
  %1353 = vmatmul.mubr.bf16.gmra.mrb[0].mxu0 %v1206
  %v1354 = vpop.f32.mrb[0].mxu0
  %v1355 = vadd.f32 %v1230, %v1354
  %v1356 = vpop.f32.mrb[0].mxu0
  %v1357 = vpop.f32.mrb[0].mxu0
  %v1358 = vadd.f32 %v1230, %v1357
  %v1359 = vpop.f32.mrb[0].mxu0
  %1360 = vmatprep.mubr.bf16.mxu0 0
  %1361 = vmatmul.mubr.bf16.gmra.mrb[0].mxu0 %v1207
  %v1362 = vpop.f32.mrb[0].mxu0
  %v1363 = vadd.f32 %v1230, %v1362
  %v1364 = vpop.f32.mrb[0].mxu0
  %v1365 = vpop.f32.mrb[0].mxu0
  %v1366 = vadd.f32 %v1230, %v1365
  %v1367 = vpop.f32.mrb[0].mxu0
  %1368 = vmatprep.mubr.bf16.mxu0 0
  %1369 = vmatmul.mubr.bf16.gmra.mrb[0].mxu0 %v1208
  %v1370 = vpop.f32.mrb[0].mxu0
  %v1371 = vadd.f32 %v1230, %v1370
  %v1372 = vpop.f32.mrb[0].mxu0
  %v1373 = vpop.f32.mrb[0].mxu0
  %v1374 = vadd.f32 %v1230, %v1373
  %v1375 = vpop.f32.mrb[0].mxu0
  %1376 = vdwg.mxu0
  %v1377 = vlaneseq
  %v1378 = vand.u32 %v1377, 127
  %vm1379 = vcmp.lt.s32.totalorder %v1378, 8
  %v1380 = vsel %vm1379, %v1315, -1e+30
  %v1381 = vsel %vm1379, %v1318, -1e+30
  %v1382 = vsel %vm1379, %v1323, -1e+30
  %v1383 = vsel %vm1379, %v1326, -1e+30
  %v1384 = vsel %vm1379, %v1331, -1e+30
  %v1385 = vsel %vm1379, %v1334, -1e+30
  %v1386 = vsel %vm1379, %v1339, -1e+30
  %v1387 = vsel %vm1379, %v1342, -1e+30
  %v1388 = vsel %vm1379, %v1347, -1e+30
  %v1389 = vsel %vm1379, %v1350, -1e+30
  %v1390 = vsel %vm1379, %v1355, -1e+30
  %v1391 = vsel %vm1379, %v1358, -1e+30
  %v1392 = vsel %vm1379, %v1363, -1e+30
  %v1393 = vsel %vm1379, %v1366, -1e+30
  %v1394 = vsel %vm1379, %v1371, -1e+30
  %v1395 = vsel %vm1379, %v1374, -1e+30
  %1396 = vmax.xlane.f32.xlu0 %v1380
  %v1397 = vpop.xlane.xlu0 %1396
  %1398 = vmax.xlane.f32.xlu0 %v1381
  %v1399 = vpop.xlane.xlu0 %1398
  %1400 = vmax.xlane.f32.xlu0 %v1382
  %v1401 = vpop.xlane.xlu0 %1400
  %1402 = vmax.xlane.f32.xlu0 %v1383
  %v1403 = vpop.xlane.xlu0 %1402
  %1404 = vmax.xlane.f32.xlu0 %v1384
  %v1405 = vpop.xlane.xlu0 %1404
  %1406 = vmax.xlane.f32.xlu0 %v1385
  %v1407 = vpop.xlane.xlu0 %1406
  %1408 = vmax.xlane.f32.xlu0 %v1386
  %v1409 = vpop.xlane.xlu0 %1408
  %1410 = vmax.xlane.f32.xlu0 %v1387
  %v1411 = vpop.xlane.xlu0 %1410
  %1412 = vmax.xlane.f32.xlu0 %v1388
  %v1413 = vpop.xlane.xlu0 %1412
  %1414 = vmax.xlane.f32.xlu0 %v1389
  %v1415 = vpop.xlane.xlu0 %1414
  %1416 = vmax.xlane.f32.xlu0 %v1390
  %v1417 = vpop.xlane.xlu0 %1416
  %1418 = vmax.xlane.f32.xlu0 %v1391
  %v1419 = vpop.xlane.xlu0 %1418
  %1420 = vmax.xlane.f32.xlu0 %v1392
  %v1421 = vpop.xlane.xlu0 %1420
  %1422 = vmax.xlane.f32.xlu0 %v1393
  %v1423 = vpop.xlane.xlu0 %1422
  %1424 = vmax.xlane.f32.xlu0 %v1394
  %v1425 = vpop.xlane.xlu0 %1424
  %1426 = vmax.xlane.f32.xlu0 %v1395
  %v1427 = vpop.xlane.xlu0 %1426
  %v1428 = vsub.f32 %v1380, %v1397
  %v1429 = vsub.f32 %v1381, %v1399
  %v1430 = vsub.f32 %v1382, %v1401
  %v1431 = vsub.f32 %v1383, %v1403
  %v1432 = vsub.f32 %v1384, %v1405
  %v1433 = vsub.f32 %v1385, %v1407
  %v1434 = vsub.f32 %v1386, %v1409
  %v1435 = vsub.f32 %v1387, %v1411
  %v1436 = vsub.f32 %v1388, %v1413
  %v1437 = vsub.f32 %v1389, %v1415
  %v1438 = vsub.f32 %v1390, %v1417
  %v1439 = vsub.f32 %v1391, %v1419
  %v1440 = vsub.f32 %v1392, %v1421
  %v1441 = vsub.f32 %v1393, %v1423
  %v1442 = vsub.f32 %v1394, %v1425
  %v1443 = vsub.f32 %v1395, %v1427
  %v1444 = vmul.f32 %v1428, 1.442695
  %v1445 = vpow.pop %v1444
  %v1446 = vmul.f32 %v1429, 1.442695
  %v1447 = vpow.pop %v1446
  %v1448 = vmul.f32 %v1430, 1.442695
  %v1449 = vpow.pop %v1448
  %v1450 = vmul.f32 %v1431, 1.442695
  %v1451 = vpow.pop %v1450
  %v1452 = vmul.f32 %v1432, 1.442695
  %v1453 = vpow.pop %v1452
  %v1454 = vmul.f32 %v1433, 1.442695
  %v1455 = vpow.pop %v1454
  %v1456 = vmul.f32 %v1434, 1.442695
  %v1457 = vpow.pop %v1456
  %v1458 = vmul.f32 %v1435, 1.442695
  %v1459 = vpow.pop %v1458
  %v1460 = vmul.f32 %v1436, 1.442695
  %v1461 = vpow.pop %v1460
  %v1462 = vmul.f32 %v1437, 1.442695
  %v1463 = vpow.pop %v1462
  %v1464 = vmul.f32 %v1438, 1.442695
  %v1465 = vpow.pop %v1464
  %v1466 = vmul.f32 %v1439, 1.442695
  %v1467 = vpow.pop %v1466
  %v1468 = vmul.f32 %v1440, 1.442695
  %v1469 = vpow.pop %v1468
  %v1470 = vmul.f32 %v1441, 1.442695
  %v1471 = vpow.pop %v1470
  %v1472 = vmul.f32 %v1442, 1.442695
  %v1473 = vpow.pop %v1472
  %v1474 = vmul.f32 %v1443, 1.442695
  %v1475 = vpow.pop %v1474
  %1476 = vadd.xlane.f32.xlu0 %v1445
  %v1477 = vpop.xlane.xlu0 %1476
  %1478 = vadd.xlane.f32.xlu0 %v1447
  %v1479 = vpop.xlane.xlu0 %1478
  %1480 = vadd.xlane.f32.xlu0 %v1449
  %v1481 = vpop.xlane.xlu0 %1480
  %1482 = vadd.xlane.f32.xlu0 %v1451
  %v1483 = vpop.xlane.xlu0 %1482
  %1484 = vadd.xlane.f32.xlu0 %v1453
  %v1485 = vpop.xlane.xlu0 %1484
  %1486 = vadd.xlane.f32.xlu0 %v1455
  %v1487 = vpop.xlane.xlu0 %1486
  %1488 = vadd.xlane.f32.xlu0 %v1457
  %v1489 = vpop.xlane.xlu0 %1488
  %1490 = vadd.xlane.f32.xlu0 %v1459
  %v1491 = vpop.xlane.xlu0 %1490
  %1492 = vadd.xlane.f32.xlu0 %v1461
  %v1493 = vpop.xlane.xlu0 %1492
  %1494 = vadd.xlane.f32.xlu0 %v1463
  %v1495 = vpop.xlane.xlu0 %1494
  %1496 = vadd.xlane.f32.xlu0 %v1465
  %v1497 = vpop.xlane.xlu0 %1496
  %1498 = vadd.xlane.f32.xlu0 %v1467
  %v1499 = vpop.xlane.xlu0 %1498
  %1500 = vadd.xlane.f32.xlu0 %v1469
  %v1501 = vpop.xlane.xlu0 %1500
  %1502 = vadd.xlane.f32.xlu0 %v1471
  %v1503 = vpop.xlane.xlu0 %1502
  %1504 = vadd.xlane.f32.xlu0 %v1473
  %v1505 = vpop.xlane.xlu0 %1504
  %1506 = vadd.xlane.f32.xlu0 %v1475
  %v1507 = vpop.xlane.xlu0 %1506
  %v1508 = vlog2.pop %v1477
  %v1509 = vmul.f32 %v1508, 0.6931472
  %v1510 = vlog2.pop %v1479
  %v1511 = vmul.f32 %v1510, 0.6931472
  %v1512 = vlog2.pop %v1481
  %v1513 = vmul.f32 %v1512, 0.6931472
  %v1514 = vlog2.pop %v1483
  %v1515 = vmul.f32 %v1514, 0.6931472
  %v1516 = vlog2.pop %v1485
  %v1517 = vmul.f32 %v1516, 0.6931472
  %v1518 = vlog2.pop %v1487
  %v1519 = vmul.f32 %v1518, 0.6931472
  %v1520 = vlog2.pop %v1489
  %v1521 = vmul.f32 %v1520, 0.6931472
  %v1522 = vlog2.pop %v1491
  %v1523 = vmul.f32 %v1522, 0.6931472
  %v1524 = vlog2.pop %v1493
  %v1525 = vmul.f32 %v1524, 0.6931472
  %v1526 = vlog2.pop %v1495
  %v1527 = vmul.f32 %v1526, 0.6931472
  %v1528 = vlog2.pop %v1497
  %v1529 = vmul.f32 %v1528, 0.6931472
  %v1530 = vlog2.pop %v1499
  %v1531 = vmul.f32 %v1530, 0.6931472
  %v1532 = vlog2.pop %v1501
  %v1533 = vmul.f32 %v1532, 0.6931472
  %v1534 = vlog2.pop %v1503
  %v1535 = vmul.f32 %v1534, 0.6931472
  %v1536 = vlog2.pop %v1505
  %v1537 = vmul.f32 %v1536, 0.6931472
  %v1538 = vlog2.pop %v1507
  %v1539 = vmul.f32 %v1538, 0.6931472
  %v1540 = vsub.f32 %v1428, %v1509
  %v1541 = vsub.f32 %v1429, %v1511
  %v1542 = vsub.f32 %v1430, %v1513
  %v1543 = vsub.f32 %v1431, %v1515
  %v1544 = vsub.f32 %v1432, %v1517
  %v1545 = vsub.f32 %v1433, %v1519
  %v1546 = vsub.f32 %v1434, %v1521
  %v1547 = vsub.f32 %v1435, %v1523
  %v1548 = vsub.f32 %v1436, %v1525
  %v1549 = vsub.f32 %v1437, %v1527
  %v1550 = vsub.f32 %v1438, %v1529
  %v1551 = vsub.f32 %v1439, %v1531
  %v1552 = vsub.f32 %v1440, %v1533
  %v1553 = vsub.f32 %v1441, %v1535
  %v1554 = vsub.f32 %v1442, %v1537
  %v1555 = vsub.f32 %v1443, %v1539
  %v1556 = vld [vmem:[%s29] sm:$0xf]
  %v1557 = vld [vmem:[%s29 + $0x4] sm:$0xf]
  %v1558 = vld [vmem:[%s29 + $0x8] sm:$0xf]
  %v1559 = vld [vmem:[%s29 + $0xc] sm:$0xf]
  %v1560 = vld [vmem:[%s29 + $0x10] sm:$0xf]
  %v1561 = vld [vmem:[%s29 + $0x14] sm:$0xf]
  %v1562 = vld [vmem:[%s29 + $0x18] sm:$0xf]
  %v1563 = vld [vmem:[%s29 + $0x1c] sm:$0xf]
  %v1564 = vld [vmem:[%s29 + $0x20] sm:$0xf]
  %v1565 = vld [vmem:[%s29 + $0x24] sm:$0xf]
  %v1566 = vld [vmem:[%s29 + $0x28] sm:$0xf]
  %v1567 = vld [vmem:[%s29 + $0x2c] sm:$0xf]
  %v1568 = vld [vmem:[%s29 + $0x30] sm:$0xf]
  %v1569 = vld [vmem:[%s29 + $0x34] sm:$0xf]
  %v1570 = vld [vmem:[%s29 + $0x38] sm:$0xf]
  %v1571 = vld [vmem:[%s29 + $0x3c] sm:$0xf]
  %v1588 = vunpack.c.l.b16 %v1556
  %v1589 = vunpack.c.l.b16 %v1557
  %v1590 = vunpack.c.l.b16 %v1558
  %v1591 = vunpack.c.l.b16 %v1559
  %v1592 = vunpack.c.l.b16 %v1560
  %v1593 = vunpack.c.l.b16 %v1561
  %v1594 = vunpack.c.l.b16 %v1562
  %v1595 = vunpack.c.l.b16 %v1563
  %v1596 = vunpack.c.l.b16 %v1564
  %v1597 = vunpack.c.l.b16 %v1565
  %v1598 = vunpack.c.l.b16 %v1566
  %v1599 = vunpack.c.l.b16 %v1567
  %v1600 = vunpack.c.l.b16 %v1568
  %v1601 = vunpack.c.l.b16 %v1569
  %v1602 = vunpack.c.l.b16 %v1570
  %v1603 = vunpack.c.l.b16 %v1571
  %v1604 = vpack.c.b16 %v1589, %v1588
  %v1605 = vpack.c.b16 %v1591, %v1590
  %v1606 = vpack.c.b16 %v1593, %v1592
  %v1607 = vpack.c.b16 %v1595, %v1594
  %v1608 = vpack.c.b16 %v1597, %v1596
  %v1609 = vpack.c.b16 %v1599, %v1598
  %v1610 = vpack.c.b16 %v1601, %v1600
  %v1611 = vpack.c.b16 %v1603, %v1602
  %1620 = vmatprep.subr.bf16.mxu0 0
  %1621 = vmatpush1.bf16.msra.mxu0 %v1604
  %1622 = vmatprep.subr.bf16.mxu0 0
  %1623 = vmatpush1.bf16.msra.mxu0 %v1605
  %1624 = vmatprep.subr.bf16.mxu0 0
  %1625 = vmatpush1.bf16.msra.mxu0 %v1606
  %1626 = vmatprep.subr.bf16.mxu0 0
  %1627 = vmatpush1.bf16.msra.mxu0 %v1607
  %1628 = vmatprep.subr.bf16.mxu0 0
  %1629 = vmatpush1.bf16.msra.mxu0 %v1608
  %1630 = vmatprep.subr.bf16.mxu0 0
  %1631 = vmatpush1.bf16.msra.mxu0 %v1609
  %1632 = vmatprep.subr.bf16.mxu0 0
  %1633 = vmatpush1.bf16.msra.mxu0 %v1610
  %1634 = vmatprep.subr.bf16.mxu0 0
  %1635 = vmatpush1.bf16.msra.mxu0 %v1611
  %1636 = vmatprep.subr.bf16.mxu0 0
  %1637 = vmatpush1.bf16.msra.mxu0 0
  %1638 = vmatprep.subr.bf16.mxu0 0
  %1639 = vmatpush1.bf16.msra.mxu0 0
  %1640 = vmatprep.subr.bf16.mxu0 0
  %1641 = vmatpush1.bf16.msra.mxu0 0
  %1642 = vmatprep.subr.bf16.mxu0 0
  %1643 = vmatpush1.bf16.msra.mxu0 0
  %1644 = vmatprep.subr.bf16.mxu0 0
  %1645 = vmatpush1.bf16.msra.mxu0 0
  %1646 = vmatprep.subr.bf16.mxu0 0
  %1647 = vmatpush1.bf16.msra.mxu0 0
  %1648 = vmatprep.subr.bf16.mxu0 0
  %1649 = vmatpush1.bf16.msra.mxu0 0
  %1650 = vmatprep.subr.bf16.mxu0 0
  %1651 = vmatpush1.bf16.msra.mxu0 0
  %1652 = vmatprep.mubr.bf16.mxu0 0
  %1653 = vmatmul.mubr.bf16.gmra.mrb[0].mxu0 %v417
  %v1654 = vpop.f32.mrb[0].mxu0
  %v1655 = vadd.f32 0.0, %v1654
  %v1656 = vpop.f32.mrb[0].mxu0
  %v1657 = vpop.f32.mrb[0].mxu0
  %v1658 = vadd.f32 0.0, %v1657
  %v1659 = vpop.f32.mrb[0].mxu0
  %1660 = vmatprep.mubr.bf16.mxu0 0
  %1661 = vmatmul.mubr.bf16.gmra.mrb[0].mxu0 %v418
  %v1662 = vpop.f32.mrb[0].mxu0
  %v1663 = vadd.f32 0.0, %v1662
  %v1664 = vpop.f32.mrb[0].mxu0
  %v1665 = vpop.f32.mrb[0].mxu0
  %v1666 = vadd.f32 0.0, %v1665
  %v1667 = vpop.f32.mrb[0].mxu0
  %1668 = vmatprep.mubr.bf16.mxu0 0
  %1669 = vmatmul.mubr.bf16.gmra.mrb[0].mxu0 %v419
  %v1670 = vpop.f32.mrb[0].mxu0
  %v1671 = vadd.f32 0.0, %v1670
  %v1672 = vpop.f32.mrb[0].mxu0
  %v1673 = vpop.f32.mrb[0].mxu0
  %v1674 = vadd.f32 0.0, %v1673
  %v1675 = vpop.f32.mrb[0].mxu0
  %1676 = vmatprep.mubr.bf16.mxu0 0
  %1677 = vmatmul.mubr.bf16.gmra.mrb[0].mxu0 %v420
  %v1678 = vpop.f32.mrb[0].mxu0
  %v1679 = vadd.f32 0.0, %v1678
  %v1680 = vpop.f32.mrb[0].mxu0
  %v1681 = vpop.f32.mrb[0].mxu0
  %v1682 = vadd.f32 0.0, %v1681
  %v1683 = vpop.f32.mrb[0].mxu0
  %1684 = vmatprep.mubr.bf16.mxu0 0
  %1685 = vmatmul.mubr.bf16.gmra.mrb[0].mxu0 %v421
  %v1686 = vpop.f32.mrb[0].mxu0
  %v1687 = vadd.f32 0.0, %v1686
  %v1688 = vpop.f32.mrb[0].mxu0
  %v1689 = vpop.f32.mrb[0].mxu0
  %v1690 = vadd.f32 0.0, %v1689
  %v1691 = vpop.f32.mrb[0].mxu0
  %1692 = vmatprep.mubr.bf16.mxu0 0
  %1693 = vmatmul.mubr.bf16.gmra.mrb[0].mxu0 %v422
  %v1694 = vpop.f32.mrb[0].mxu0
  %v1695 = vadd.f32 0.0, %v1694
  %v1696 = vpop.f32.mrb[0].mxu0
  %v1697 = vpop.f32.mrb[0].mxu0
  %v1698 = vadd.f32 0.0, %v1697
  %v1699 = vpop.f32.mrb[0].mxu0
  %1700 = vmatprep.mubr.bf16.mxu0 0
  %1701 = vmatmul.mubr.bf16.gmra.mrb[0].mxu0 %v423
  %v1702 = vpop.f32.mrb[0].mxu0
  %v1703 = vadd.f32 0.0, %v1702
  %v1704 = vpop.f32.mrb[0].mxu0
  %v1705 = vpop.f32.mrb[0].mxu0
  %v1706 = vadd.f32 0.0, %v1705
  %v1707 = vpop.f32.mrb[0].mxu0
  %1708 = vmatprep.mubr.bf16.mxu0 0
  %1709 = vmatmul.mubr.bf16.gmra.mrb[0].mxu0 %v424
  %v1710 = vpop.f32.mrb[0].mxu0
  %v1711 = vadd.f32 0.0, %v1710
  %v1712 = vpop.f32.mrb[0].mxu0
  %v1713 = vpop.f32.mrb[0].mxu0
  %v1714 = vadd.f32 0.0, %v1713
  %v1715 = vpop.f32.mrb[0].mxu0
  %1716 = vdwg.mxu0
  %v1717 = vld [vmem:[%s31] sm:$0x1]
  %v1719 = vlaneseq
  %v1720 = vshrl.u32 %v1719, 7
  %v1721 = vsub.s32 0, %v1720
  %v1722 = vrot.slane %v1717, %v1721
  %v1724 = vmul.f32 %v1655, %v1722
  %v1725 = vmul.f32 %v1658, %v1722
  %v1726 = vmul.f32 %v1663, %v1722
  %v1727 = vmul.f32 %v1666, %v1722
  %v1728 = vmul.f32 %v1671, %v1722
  %v1729 = vmul.f32 %v1674, %v1722
  %v1730 = vmul.f32 %v1679, %v1722
  %v1731 = vmul.f32 %v1682, %v1722
  %v1732 = vmul.f32 %v1687, %v1722
  %v1733 = vmul.f32 %v1690, %v1722
  %v1734 = vmul.f32 %v1695, %v1722
  %v1735 = vmul.f32 %v1698, %v1722
  %v1736 = vmul.f32 %v1703, %v1722
  %v1737 = vmul.f32 %v1706, %v1722
  %v1738 = vmul.f32 %v1711, %v1722
  %v1739 = vmul.f32 %v1714, %v1722
  %v1740 = vld [vmem:[%s33] sm:$0x1]
  %v1742 = vlaneseq
  %v1743 = vshrl.u32 %v1742, 7
  %v1744 = vsub.s32 0, %v1743
  %v1745 = vrot.slane %v1740, %v1744
  %v1747 = vadd.f32 %v1724, %v1745
  %v1748 = vadd.f32 %v1725, %v1745
  %v1749 = vadd.f32 %v1726, %v1745
  %v1750 = vadd.f32 %v1727, %v1745
  %v1751 = vadd.f32 %v1728, %v1745
  %v1752 = vadd.f32 %v1729, %v1745
  %v1753 = vadd.f32 %v1730, %v1745
  %v1754 = vadd.f32 %v1731, %v1745
  %v1755 = vadd.f32 %v1732, %v1745
  %v1756 = vadd.f32 %v1733, %v1745
  %v1757 = vadd.f32 %v1734, %v1745
  %v1758 = vadd.f32 %v1735, %v1745
  %v1759 = vadd.f32 %v1736, %v1745
  %v1760 = vadd.f32 %v1737, %v1745
  %v1761 = vadd.f32 %v1738, %v1745
  %v1762 = vadd.f32 %v1739, %v1745
  %v1763 = vmax.f32 %v1747, 0.0
  %v1764 = vmax.f32 %v1748, 0.0
  %v1765 = vmax.f32 %v1749, 0.0
  %v1766 = vmax.f32 %v1750, 0.0
  %v1767 = vmax.f32 %v1751, 0.0
  %v1768 = vmax.f32 %v1752, 0.0
  %v1769 = vmax.f32 %v1753, 0.0
  %v1770 = vmax.f32 %v1754, 0.0
  %v1771 = vmax.f32 %v1755, 0.0
  %v1772 = vmax.f32 %v1756, 0.0
  %v1773 = vmax.f32 %v1757, 0.0
  %v1774 = vmax.f32 %v1758, 0.0
  %v1775 = vmax.f32 %v1759, 0.0
  %v1776 = vmax.f32 %v1760, 0.0
  %v1777 = vmax.f32 %v1761, 0.0
  %v1778 = vmax.f32 %v1762, 0.0
  %v1779 = vpack.c.bf16 %v1764, %v1763
  %v1780 = vpack.c.bf16 %v1766, %v1765
  %v1781 = vpack.c.bf16 %v1768, %v1767
  %v1782 = vpack.c.bf16 %v1770, %v1769
  %v1783 = vpack.c.bf16 %v1772, %v1771
  %v1784 = vpack.c.bf16 %v1774, %v1773
  %v1785 = vpack.c.bf16 %v1776, %v1775
  %v1786 = vpack.c.bf16 %v1778, %v1777
  %v1787 = vld [vmem:[%s35] sm:$0xf]
  %v1788 = vld [vmem:[%s35 + $0x4] sm:$0xf]
  %v1789 = vld [vmem:[%s35 + $0x8] sm:$0xf]
  %v1790 = vld [vmem:[%s35 + $0xc] sm:$0xf]
  %v1791 = vld [vmem:[%s35 + $0x10] sm:$0xf]
  %v1792 = vld [vmem:[%s35 + $0x14] sm:$0xf]
  %v1793 = vld [vmem:[%s35 + $0x18] sm:$0xf]
  %v1794 = vld [vmem:[%s35 + $0x1c] sm:$0xf]
  %v1795 = vld [vmem:[%s35 + $0x20] sm:$0xf]
  %v1796 = vld [vmem:[%s35 + $0x24] sm:$0xf]
  %v1797 = vld [vmem:[%s35 + $0x28] sm:$0xf]
  %v1798 = vld [vmem:[%s35 + $0x2c] sm:$0xf]
  %v1799 = vld [vmem:[%s35 + $0x30] sm:$0xf]
  %v1800 = vld [vmem:[%s35 + $0x34] sm:$0xf]
  %v1801 = vld [vmem:[%s35 + $0x38] sm:$0xf]
  %v1802 = vld [vmem:[%s35 + $0x3c] sm:$0xf]
  %v1803 = vld [vmem:[%s37] sm:$0x1]
  %v1805 = vlaneseq
  %v1806 = vshrl.u32 %v1805, 7
  %v1807 = vsub.s32 0, %v1806
  %v1808 = vrot.slane %v1803, %v1807
  %v1826 = vunpack.c.l.b16 %v1787
  %v1827 = vunpack.c.l.b16 %v1788
  %v1828 = vunpack.c.l.b16 %v1789
  %v1829 = vunpack.c.l.b16 %v1790
  %v1830 = vunpack.c.l.b16 %v1791
  %v1831 = vunpack.c.l.b16 %v1792
  %v1832 = vunpack.c.l.b16 %v1793
  %v1833 = vunpack.c.l.b16 %v1794
  %v1834 = vunpack.c.l.b16 %v1795
  %v1835 = vunpack.c.l.b16 %v1796
  %v1836 = vunpack.c.l.b16 %v1797
  %v1837 = vunpack.c.l.b16 %v1798
  %v1838 = vunpack.c.l.b16 %v1799
  %v1839 = vunpack.c.l.b16 %v1800
  %v1840 = vunpack.c.l.b16 %v1801
  %v1841 = vunpack.c.l.b16 %v1802
  %v1842 = vpack.c.b16 %v1827, %v1826
  %v1843 = vpack.c.b16 %v1829, %v1828
  %v1844 = vpack.c.b16 %v1831, %v1830
  %v1845 = vpack.c.b16 %v1833, %v1832
  %v1846 = vpack.c.b16 %v1835, %v1834
  %v1847 = vpack.c.b16 %v1837, %v1836
  %v1848 = vpack.c.b16 %v1839, %v1838
  %v1849 = vpack.c.b16 %v1841, %v1840
  %1858 = vmatprep.subr.bf16.mxu0 0
  %1859 = vmatpush1.bf16.msra.mxu0 %v1842
  %1860 = vmatprep.subr.bf16.mxu0 0
  %1861 = vmatpush1.bf16.msra.mxu0 %v1843
  %1862 = vmatprep.subr.bf16.mxu0 0
  %1863 = vmatpush1.bf16.msra.mxu0 %v1844
  %1864 = vmatprep.subr.bf16.mxu0 0
  %1865 = vmatpush1.bf16.msra.mxu0 %v1845
  %1866 = vmatprep.subr.bf16.mxu0 0
  %1867 = vmatpush1.bf16.msra.mxu0 %v1846
  %1868 = vmatprep.subr.bf16.mxu0 0
  %1869 = vmatpush1.bf16.msra.mxu0 %v1847
  %1870 = vmatprep.subr.bf16.mxu0 0
  %1871 = vmatpush1.bf16.msra.mxu0 %v1848
  %1872 = vmatprep.subr.bf16.mxu0 0
  %1873 = vmatpush1.bf16.msra.mxu0 %v1849
  %1874 = vmatprep.subr.bf16.mxu0 0
  %1875 = vmatpush1.bf16.msra.mxu0 0
  %1876 = vmatprep.subr.bf16.mxu0 0
  %1877 = vmatpush1.bf16.msra.mxu0 0
  %1878 = vmatprep.subr.bf16.mxu0 0
  %1879 = vmatpush1.bf16.msra.mxu0 0
  %1880 = vmatprep.subr.bf16.mxu0 0
  %1881 = vmatpush1.bf16.msra.mxu0 0
  %1882 = vmatprep.subr.bf16.mxu0 0
  %1883 = vmatpush1.bf16.msra.mxu0 0
  %1884 = vmatprep.subr.bf16.mxu0 0
  %1885 = vmatpush1.bf16.msra.mxu0 0
  %1886 = vmatprep.subr.bf16.mxu0 0
  %1887 = vmatpush1.bf16.msra.mxu0 0
  %1888 = vmatprep.subr.bf16.mxu0 0
  %1889 = vmatpush1.bf16.msra.mxu0 0
  %1890 = vmatprep.mubr.bf16.mxu0 0
  %1891 = vmatmul.mubr.bf16.gmra.mrb[0].mxu0 %v1779
  %v1892 = vpop.f32.mrb[0].mxu0
  %v1893 = vadd.f32 %v1808, %v1892
  %v1894 = vpop.f32.mrb[0].mxu0
  %v1895 = vpop.f32.mrb[0].mxu0
  %v1896 = vadd.f32 %v1808, %v1895
  %v1897 = vpop.f32.mrb[0].mxu0
  %1898 = vmatprep.mubr.bf16.mxu0 0
  %1899 = vmatmul.mubr.bf16.gmra.mrb[0].mxu0 %v1780
  %v1900 = vpop.f32.mrb[0].mxu0
  %v1901 = vadd.f32 %v1808, %v1900
  %v1902 = vpop.f32.mrb[0].mxu0
  %v1903 = vpop.f32.mrb[0].mxu0
  %v1904 = vadd.f32 %v1808, %v1903
  %v1905 = vpop.f32.mrb[0].mxu0
  %1906 = vmatprep.mubr.bf16.mxu0 0
  %1907 = vmatmul.mubr.bf16.gmra.mrb[0].mxu0 %v1781
  %v1908 = vpop.f32.mrb[0].mxu0
  %v1909 = vadd.f32 %v1808, %v1908
  %v1910 = vpop.f32.mrb[0].mxu0
  %v1911 = vpop.f32.mrb[0].mxu0
  %v1912 = vadd.f32 %v1808, %v1911
  %v1913 = vpop.f32.mrb[0].mxu0
  %1914 = vmatprep.mubr.bf16.mxu0 0
  %1915 = vmatmul.mubr.bf16.gmra.mrb[0].mxu0 %v1782
  %v1916 = vpop.f32.mrb[0].mxu0
  %v1917 = vadd.f32 %v1808, %v1916
  %v1918 = vpop.f32.mrb[0].mxu0
  %v1919 = vpop.f32.mrb[0].mxu0
  %v1920 = vadd.f32 %v1808, %v1919
  %v1921 = vpop.f32.mrb[0].mxu0
  %1922 = vmatprep.mubr.bf16.mxu0 0
  %1923 = vmatmul.mubr.bf16.gmra.mrb[0].mxu0 %v1783
  %v1924 = vpop.f32.mrb[0].mxu0
  %v1925 = vadd.f32 %v1808, %v1924
  %v1926 = vpop.f32.mrb[0].mxu0
  %v1927 = vpop.f32.mrb[0].mxu0
  %v1928 = vadd.f32 %v1808, %v1927
  %v1929 = vpop.f32.mrb[0].mxu0
  %1930 = vmatprep.mubr.bf16.mxu0 0
  %1931 = vmatmul.mubr.bf16.gmra.mrb[0].mxu0 %v1784
  %v1932 = vpop.f32.mrb[0].mxu0
  %v1933 = vadd.f32 %v1808, %v1932
  %v1934 = vpop.f32.mrb[0].mxu0
  %v1935 = vpop.f32.mrb[0].mxu0
  %v1936 = vadd.f32 %v1808, %v1935
  %v1937 = vpop.f32.mrb[0].mxu0
  %1938 = vmatprep.mubr.bf16.mxu0 0
  %1939 = vmatmul.mubr.bf16.gmra.mrb[0].mxu0 %v1785
  %v1940 = vpop.f32.mrb[0].mxu0
  %v1941 = vadd.f32 %v1808, %v1940
  %v1942 = vpop.f32.mrb[0].mxu0
  %v1943 = vpop.f32.mrb[0].mxu0
  %v1944 = vadd.f32 %v1808, %v1943
  %v1945 = vpop.f32.mrb[0].mxu0
  %1946 = vmatprep.mubr.bf16.mxu0 0
  %1947 = vmatmul.mubr.bf16.gmra.mrb[0].mxu0 %v1786
  %v1948 = vpop.f32.mrb[0].mxu0
  %v1949 = vadd.f32 %v1808, %v1948
  %v1950 = vpop.f32.mrb[0].mxu0
  %v1951 = vpop.f32.mrb[0].mxu0
  %v1952 = vadd.f32 %v1808, %v1951
  %v1953 = vpop.f32.mrb[0].mxu0
  %1954 = vdwg.mxu0
  %v1955 = vsel %vm1379, %v1893, -1e+30
  %v1956 = vsel %vm1379, %v1896, -1e+30
  %v1957 = vsel %vm1379, %v1901, -1e+30
  %v1958 = vsel %vm1379, %v1904, -1e+30
  %v1959 = vsel %vm1379, %v1909, -1e+30
  %v1960 = vsel %vm1379, %v1912, -1e+30
  %v1961 = vsel %vm1379, %v1917, -1e+30
  %v1962 = vsel %vm1379, %v1920, -1e+30
  %v1963 = vsel %vm1379, %v1925, -1e+30
  %v1964 = vsel %vm1379, %v1928, -1e+30
  %v1965 = vsel %vm1379, %v1933, -1e+30
  %v1966 = vsel %vm1379, %v1936, -1e+30
  %v1967 = vsel %vm1379, %v1941, -1e+30
  %v1968 = vsel %vm1379, %v1944, -1e+30
  %v1969 = vsel %vm1379, %v1949, -1e+30
  %v1970 = vsel %vm1379, %v1952, -1e+30
  %1971 = vmax.xlane.f32.xlu0 %v1955
  %v1972 = vpop.xlane.xlu0 %1971
  %1973 = vmax.xlane.f32.xlu0 %v1956
  %v1974 = vpop.xlane.xlu0 %1973
  %1975 = vmax.xlane.f32.xlu0 %v1957
  %v1976 = vpop.xlane.xlu0 %1975
  %1977 = vmax.xlane.f32.xlu0 %v1958
  %v1978 = vpop.xlane.xlu0 %1977
  %1979 = vmax.xlane.f32.xlu0 %v1959
  %v1980 = vpop.xlane.xlu0 %1979
  %1981 = vmax.xlane.f32.xlu0 %v1960
  %v1982 = vpop.xlane.xlu0 %1981
  %1983 = vmax.xlane.f32.xlu0 %v1961
  %v1984 = vpop.xlane.xlu0 %1983
  %1985 = vmax.xlane.f32.xlu0 %v1962
  %v1986 = vpop.xlane.xlu0 %1985
  %1987 = vmax.xlane.f32.xlu0 %v1963
  %v1988 = vpop.xlane.xlu0 %1987
  %1989 = vmax.xlane.f32.xlu0 %v1964
  %v1990 = vpop.xlane.xlu0 %1989
  %1991 = vmax.xlane.f32.xlu0 %v1965
  %v1992 = vpop.xlane.xlu0 %1991
  %1993 = vmax.xlane.f32.xlu0 %v1966
  %v1994 = vpop.xlane.xlu0 %1993
  %1995 = vmax.xlane.f32.xlu0 %v1967
  %v1996 = vpop.xlane.xlu0 %1995
  %1997 = vmax.xlane.f32.xlu0 %v1968
  %v1998 = vpop.xlane.xlu0 %1997
  %1999 = vmax.xlane.f32.xlu0 %v1969
  %v2000 = vpop.xlane.xlu0 %1999
  %2001 = vmax.xlane.f32.xlu0 %v1970
  %v2002 = vpop.xlane.xlu0 %2001
  %v2003 = vsub.f32 %v1955, %v1972
  %v2004 = vsub.f32 %v1956, %v1974
  %v2005 = vsub.f32 %v1957, %v1976
  %v2006 = vsub.f32 %v1958, %v1978
  %v2007 = vsub.f32 %v1959, %v1980
  %v2008 = vsub.f32 %v1960, %v1982
  %v2009 = vsub.f32 %v1961, %v1984
  %v2010 = vsub.f32 %v1962, %v1986
  %v2011 = vsub.f32 %v1963, %v1988
  %v2012 = vsub.f32 %v1964, %v1990
  %v2013 = vsub.f32 %v1965, %v1992
  %v2014 = vsub.f32 %v1966, %v1994
  %v2015 = vsub.f32 %v1967, %v1996
  %v2016 = vsub.f32 %v1968, %v1998
  %v2017 = vsub.f32 %v1969, %v2000
  %v2018 = vsub.f32 %v1970, %v2002
  %v2019 = vmul.f32 %v2003, 1.442695
  %v2020 = vpow.pop %v2019
  %v2021 = vmul.f32 %v2004, 1.442695
  %v2022 = vpow.pop %v2021
  %v2023 = vmul.f32 %v2005, 1.442695
  %v2024 = vpow.pop %v2023
  %v2025 = vmul.f32 %v2006, 1.442695
  %v2026 = vpow.pop %v2025
  %v2027 = vmul.f32 %v2007, 1.442695
  %v2028 = vpow.pop %v2027
  %v2029 = vmul.f32 %v2008, 1.442695
  %v2030 = vpow.pop %v2029
  %v2031 = vmul.f32 %v2009, 1.442695
  %v2032 = vpow.pop %v2031
  %v2033 = vmul.f32 %v2010, 1.442695
  %v2034 = vpow.pop %v2033
  %v2035 = vmul.f32 %v2011, 1.442695
  %v2036 = vpow.pop %v2035
  %v2037 = vmul.f32 %v2012, 1.442695
  %v2038 = vpow.pop %v2037
  %v2039 = vmul.f32 %v2013, 1.442695
  %v2040 = vpow.pop %v2039
  %v2041 = vmul.f32 %v2014, 1.442695
  %v2042 = vpow.pop %v2041
  %v2043 = vmul.f32 %v2015, 1.442695
  %v2044 = vpow.pop %v2043
  %v2045 = vmul.f32 %v2016, 1.442695
  %v2046 = vpow.pop %v2045
  %v2047 = vmul.f32 %v2017, 1.442695
  %v2048 = vpow.pop %v2047
  %v2049 = vmul.f32 %v2018, 1.442695
  %v2050 = vpow.pop %v2049
  %2051 = vadd.xlane.f32.xlu0 %v2020
  %v2052 = vpop.xlane.xlu0 %2051
  %2053 = vadd.xlane.f32.xlu0 %v2022
  %v2054 = vpop.xlane.xlu0 %2053
  %2055 = vadd.xlane.f32.xlu0 %v2024
  %v2056 = vpop.xlane.xlu0 %2055
  %2057 = vadd.xlane.f32.xlu0 %v2026
  %v2058 = vpop.xlane.xlu0 %2057
  %2059 = vadd.xlane.f32.xlu0 %v2028
  %v2060 = vpop.xlane.xlu0 %2059
  %2061 = vadd.xlane.f32.xlu0 %v2030
  %v2062 = vpop.xlane.xlu0 %2061
  %2063 = vadd.xlane.f32.xlu0 %v2032
  %v2064 = vpop.xlane.xlu0 %2063
  %2065 = vadd.xlane.f32.xlu0 %v2034
  %v2066 = vpop.xlane.xlu0 %2065
  %2067 = vadd.xlane.f32.xlu0 %v2036
  %v2068 = vpop.xlane.xlu0 %2067
  %2069 = vadd.xlane.f32.xlu0 %v2038
  %v2070 = vpop.xlane.xlu0 %2069
  %2071 = vadd.xlane.f32.xlu0 %v2040
  %v2072 = vpop.xlane.xlu0 %2071
  %2073 = vadd.xlane.f32.xlu0 %v2042
  %v2074 = vpop.xlane.xlu0 %2073
  %2075 = vadd.xlane.f32.xlu0 %v2044
  %v2076 = vpop.xlane.xlu0 %2075
  %2077 = vadd.xlane.f32.xlu0 %v2046
  %v2078 = vpop.xlane.xlu0 %2077
  %2079 = vadd.xlane.f32.xlu0 %v2048
  %v2080 = vpop.xlane.xlu0 %2079
  %2081 = vadd.xlane.f32.xlu0 %v2050
  %v2082 = vpop.xlane.xlu0 %2081
  %v2083 = vlog2.pop %v2052
  %v2084 = vmul.f32 %v2083, 0.6931472
  %v2085 = vlog2.pop %v2054
  %v2086 = vmul.f32 %v2085, 0.6931472
  %v2087 = vlog2.pop %v2056
  %v2088 = vmul.f32 %v2087, 0.6931472
  %v2089 = vlog2.pop %v2058
  %v2090 = vmul.f32 %v2089, 0.6931472
  %v2091 = vlog2.pop %v2060
  %v2092 = vmul.f32 %v2091, 0.6931472
  %v2093 = vlog2.pop %v2062
  %v2094 = vmul.f32 %v2093, 0.6931472
  %v2095 = vlog2.pop %v2064
  %v2096 = vmul.f32 %v2095, 0.6931472
  %v2097 = vlog2.pop %v2066
  %v2098 = vmul.f32 %v2097, 0.6931472
  %v2099 = vlog2.pop %v2068
  %v2100 = vmul.f32 %v2099, 0.6931472
  %v2101 = vlog2.pop %v2070
  %v2102 = vmul.f32 %v2101, 0.6931472
  %v2103 = vlog2.pop %v2072
  %v2104 = vmul.f32 %v2103, 0.6931472
  %v2105 = vlog2.pop %v2074
  %v2106 = vmul.f32 %v2105, 0.6931472
  %v2107 = vlog2.pop %v2076
  %v2108 = vmul.f32 %v2107, 0.6931472
  %v2109 = vlog2.pop %v2078
  %v2110 = vmul.f32 %v2109, 0.6931472
  %v2111 = vlog2.pop %v2080
  %v2112 = vmul.f32 %v2111, 0.6931472
  %v2113 = vlog2.pop %v2082
  %v2114 = vmul.f32 %v2113, 0.6931472
  %v2115 = vsub.f32 %v2003, %v2084
  %v2116 = vsub.f32 %v2004, %v2086
  %v2117 = vsub.f32 %v2005, %v2088
  %v2118 = vsub.f32 %v2006, %v2090
  %v2119 = vsub.f32 %v2007, %v2092
  %v2120 = vsub.f32 %v2008, %v2094
  %v2121 = vsub.f32 %v2009, %v2096
  %v2122 = vsub.f32 %v2010, %v2098
  %v2123 = vsub.f32 %v2011, %v2100
  %v2124 = vsub.f32 %v2012, %v2102
  %v2125 = vsub.f32 %v2013, %v2104
  %v2126 = vsub.f32 %v2014, %v2106
  %v2127 = vsub.f32 %v2015, %v2108
  %v2128 = vsub.f32 %v2016, %v2110
  %v2129 = vsub.f32 %v2017, %v2112
  %v2130 = vsub.f32 %v2018, %v2114
  %v2131 = vld [vmem:[%s39] sm:$0xf]
  %v2132 = vld [vmem:[%s39 + $0x4] sm:$0xf]
  %v2133 = vld [vmem:[%s39 + $0x8] sm:$0xf]
  %v2134 = vld [vmem:[%s39 + $0xc] sm:$0xf]
  %v2135 = vld [vmem:[%s39 + $0x10] sm:$0xf]
  %v2136 = vld [vmem:[%s39 + $0x14] sm:$0xf]
  %v2137 = vld [vmem:[%s39 + $0x18] sm:$0xf]
  %v2138 = vld [vmem:[%s39 + $0x1c] sm:$0xf]
  %v2139 = vld [vmem:[%s39 + $0x20] sm:$0xf]
  %v2140 = vld [vmem:[%s39 + $0x24] sm:$0xf]
  %v2141 = vld [vmem:[%s39 + $0x28] sm:$0xf]
  %v2142 = vld [vmem:[%s39 + $0x2c] sm:$0xf]
  %v2143 = vld [vmem:[%s39 + $0x30] sm:$0xf]
  %v2144 = vld [vmem:[%s39 + $0x34] sm:$0xf]
  %v2145 = vld [vmem:[%s39 + $0x38] sm:$0xf]
  %v2146 = vld [vmem:[%s39 + $0x3c] sm:$0xf]
  %v2163 = vunpack.c.l.b16 %v2131
  %v2164 = vunpack.c.l.b16 %v2132
  %v2165 = vunpack.c.l.b16 %v2133
  %v2166 = vunpack.c.l.b16 %v2134
  %v2167 = vunpack.c.l.b16 %v2135
  %v2168 = vunpack.c.l.b16 %v2136
  %v2169 = vunpack.c.l.b16 %v2137
  %v2170 = vunpack.c.l.b16 %v2138
  %v2171 = vunpack.c.l.b16 %v2139
  %v2172 = vunpack.c.l.b16 %v2140
  %v2173 = vunpack.c.l.b16 %v2141
  %v2174 = vunpack.c.l.b16 %v2142
  %v2175 = vunpack.c.l.b16 %v2143
  %v2176 = vunpack.c.l.b16 %v2144
  %v2177 = vunpack.c.l.b16 %v2145
  %v2178 = vunpack.c.l.b16 %v2146
  %v2179 = vpack.c.b16 %v2164, %v2163
  %v2180 = vpack.c.b16 %v2166, %v2165
  %v2181 = vpack.c.b16 %v2168, %v2167
  %v2182 = vpack.c.b16 %v2170, %v2169
  %v2183 = vpack.c.b16 %v2172, %v2171
  %v2184 = vpack.c.b16 %v2174, %v2173
  %v2185 = vpack.c.b16 %v2176, %v2175
  %v2186 = vpack.c.b16 %v2178, %v2177
  %2195 = vmatprep.subr.bf16.mxu0 0
  %2196 = vmatpush1.bf16.msra.mxu0 %v2179
  %2197 = vmatprep.subr.bf16.mxu0 0
  %2198 = vmatpush1.bf16.msra.mxu0 %v2180
  %2199 = vmatprep.subr.bf16.mxu0 0
  %2200 = vmatpush1.bf16.msra.mxu0 %v2181
  %2201 = vmatprep.subr.bf16.mxu0 0
  %2202 = vmatpush1.bf16.msra.mxu0 %v2182
  %2203 = vmatprep.subr.bf16.mxu0 0
  %2204 = vmatpush1.bf16.msra.mxu0 %v2183
  %2205 = vmatprep.subr.bf16.mxu0 0
  %2206 = vmatpush1.bf16.msra.mxu0 %v2184
  %2207 = vmatprep.subr.bf16.mxu0 0
  %2208 = vmatpush1.bf16.msra.mxu0 %v2185
  %2209 = vmatprep.subr.bf16.mxu0 0
  %2210 = vmatpush1.bf16.msra.mxu0 %v2186
  %2211 = vmatprep.subr.bf16.mxu0 0
  %2212 = vmatpush1.bf16.msra.mxu0 0
  %2213 = vmatprep.subr.bf16.mxu0 0
  %2214 = vmatpush1.bf16.msra.mxu0 0
  %2215 = vmatprep.subr.bf16.mxu0 0
  %2216 = vmatpush1.bf16.msra.mxu0 0
  %2217 = vmatprep.subr.bf16.mxu0 0
  %2218 = vmatpush1.bf16.msra.mxu0 0
  %2219 = vmatprep.subr.bf16.mxu0 0
  %2220 = vmatpush1.bf16.msra.mxu0 0
  %2221 = vmatprep.subr.bf16.mxu0 0
  %2222 = vmatpush1.bf16.msra.mxu0 0
  %2223 = vmatprep.subr.bf16.mxu0 0
  %2224 = vmatpush1.bf16.msra.mxu0 0
  %2225 = vmatprep.subr.bf16.mxu0 0
  %2226 = vmatpush1.bf16.msra.mxu0 0
  %2227 = vmatprep.mubr.bf16.mxu0 0
  %2228 = vmatmul.mubr.bf16.gmra.mrb[0].mxu0 %v809
  %v2229 = vpop.f32.mrb[0].mxu0
  %v2230 = vadd.f32 0.0, %v2229
  %v2231 = vpop.f32.mrb[0].mxu0
  %v2232 = vpop.f32.mrb[0].mxu0
  %v2233 = vadd.f32 0.0, %v2232
  %v2234 = vpop.f32.mrb[0].mxu0
  %2235 = vmatprep.mubr.bf16.mxu0 0
  %2236 = vmatmul.mubr.bf16.gmra.mrb[0].mxu0 %v810
  %v2237 = vpop.f32.mrb[0].mxu0
  %v2238 = vadd.f32 0.0, %v2237
  %v2239 = vpop.f32.mrb[0].mxu0
  %v2240 = vpop.f32.mrb[0].mxu0
  %v2241 = vadd.f32 0.0, %v2240
  %v2242 = vpop.f32.mrb[0].mxu0
  %2243 = vmatprep.mubr.bf16.mxu0 0
  %2244 = vmatmul.mubr.bf16.gmra.mrb[0].mxu0 %v811
  %v2245 = vpop.f32.mrb[0].mxu0
  %v2246 = vadd.f32 0.0, %v2245
  %v2247 = vpop.f32.mrb[0].mxu0
  %v2248 = vpop.f32.mrb[0].mxu0
  %v2249 = vadd.f32 0.0, %v2248
  %v2250 = vpop.f32.mrb[0].mxu0
  %2251 = vmatprep.mubr.bf16.mxu0 0
  %2252 = vmatmul.mubr.bf16.gmra.mrb[0].mxu0 %v812
  %v2253 = vpop.f32.mrb[0].mxu0
  %v2254 = vadd.f32 0.0, %v2253
  %v2255 = vpop.f32.mrb[0].mxu0
  %v2256 = vpop.f32.mrb[0].mxu0
  %v2257 = vadd.f32 0.0, %v2256
  %v2258 = vpop.f32.mrb[0].mxu0
  %2259 = vmatprep.mubr.bf16.mxu0 0
  %2260 = vmatmul.mubr.bf16.gmra.mrb[0].mxu0 %v813
  %v2261 = vpop.f32.mrb[0].mxu0
  %v2262 = vadd.f32 0.0, %v2261
  %v2263 = vpop.f32.mrb[0].mxu0
  %v2264 = vpop.f32.mrb[0].mxu0
  %v2265 = vadd.f32 0.0, %v2264
  %v2266 = vpop.f32.mrb[0].mxu0
  %2267 = vmatprep.mubr.bf16.mxu0 0
  %2268 = vmatmul.mubr.bf16.gmra.mrb[0].mxu0 %v814
  %v2269 = vpop.f32.mrb[0].mxu0
  %v2270 = vadd.f32 0.0, %v2269
  %v2271 = vpop.f32.mrb[0].mxu0
  %v2272 = vpop.f32.mrb[0].mxu0
  %v2273 = vadd.f32 0.0, %v2272
  %v2274 = vpop.f32.mrb[0].mxu0
  %2275 = vmatprep.mubr.bf16.mxu0 0
  %2276 = vmatmul.mubr.bf16.gmra.mrb[0].mxu0 %v815
  %v2277 = vpop.f32.mrb[0].mxu0
  %v2278 = vadd.f32 0.0, %v2277
  %v2279 = vpop.f32.mrb[0].mxu0
  %v2280 = vpop.f32.mrb[0].mxu0
  %v2281 = vadd.f32 0.0, %v2280
  %v2282 = vpop.f32.mrb[0].mxu0
  %2283 = vmatprep.mubr.bf16.mxu0 0
  %2284 = vmatmul.mubr.bf16.gmra.mrb[0].mxu0 %v816
  %v2285 = vpop.f32.mrb[0].mxu0
  %v2286 = vadd.f32 0.0, %v2285
  %v2287 = vpop.f32.mrb[0].mxu0
  %v2288 = vpop.f32.mrb[0].mxu0
  %v2289 = vadd.f32 0.0, %v2288
  %v2290 = vpop.f32.mrb[0].mxu0
  %2291 = vdwg.mxu0
  %v2292 = vld [vmem:[%s41] sm:$0x1]
  %v2294 = vlaneseq
  %v2295 = vshrl.u32 %v2294, 7
  %v2296 = vsub.s32 0, %v2295
  %v2297 = vrot.slane %v2292, %v2296
  %v2299 = vmul.f32 %v2230, %v2297
  %v2300 = vmul.f32 %v2233, %v2297
  %v2301 = vmul.f32 %v2238, %v2297
  %v2302 = vmul.f32 %v2241, %v2297
  %v2303 = vmul.f32 %v2246, %v2297
  %v2304 = vmul.f32 %v2249, %v2297
  %v2305 = vmul.f32 %v2254, %v2297
  %v2306 = vmul.f32 %v2257, %v2297
  %v2307 = vmul.f32 %v2262, %v2297
  %v2308 = vmul.f32 %v2265, %v2297
  %v2309 = vmul.f32 %v2270, %v2297
  %v2310 = vmul.f32 %v2273, %v2297
  %v2311 = vmul.f32 %v2278, %v2297
  %v2312 = vmul.f32 %v2281, %v2297
  %v2313 = vmul.f32 %v2286, %v2297
  %v2314 = vmul.f32 %v2289, %v2297
  %v2315 = vld [vmem:[%s43] sm:$0x1]
  %v2317 = vlaneseq
  %v2318 = vshrl.u32 %v2317, 7
  %v2319 = vsub.s32 0, %v2318
  %v2320 = vrot.slane %v2315, %v2319
  %v2322 = vadd.f32 %v2299, %v2320
  %v2323 = vadd.f32 %v2300, %v2320
  %v2324 = vadd.f32 %v2301, %v2320
  %v2325 = vadd.f32 %v2302, %v2320
  %v2326 = vadd.f32 %v2303, %v2320
  %v2327 = vadd.f32 %v2304, %v2320
  %v2328 = vadd.f32 %v2305, %v2320
  %v2329 = vadd.f32 %v2306, %v2320
  %v2330 = vadd.f32 %v2307, %v2320
  %v2331 = vadd.f32 %v2308, %v2320
  %v2332 = vadd.f32 %v2309, %v2320
  %v2333 = vadd.f32 %v2310, %v2320
  %v2334 = vadd.f32 %v2311, %v2320
  %v2335 = vadd.f32 %v2312, %v2320
  %v2336 = vadd.f32 %v2313, %v2320
  %v2337 = vadd.f32 %v2314, %v2320
  %v2338 = vmax.f32 %v2322, 0.0
  %v2339 = vmax.f32 %v2323, 0.0
  %v2340 = vmax.f32 %v2324, 0.0
  %v2341 = vmax.f32 %v2325, 0.0
  %v2342 = vmax.f32 %v2326, 0.0
  %v2343 = vmax.f32 %v2327, 0.0
  %v2344 = vmax.f32 %v2328, 0.0
  %v2345 = vmax.f32 %v2329, 0.0
  %v2346 = vmax.f32 %v2330, 0.0
  %v2347 = vmax.f32 %v2331, 0.0
  %v2348 = vmax.f32 %v2332, 0.0
  %v2349 = vmax.f32 %v2333, 0.0
  %v2350 = vmax.f32 %v2334, 0.0
  %v2351 = vmax.f32 %v2335, 0.0
  %v2352 = vmax.f32 %v2336, 0.0
  %v2353 = vmax.f32 %v2337, 0.0
  %v2354 = vpack.c.bf16 %v2339, %v2338
  %v2355 = vpack.c.bf16 %v2341, %v2340
  %v2356 = vpack.c.bf16 %v2343, %v2342
  %v2357 = vpack.c.bf16 %v2345, %v2344
  %v2358 = vpack.c.bf16 %v2347, %v2346
  %v2359 = vpack.c.bf16 %v2349, %v2348
  %v2360 = vpack.c.bf16 %v2351, %v2350
  %v2361 = vpack.c.bf16 %v2353, %v2352
  %v2362 = vld [vmem:[%s45] sm:$0xf]
  %v2363 = vld [vmem:[%s45 + $0x4] sm:$0xf]
  %v2364 = vld [vmem:[%s45 + $0x8] sm:$0xf]
  %v2365 = vld [vmem:[%s45 + $0xc] sm:$0xf]
  %v2366 = vld [vmem:[%s45 + $0x10] sm:$0xf]
  %v2367 = vld [vmem:[%s45 + $0x14] sm:$0xf]
  %v2368 = vld [vmem:[%s45 + $0x18] sm:$0xf]
  %v2369 = vld [vmem:[%s45 + $0x1c] sm:$0xf]
  %v2370 = vld [vmem:[%s45 + $0x20] sm:$0xf]
  %v2371 = vld [vmem:[%s45 + $0x24] sm:$0xf]
  %v2372 = vld [vmem:[%s45 + $0x28] sm:$0xf]
  %v2373 = vld [vmem:[%s45 + $0x2c] sm:$0xf]
  %v2374 = vld [vmem:[%s45 + $0x30] sm:$0xf]
  %v2375 = vld [vmem:[%s45 + $0x34] sm:$0xf]
  %v2376 = vld [vmem:[%s45 + $0x38] sm:$0xf]
  %v2377 = vld [vmem:[%s45 + $0x3c] sm:$0xf]
  %v2378 = vld [vmem:[%s47] sm:$0x1]
  %v2380 = vlaneseq
  %v2381 = vshrl.u32 %v2380, 7
  %v2382 = vsub.s32 0, %v2381
  %v2383 = vrot.slane %v2378, %v2382
  %v2401 = vunpack.c.l.b16 %v2362
  %v2402 = vunpack.c.l.b16 %v2363
  %v2403 = vunpack.c.l.b16 %v2364
  %v2404 = vunpack.c.l.b16 %v2365
  %v2405 = vunpack.c.l.b16 %v2366
  %v2406 = vunpack.c.l.b16 %v2367
  %v2407 = vunpack.c.l.b16 %v2368
  %v2408 = vunpack.c.l.b16 %v2369
  %v2409 = vunpack.c.l.b16 %v2370
  %v2410 = vunpack.c.l.b16 %v2371
  %v2411 = vunpack.c.l.b16 %v2372
  %v2412 = vunpack.c.l.b16 %v2373
  %v2413 = vunpack.c.l.b16 %v2374
  %v2414 = vunpack.c.l.b16 %v2375
  %v2415 = vunpack.c.l.b16 %v2376
  %v2416 = vunpack.c.l.b16 %v2377
  %v2417 = vpack.c.b16 %v2402, %v2401
  %v2418 = vpack.c.b16 %v2404, %v2403
  %v2419 = vpack.c.b16 %v2406, %v2405
  %v2420 = vpack.c.b16 %v2408, %v2407
  %v2421 = vpack.c.b16 %v2410, %v2409
  %v2422 = vpack.c.b16 %v2412, %v2411
  %v2423 = vpack.c.b16 %v2414, %v2413
  %v2424 = vpack.c.b16 %v2416, %v2415
  %2433 = vmatprep.subr.bf16.mxu0 0
  %2434 = vmatpush1.bf16.msra.mxu0 %v2417
  %2435 = vmatprep.subr.bf16.mxu0 0
  %2436 = vmatpush1.bf16.msra.mxu0 %v2418
  %2437 = vmatprep.subr.bf16.mxu0 0
  %2438 = vmatpush1.bf16.msra.mxu0 %v2419
  %2439 = vmatprep.subr.bf16.mxu0 0
  %2440 = vmatpush1.bf16.msra.mxu0 %v2420
  %2441 = vmatprep.subr.bf16.mxu0 0
  %2442 = vmatpush1.bf16.msra.mxu0 %v2421
  %2443 = vmatprep.subr.bf16.mxu0 0
  %2444 = vmatpush1.bf16.msra.mxu0 %v2422
  %2445 = vmatprep.subr.bf16.mxu0 0
  %2446 = vmatpush1.bf16.msra.mxu0 %v2423
  %2447 = vmatprep.subr.bf16.mxu0 0
  %2448 = vmatpush1.bf16.msra.mxu0 %v2424
  %2449 = vmatprep.subr.bf16.mxu0 0
  %2450 = vmatpush1.bf16.msra.mxu0 0
  %2451 = vmatprep.subr.bf16.mxu0 0
  %2452 = vmatpush1.bf16.msra.mxu0 0
  %2453 = vmatprep.subr.bf16.mxu0 0
  %2454 = vmatpush1.bf16.msra.mxu0 0
  %2455 = vmatprep.subr.bf16.mxu0 0
  %2456 = vmatpush1.bf16.msra.mxu0 0
  %2457 = vmatprep.subr.bf16.mxu0 0
  %2458 = vmatpush1.bf16.msra.mxu0 0
  %2459 = vmatprep.subr.bf16.mxu0 0
  %2460 = vmatpush1.bf16.msra.mxu0 0
  %2461 = vmatprep.subr.bf16.mxu0 0
  %2462 = vmatpush1.bf16.msra.mxu0 0
  %2463 = vmatprep.subr.bf16.mxu0 0
  %2464 = vmatpush1.bf16.msra.mxu0 0
  %2465 = vmatprep.mubr.bf16.mxu0 0
  %2466 = vmatmul.mubr.bf16.gmra.mrb[0].mxu0 %v2354
  %v2467 = vpop.f32.mrb[0].mxu0
  %v2468 = vadd.f32 %v2383, %v2467
  %v2469 = vpop.f32.mrb[0].mxu0
  %v2470 = vpop.f32.mrb[0].mxu0
  %v2471 = vadd.f32 %v2383, %v2470
  %v2472 = vpop.f32.mrb[0].mxu0
  %2473 = vmatprep.mubr.bf16.mxu0 0
  %2474 = vmatmul.mubr.bf16.gmra.mrb[0].mxu0 %v2355
  %v2475 = vpop.f32.mrb[0].mxu0
  %v2476 = vadd.f32 %v2383, %v2475
  %v2477 = vpop.f32.mrb[0].mxu0
  %v2478 = vpop.f32.mrb[0].mxu0
  %v2479 = vadd.f32 %v2383, %v2478
  %v2480 = vpop.f32.mrb[0].mxu0
  %2481 = vmatprep.mubr.bf16.mxu0 0
  %2482 = vmatmul.mubr.bf16.gmra.mrb[0].mxu0 %v2356
  %v2483 = vpop.f32.mrb[0].mxu0
  %v2484 = vadd.f32 %v2383, %v2483
  %v2485 = vpop.f32.mrb[0].mxu0
  %v2486 = vpop.f32.mrb[0].mxu0
  %v2487 = vadd.f32 %v2383, %v2486
  %v2488 = vpop.f32.mrb[0].mxu0
  %2489 = vmatprep.mubr.bf16.mxu0 0
  %2490 = vmatmul.mubr.bf16.gmra.mrb[0].mxu0 %v2357
  %v2491 = vpop.f32.mrb[0].mxu0
  %v2492 = vadd.f32 %v2383, %v2491
  %v2493 = vpop.f32.mrb[0].mxu0
  %v2494 = vpop.f32.mrb[0].mxu0
  %v2495 = vadd.f32 %v2383, %v2494
  %v2496 = vpop.f32.mrb[0].mxu0
  %2497 = vmatprep.mubr.bf16.mxu0 0
  %2498 = vmatmul.mubr.bf16.gmra.mrb[0].mxu0 %v2358
  %v2499 = vpop.f32.mrb[0].mxu0
  %v2500 = vadd.f32 %v2383, %v2499
  %v2501 = vpop.f32.mrb[0].mxu0
  %v2502 = vpop.f32.mrb[0].mxu0
  %v2503 = vadd.f32 %v2383, %v2502
  %v2504 = vpop.f32.mrb[0].mxu0
  %2505 = vmatprep.mubr.bf16.mxu0 0
  %2506 = vmatmul.mubr.bf16.gmra.mrb[0].mxu0 %v2359
  %v2507 = vpop.f32.mrb[0].mxu0
  %v2508 = vadd.f32 %v2383, %v2507
  %v2509 = vpop.f32.mrb[0].mxu0
  %v2510 = vpop.f32.mrb[0].mxu0
  %v2511 = vadd.f32 %v2383, %v2510
  %v2512 = vpop.f32.mrb[0].mxu0
  %2513 = vmatprep.mubr.bf16.mxu0 0
  %2514 = vmatmul.mubr.bf16.gmra.mrb[0].mxu0 %v2360
  %v2515 = vpop.f32.mrb[0].mxu0
  %v2516 = vadd.f32 %v2383, %v2515
  %v2517 = vpop.f32.mrb[0].mxu0
  %v2518 = vpop.f32.mrb[0].mxu0
  %v2519 = vadd.f32 %v2383, %v2518
  %v2520 = vpop.f32.mrb[0].mxu0
  %2521 = vmatprep.mubr.bf16.mxu0 0
  %2522 = vmatmul.mubr.bf16.gmra.mrb[0].mxu0 %v2361
  %v2523 = vpop.f32.mrb[0].mxu0
  %v2524 = vadd.f32 %v2383, %v2523
  %v2525 = vpop.f32.mrb[0].mxu0
  %v2526 = vpop.f32.mrb[0].mxu0
  %v2527 = vadd.f32 %v2383, %v2526
  %v2528 = vpop.f32.mrb[0].mxu0
  %2529 = vdwg.mxu0
  %v2530 = vsel %vm1379, %v2468, -1e+30
  %v2531 = vsel %vm1379, %v2471, -1e+30
  %v2532 = vsel %vm1379, %v2476, -1e+30
  %v2533 = vsel %vm1379, %v2479, -1e+30
  %v2534 = vsel %vm1379, %v2484, -1e+30
  %v2535 = vsel %vm1379, %v2487, -1e+30
  %v2536 = vsel %vm1379, %v2492, -1e+30
  %v2537 = vsel %vm1379, %v2495, -1e+30
  %v2538 = vsel %vm1379, %v2500, -1e+30
  %v2539 = vsel %vm1379, %v2503, -1e+30
  %v2540 = vsel %vm1379, %v2508, -1e+30
  %v2541 = vsel %vm1379, %v2511, -1e+30
  %v2542 = vsel %vm1379, %v2516, -1e+30
  %v2543 = vsel %vm1379, %v2519, -1e+30
  %v2544 = vsel %vm1379, %v2524, -1e+30
  %v2545 = vsel %vm1379, %v2527, -1e+30
  %2546 = vmax.xlane.f32.xlu0 %v2530
  %v2547 = vpop.xlane.xlu0 %2546
  %2548 = vmax.xlane.f32.xlu0 %v2531
  %v2549 = vpop.xlane.xlu0 %2548
  %2550 = vmax.xlane.f32.xlu0 %v2532
  %v2551 = vpop.xlane.xlu0 %2550
  %2552 = vmax.xlane.f32.xlu0 %v2533
  %v2553 = vpop.xlane.xlu0 %2552
  %2554 = vmax.xlane.f32.xlu0 %v2534
  %v2555 = vpop.xlane.xlu0 %2554
  %2556 = vmax.xlane.f32.xlu0 %v2535
  %v2557 = vpop.xlane.xlu0 %2556
  %2558 = vmax.xlane.f32.xlu0 %v2536
  %v2559 = vpop.xlane.xlu0 %2558
  %2560 = vmax.xlane.f32.xlu0 %v2537
  %v2561 = vpop.xlane.xlu0 %2560
  %2562 = vmax.xlane.f32.xlu0 %v2538
  %v2563 = vpop.xlane.xlu0 %2562
  %2564 = vmax.xlane.f32.xlu0 %v2539
  %v2565 = vpop.xlane.xlu0 %2564
  %2566 = vmax.xlane.f32.xlu0 %v2540
  %v2567 = vpop.xlane.xlu0 %2566
  %2568 = vmax.xlane.f32.xlu0 %v2541
  %v2569 = vpop.xlane.xlu0 %2568
  %2570 = vmax.xlane.f32.xlu0 %v2542
  %v2571 = vpop.xlane.xlu0 %2570
  %2572 = vmax.xlane.f32.xlu0 %v2543
  %v2573 = vpop.xlane.xlu0 %2572
  %2574 = vmax.xlane.f32.xlu0 %v2544
  %v2575 = vpop.xlane.xlu0 %2574
  %2576 = vmax.xlane.f32.xlu0 %v2545
  %v2577 = vpop.xlane.xlu0 %2576
  %v2578 = vsub.f32 %v2530, %v2547
  %v2579 = vsub.f32 %v2531, %v2549
  %v2580 = vsub.f32 %v2532, %v2551
  %v2581 = vsub.f32 %v2533, %v2553
  %v2582 = vsub.f32 %v2534, %v2555
  %v2583 = vsub.f32 %v2535, %v2557
  %v2584 = vsub.f32 %v2536, %v2559
  %v2585 = vsub.f32 %v2537, %v2561
  %v2586 = vsub.f32 %v2538, %v2563
  %v2587 = vsub.f32 %v2539, %v2565
  %v2588 = vsub.f32 %v2540, %v2567
  %v2589 = vsub.f32 %v2541, %v2569
  %v2590 = vsub.f32 %v2542, %v2571
  %v2591 = vsub.f32 %v2543, %v2573
  %v2592 = vsub.f32 %v2544, %v2575
  %v2593 = vsub.f32 %v2545, %v2577
  %v2594 = vmul.f32 %v2578, 1.442695
  %v2595 = vpow.pop %v2594
  %v2596 = vmul.f32 %v2579, 1.442695
  %v2597 = vpow.pop %v2596
  %v2598 = vmul.f32 %v2580, 1.442695
  %v2599 = vpow.pop %v2598
  %v2600 = vmul.f32 %v2581, 1.442695
  %v2601 = vpow.pop %v2600
  %v2602 = vmul.f32 %v2582, 1.442695
  %v2603 = vpow.pop %v2602
  %v2604 = vmul.f32 %v2583, 1.442695
  %v2605 = vpow.pop %v2604
  %v2606 = vmul.f32 %v2584, 1.442695
  %v2607 = vpow.pop %v2606
  %v2608 = vmul.f32 %v2585, 1.442695
  %v2609 = vpow.pop %v2608
  %v2610 = vmul.f32 %v2586, 1.442695
  %v2611 = vpow.pop %v2610
  %v2612 = vmul.f32 %v2587, 1.442695
  %v2613 = vpow.pop %v2612
  %v2614 = vmul.f32 %v2588, 1.442695
  %v2615 = vpow.pop %v2614
  %v2616 = vmul.f32 %v2589, 1.442695
  %v2617 = vpow.pop %v2616
  %v2618 = vmul.f32 %v2590, 1.442695
  %v2619 = vpow.pop %v2618
  %v2620 = vmul.f32 %v2591, 1.442695
  %v2621 = vpow.pop %v2620
  %v2622 = vmul.f32 %v2592, 1.442695
  %v2623 = vpow.pop %v2622
  %v2624 = vmul.f32 %v2593, 1.442695
  %v2625 = vpow.pop %v2624
  %2626 = vadd.xlane.f32.xlu0 %v2595
  %v2627 = vpop.xlane.xlu0 %2626
  %2628 = vadd.xlane.f32.xlu0 %v2597
  %v2629 = vpop.xlane.xlu0 %2628
  %2630 = vadd.xlane.f32.xlu0 %v2599
  %v2631 = vpop.xlane.xlu0 %2630
  %2632 = vadd.xlane.f32.xlu0 %v2601
  %v2633 = vpop.xlane.xlu0 %2632
  %2634 = vadd.xlane.f32.xlu0 %v2603
  %v2635 = vpop.xlane.xlu0 %2634
  %2636 = vadd.xlane.f32.xlu0 %v2605
  %v2637 = vpop.xlane.xlu0 %2636
  %2638 = vadd.xlane.f32.xlu0 %v2607
  %v2639 = vpop.xlane.xlu0 %2638
  %2640 = vadd.xlane.f32.xlu0 %v2609
  %v2641 = vpop.xlane.xlu0 %2640
  %2642 = vadd.xlane.f32.xlu0 %v2611
  %v2643 = vpop.xlane.xlu0 %2642
  %2644 = vadd.xlane.f32.xlu0 %v2613
  %v2645 = vpop.xlane.xlu0 %2644
  %2646 = vadd.xlane.f32.xlu0 %v2615
  %v2647 = vpop.xlane.xlu0 %2646
  %2648 = vadd.xlane.f32.xlu0 %v2617
  %v2649 = vpop.xlane.xlu0 %2648
  %2650 = vadd.xlane.f32.xlu0 %v2619
  %v2651 = vpop.xlane.xlu0 %2650
  %2652 = vadd.xlane.f32.xlu0 %v2621
  %v2653 = vpop.xlane.xlu0 %2652
  %2654 = vadd.xlane.f32.xlu0 %v2623
  %v2655 = vpop.xlane.xlu0 %2654
  %2656 = vadd.xlane.f32.xlu0 %v2625
  %v2657 = vpop.xlane.xlu0 %2656
  %v2658 = vlog2.pop %v2627
  %v2659 = vmul.f32 %v2658, 0.6931472
  %v2660 = vlog2.pop %v2629
  %v2661 = vmul.f32 %v2660, 0.6931472
  %v2662 = vlog2.pop %v2631
  %v2663 = vmul.f32 %v2662, 0.6931472
  %v2664 = vlog2.pop %v2633
  %v2665 = vmul.f32 %v2664, 0.6931472
  %v2666 = vlog2.pop %v2635
  %v2667 = vmul.f32 %v2666, 0.6931472
  %v2668 = vlog2.pop %v2637
  %v2669 = vmul.f32 %v2668, 0.6931472
  %v2670 = vlog2.pop %v2639
  %v2671 = vmul.f32 %v2670, 0.6931472
  %v2672 = vlog2.pop %v2641
  %v2673 = vmul.f32 %v2672, 0.6931472
  %v2674 = vlog2.pop %v2643
  %v2675 = vmul.f32 %v2674, 0.6931472
  %v2676 = vlog2.pop %v2645
  %v2677 = vmul.f32 %v2676, 0.6931472
  %v2678 = vlog2.pop %v2647
  %v2679 = vmul.f32 %v2678, 0.6931472
  %v2680 = vlog2.pop %v2649
  %v2681 = vmul.f32 %v2680, 0.6931472
  %v2682 = vlog2.pop %v2651
  %v2683 = vmul.f32 %v2682, 0.6931472
  %v2684 = vlog2.pop %v2653
  %v2685 = vmul.f32 %v2684, 0.6931472
  %v2686 = vlog2.pop %v2655
  %v2687 = vmul.f32 %v2686, 0.6931472
  %v2688 = vlog2.pop %v2657
  %v2689 = vmul.f32 %v2688, 0.6931472
  %v2690 = vsub.f32 %v2578, %v2659
  %v2691 = vsub.f32 %v2579, %v2661
  %v2692 = vsub.f32 %v2580, %v2663
  %v2693 = vsub.f32 %v2581, %v2665
  %v2694 = vsub.f32 %v2582, %v2667
  %v2695 = vsub.f32 %v2583, %v2669
  %v2696 = vsub.f32 %v2584, %v2671
  %v2697 = vsub.f32 %v2585, %v2673
  %v2698 = vsub.f32 %v2586, %v2675
  %v2699 = vsub.f32 %v2587, %v2677
  %v2700 = vsub.f32 %v2588, %v2679
  %v2701 = vsub.f32 %v2589, %v2681
  %v2702 = vsub.f32 %v2590, %v2683
  %v2703 = vsub.f32 %v2591, %v2685
  %v2704 = vsub.f32 %v2592, %v2687
  %v2705 = vsub.f32 %v2593, %v2689
  %v2706 = vld [vmem:[%s49] sm:$0xf]
  %v2707 = vld [vmem:[%s49 + $0x4] sm:$0xf]
  %v2708 = vld [vmem:[%s49 + $0x8] sm:$0xf]
  %v2709 = vld [vmem:[%s49 + $0xc] sm:$0xf]
  %v2710 = vld [vmem:[%s49 + $0x10] sm:$0xf]
  %v2711 = vld [vmem:[%s49 + $0x14] sm:$0xf]
  %v2712 = vld [vmem:[%s49 + $0x18] sm:$0xf]
  %v2713 = vld [vmem:[%s49 + $0x1c] sm:$0xf]
  %v2714 = vld [vmem:[%s49 + $0x20] sm:$0xf]
  %v2715 = vld [vmem:[%s49 + $0x24] sm:$0xf]
  %v2716 = vld [vmem:[%s49 + $0x28] sm:$0xf]
  %v2717 = vld [vmem:[%s49 + $0x2c] sm:$0xf]
  %v2718 = vld [vmem:[%s49 + $0x30] sm:$0xf]
  %v2719 = vld [vmem:[%s49 + $0x34] sm:$0xf]
  %v2720 = vld [vmem:[%s49 + $0x38] sm:$0xf]
  %v2721 = vld [vmem:[%s49 + $0x3c] sm:$0xf]
  %v2738 = vunpack.c.l.b16 %v2706
  %v2739 = vunpack.c.l.b16 %v2707
  %v2740 = vunpack.c.l.b16 %v2708
  %v2741 = vunpack.c.l.b16 %v2709
  %v2742 = vunpack.c.l.b16 %v2710
  %v2743 = vunpack.c.l.b16 %v2711
  %v2744 = vunpack.c.l.b16 %v2712
  %v2745 = vunpack.c.l.b16 %v2713
  %v2746 = vunpack.c.l.b16 %v2714
  %v2747 = vunpack.c.l.b16 %v2715
  %v2748 = vunpack.c.l.b16 %v2716
  %v2749 = vunpack.c.l.b16 %v2717
  %v2750 = vunpack.c.l.b16 %v2718
  %v2751 = vunpack.c.l.b16 %v2719
  %v2752 = vunpack.c.l.b16 %v2720
  %v2753 = vunpack.c.l.b16 %v2721
  %v2754 = vpack.c.b16 %v2739, %v2738
  %v2755 = vpack.c.b16 %v2741, %v2740
  %v2756 = vpack.c.b16 %v2743, %v2742
  %v2757 = vpack.c.b16 %v2745, %v2744
  %v2758 = vpack.c.b16 %v2747, %v2746
  %v2759 = vpack.c.b16 %v2749, %v2748
  %v2760 = vpack.c.b16 %v2751, %v2750
  %v2761 = vpack.c.b16 %v2753, %v2752
  %2770 = vmatprep.subr.bf16.mxu0 0
  %2771 = vmatpush1.bf16.msra.mxu0 %v2754
  %2772 = vmatprep.subr.bf16.mxu0 0
  %2773 = vmatpush1.bf16.msra.mxu0 %v2755
  %2774 = vmatprep.subr.bf16.mxu0 0
  %2775 = vmatpush1.bf16.msra.mxu0 %v2756
  %2776 = vmatprep.subr.bf16.mxu0 0
  %2777 = vmatpush1.bf16.msra.mxu0 %v2757
  %2778 = vmatprep.subr.bf16.mxu0 0
  %2779 = vmatpush1.bf16.msra.mxu0 %v2758
  %2780 = vmatprep.subr.bf16.mxu0 0
  %2781 = vmatpush1.bf16.msra.mxu0 %v2759
  %2782 = vmatprep.subr.bf16.mxu0 0
  %2783 = vmatpush1.bf16.msra.mxu0 %v2760
  %2784 = vmatprep.subr.bf16.mxu0 0
  %2785 = vmatpush1.bf16.msra.mxu0 %v2761
  %2786 = vmatprep.subr.bf16.mxu0 0
  %2787 = vmatpush1.bf16.msra.mxu0 0
  %2788 = vmatprep.subr.bf16.mxu0 0
  %2789 = vmatpush1.bf16.msra.mxu0 0
  %2790 = vmatprep.subr.bf16.mxu0 0
  %2791 = vmatpush1.bf16.msra.mxu0 0
  %2792 = vmatprep.subr.bf16.mxu0 0
  %2793 = vmatpush1.bf16.msra.mxu0 0
  %2794 = vmatprep.subr.bf16.mxu0 0
  %2795 = vmatpush1.bf16.msra.mxu0 0
  %2796 = vmatprep.subr.bf16.mxu0 0
  %2797 = vmatpush1.bf16.msra.mxu0 0
  %2798 = vmatprep.subr.bf16.mxu0 0
  %2799 = vmatpush1.bf16.msra.mxu0 0
  %2800 = vmatprep.subr.bf16.mxu0 0
  %2801 = vmatpush1.bf16.msra.mxu0 0
  %2802 = vmatprep.mubr.bf16.mxu0 0
  %2803 = vmatmul.mubr.bf16.gmra.mrb[0].mxu0 %v1201
  %v2804 = vpop.f32.mrb[0].mxu0
  %v2805 = vadd.f32 0.0, %v2804
  %v2806 = vpop.f32.mrb[0].mxu0
  %v2807 = vpop.f32.mrb[0].mxu0
  %v2808 = vadd.f32 0.0, %v2807
  %v2809 = vpop.f32.mrb[0].mxu0
  %2810 = vmatprep.mubr.bf16.mxu0 0
  %2811 = vmatmul.mubr.bf16.gmra.mrb[0].mxu0 %v1202
  %v2812 = vpop.f32.mrb[0].mxu0
  %v2813 = vadd.f32 0.0, %v2812
  %v2814 = vpop.f32.mrb[0].mxu0
  %v2815 = vpop.f32.mrb[0].mxu0
  %v2816 = vadd.f32 0.0, %v2815
  %v2817 = vpop.f32.mrb[0].mxu0
  %2818 = vmatprep.mubr.bf16.mxu0 0
  %2819 = vmatmul.mubr.bf16.gmra.mrb[0].mxu0 %v1203
  %v2820 = vpop.f32.mrb[0].mxu0
  %v2821 = vadd.f32 0.0, %v2820
  %v2822 = vpop.f32.mrb[0].mxu0
  %v2823 = vpop.f32.mrb[0].mxu0
  %v2824 = vadd.f32 0.0, %v2823
  %v2825 = vpop.f32.mrb[0].mxu0
  %2826 = vmatprep.mubr.bf16.mxu0 0
  %2827 = vmatmul.mubr.bf16.gmra.mrb[0].mxu0 %v1204
  %v2828 = vpop.f32.mrb[0].mxu0
  %v2829 = vadd.f32 0.0, %v2828
  %v2830 = vpop.f32.mrb[0].mxu0
  %v2831 = vpop.f32.mrb[0].mxu0
  %v2832 = vadd.f32 0.0, %v2831
  %v2833 = vpop.f32.mrb[0].mxu0
  %2834 = vmatprep.mubr.bf16.mxu0 0
  %2835 = vmatmul.mubr.bf16.gmra.mrb[0].mxu0 %v1205
  %v2836 = vpop.f32.mrb[0].mxu0
  %v2837 = vadd.f32 0.0, %v2836
  %v2838 = vpop.f32.mrb[0].mxu0
  %v2839 = vpop.f32.mrb[0].mxu0
  %v2840 = vadd.f32 0.0, %v2839
  %v2841 = vpop.f32.mrb[0].mxu0
  %2842 = vmatprep.mubr.bf16.mxu0 0
  %2843 = vmatmul.mubr.bf16.gmra.mrb[0].mxu0 %v1206
  %v2844 = vpop.f32.mrb[0].mxu0
  %v2845 = vadd.f32 0.0, %v2844
  %v2846 = vpop.f32.mrb[0].mxu0
  %v2847 = vpop.f32.mrb[0].mxu0
  %v2848 = vadd.f32 0.0, %v2847
  %v2849 = vpop.f32.mrb[0].mxu0
  %2850 = vmatprep.mubr.bf16.mxu0 0
  %2851 = vmatmul.mubr.bf16.gmra.mrb[0].mxu0 %v1207
  %v2852 = vpop.f32.mrb[0].mxu0
  %v2853 = vadd.f32 0.0, %v2852
  %v2854 = vpop.f32.mrb[0].mxu0
  %v2855 = vpop.f32.mrb[0].mxu0
  %v2856 = vadd.f32 0.0, %v2855
  %v2857 = vpop.f32.mrb[0].mxu0
  %2858 = vmatprep.mubr.bf16.mxu0 0
  %2859 = vmatmul.mubr.bf16.gmra.mrb[0].mxu0 %v1208
  %v2860 = vpop.f32.mrb[0].mxu0
  %v2861 = vadd.f32 0.0, %v2860
  %v2862 = vpop.f32.mrb[0].mxu0
  %v2863 = vpop.f32.mrb[0].mxu0
  %v2864 = vadd.f32 0.0, %v2863
  %v2865 = vpop.f32.mrb[0].mxu0
  %2866 = vdwg.mxu0
  %v2867 = vld [vmem:[%s51] sm:$0x1]
  %v2869 = vlaneseq
  %v2870 = vshrl.u32 %v2869, 7
  %v2871 = vsub.s32 0, %v2870
  %v2872 = vrot.slane %v2867, %v2871
  %v2874 = vmul.f32 %v2805, %v2872
  %v2875 = vmul.f32 %v2808, %v2872
  %v2876 = vmul.f32 %v2813, %v2872
  %v2877 = vmul.f32 %v2816, %v2872
  %v2878 = vmul.f32 %v2821, %v2872
  %v2879 = vmul.f32 %v2824, %v2872
  %v2880 = vmul.f32 %v2829, %v2872
  %v2881 = vmul.f32 %v2832, %v2872
  %v2882 = vmul.f32 %v2837, %v2872
  %v2883 = vmul.f32 %v2840, %v2872
  %v2884 = vmul.f32 %v2845, %v2872
  %v2885 = vmul.f32 %v2848, %v2872
  %v2886 = vmul.f32 %v2853, %v2872
  %v2887 = vmul.f32 %v2856, %v2872
  %v2888 = vmul.f32 %v2861, %v2872
  %v2889 = vmul.f32 %v2864, %v2872
  %v2890 = vld [vmem:[%s53] sm:$0x1]
  %v2892 = vlaneseq
  %v2893 = vshrl.u32 %v2892, 7
  %v2894 = vsub.s32 0, %v2893
  %v2895 = vrot.slane %v2890, %v2894
  %v2897 = vadd.f32 %v2874, %v2895
  %v2898 = vadd.f32 %v2875, %v2895
  %v2899 = vadd.f32 %v2876, %v2895
  %v2900 = vadd.f32 %v2877, %v2895
  %v2901 = vadd.f32 %v2878, %v2895
  %v2902 = vadd.f32 %v2879, %v2895
  %v2903 = vadd.f32 %v2880, %v2895
  %v2904 = vadd.f32 %v2881, %v2895
  %v2905 = vadd.f32 %v2882, %v2895
  %v2906 = vadd.f32 %v2883, %v2895
  %v2907 = vadd.f32 %v2884, %v2895
  %v2908 = vadd.f32 %v2885, %v2895
  %v2909 = vadd.f32 %v2886, %v2895
  %v2910 = vadd.f32 %v2887, %v2895
  %v2911 = vadd.f32 %v2888, %v2895
  %v2912 = vadd.f32 %v2889, %v2895
  %v2913 = vmax.f32 %v2897, 0.0
  %v2914 = vmax.f32 %v2898, 0.0
  %v2915 = vmax.f32 %v2899, 0.0
  %v2916 = vmax.f32 %v2900, 0.0
  %v2917 = vmax.f32 %v2901, 0.0
  %v2918 = vmax.f32 %v2902, 0.0
  %v2919 = vmax.f32 %v2903, 0.0
  %v2920 = vmax.f32 %v2904, 0.0
  %v2921 = vmax.f32 %v2905, 0.0
  %v2922 = vmax.f32 %v2906, 0.0
  %v2923 = vmax.f32 %v2907, 0.0
  %v2924 = vmax.f32 %v2908, 0.0
  %v2925 = vmax.f32 %v2909, 0.0
  %v2926 = vmax.f32 %v2910, 0.0
  %v2927 = vmax.f32 %v2911, 0.0
  %v2928 = vmax.f32 %v2912, 0.0
  %v2929 = vpack.c.bf16 %v2914, %v2913
  %v2930 = vpack.c.bf16 %v2916, %v2915
  %v2931 = vpack.c.bf16 %v2918, %v2917
  %v2932 = vpack.c.bf16 %v2920, %v2919
  %v2933 = vpack.c.bf16 %v2922, %v2921
  %v2934 = vpack.c.bf16 %v2924, %v2923
  %v2935 = vpack.c.bf16 %v2926, %v2925
  %v2936 = vpack.c.bf16 %v2928, %v2927
  %v2937 = vld [vmem:[%s55] sm:$0xf]
  %v2938 = vld [vmem:[%s55 + $0x4] sm:$0xf]
  %v2939 = vld [vmem:[%s55 + $0x8] sm:$0xf]
  %v2940 = vld [vmem:[%s55 + $0xc] sm:$0xf]
  %v2941 = vld [vmem:[%s55 + $0x10] sm:$0xf]
  %v2942 = vld [vmem:[%s55 + $0x14] sm:$0xf]
  %v2943 = vld [vmem:[%s55 + $0x18] sm:$0xf]
  %v2944 = vld [vmem:[%s55 + $0x1c] sm:$0xf]
  %v2945 = vld [vmem:[%s55 + $0x20] sm:$0xf]
  %v2946 = vld [vmem:[%s55 + $0x24] sm:$0xf]
  %v2947 = vld [vmem:[%s55 + $0x28] sm:$0xf]
  %v2948 = vld [vmem:[%s55 + $0x2c] sm:$0xf]
  %v2949 = vld [vmem:[%s55 + $0x30] sm:$0xf]
  %v2950 = vld [vmem:[%s55 + $0x34] sm:$0xf]
  %v2951 = vld [vmem:[%s55 + $0x38] sm:$0xf]
  %v2952 = vld [vmem:[%s55 + $0x3c] sm:$0xf]
  %v2953 = vld [vmem:[%s57] sm:$0x1]
  %v2955 = vlaneseq
  %v2956 = vshrl.u32 %v2955, 7
  %v2957 = vsub.s32 0, %v2956
  %v2958 = vrot.slane %v2953, %v2957
  %v2976 = vunpack.c.l.b16 %v2937
  %v2977 = vunpack.c.l.b16 %v2938
  %v2978 = vunpack.c.l.b16 %v2939
  %v2979 = vunpack.c.l.b16 %v2940
  %v2980 = vunpack.c.l.b16 %v2941
  %v2981 = vunpack.c.l.b16 %v2942
  %v2982 = vunpack.c.l.b16 %v2943
  %v2983 = vunpack.c.l.b16 %v2944
  %v2984 = vunpack.c.l.b16 %v2945
  %v2985 = vunpack.c.l.b16 %v2946
  %v2986 = vunpack.c.l.b16 %v2947
  %v2987 = vunpack.c.l.b16 %v2948
  %v2988 = vunpack.c.l.b16 %v2949
  %v2989 = vunpack.c.l.b16 %v2950
  %v2990 = vunpack.c.l.b16 %v2951
  %v2991 = vunpack.c.l.b16 %v2952
  %v2992 = vpack.c.b16 %v2977, %v2976
  %v2993 = vpack.c.b16 %v2979, %v2978
  %v2994 = vpack.c.b16 %v2981, %v2980
  %v2995 = vpack.c.b16 %v2983, %v2982
  %v2996 = vpack.c.b16 %v2985, %v2984
  %v2997 = vpack.c.b16 %v2987, %v2986
  %v2998 = vpack.c.b16 %v2989, %v2988
  %v2999 = vpack.c.b16 %v2991, %v2990
  %3008 = vmatprep.subr.bf16.mxu0 0
  %3009 = vmatpush1.bf16.msra.mxu0 %v2992
  %3010 = vmatprep.subr.bf16.mxu0 0
  %3011 = vmatpush1.bf16.msra.mxu0 %v2993
  %3012 = vmatprep.subr.bf16.mxu0 0
  %3013 = vmatpush1.bf16.msra.mxu0 %v2994
  %3014 = vmatprep.subr.bf16.mxu0 0
  %3015 = vmatpush1.bf16.msra.mxu0 %v2995
  %3016 = vmatprep.subr.bf16.mxu0 0
  %3017 = vmatpush1.bf16.msra.mxu0 %v2996
  %3018 = vmatprep.subr.bf16.mxu0 0
  %3019 = vmatpush1.bf16.msra.mxu0 %v2997
  %3020 = vmatprep.subr.bf16.mxu0 0
  %3021 = vmatpush1.bf16.msra.mxu0 %v2998
  %3022 = vmatprep.subr.bf16.mxu0 0
  %3023 = vmatpush1.bf16.msra.mxu0 %v2999
  %3024 = vmatprep.subr.bf16.mxu0 0
  %3025 = vmatpush1.bf16.msra.mxu0 0
  %3026 = vmatprep.subr.bf16.mxu0 0
  %3027 = vmatpush1.bf16.msra.mxu0 0
  %3028 = vmatprep.subr.bf16.mxu0 0
  %3029 = vmatpush1.bf16.msra.mxu0 0
  %3030 = vmatprep.subr.bf16.mxu0 0
  %3031 = vmatpush1.bf16.msra.mxu0 0
  %3032 = vmatprep.subr.bf16.mxu0 0
  %3033 = vmatpush1.bf16.msra.mxu0 0
  %3034 = vmatprep.subr.bf16.mxu0 0
  %3035 = vmatpush1.bf16.msra.mxu0 0
  %3036 = vmatprep.subr.bf16.mxu0 0
  %3037 = vmatpush1.bf16.msra.mxu0 0
  %3038 = vmatprep.subr.bf16.mxu0 0
  %3039 = vmatpush1.bf16.msra.mxu0 0
  %3040 = vmatprep.mubr.bf16.mxu0 0
  %3041 = vmatmul.mubr.bf16.gmra.mrb[0].mxu0 %v2929
  %v3042 = vpop.f32.mrb[0].mxu0
  %v3043 = vadd.f32 %v2958, %v3042
  %v3044 = vpop.f32.mrb[0].mxu0
  %v3045 = vpop.f32.mrb[0].mxu0
  %v3046 = vadd.f32 %v2958, %v3045
  %v3047 = vpop.f32.mrb[0].mxu0
  %3048 = vmatprep.mubr.bf16.mxu0 0
  %3049 = vmatmul.mubr.bf16.gmra.mrb[0].mxu0 %v2930
  %v3050 = vpop.f32.mrb[0].mxu0
  %v3051 = vadd.f32 %v2958, %v3050
  %v3052 = vpop.f32.mrb[0].mxu0
  %v3053 = vpop.f32.mrb[0].mxu0
  %v3054 = vadd.f32 %v2958, %v3053
  %v3055 = vpop.f32.mrb[0].mxu0
  %3056 = vmatprep.mubr.bf16.mxu0 0
  %3057 = vmatmul.mubr.bf16.gmra.mrb[0].mxu0 %v2931
  %v3058 = vpop.f32.mrb[0].mxu0
  %v3059 = vadd.f32 %v2958, %v3058
  %v3060 = vpop.f32.mrb[0].mxu0
  %v3061 = vpop.f32.mrb[0].mxu0
  %v3062 = vadd.f32 %v2958, %v3061
  %v3063 = vpop.f32.mrb[0].mxu0
  %3064 = vmatprep.mubr.bf16.mxu0 0
  %3065 = vmatmul.mubr.bf16.gmra.mrb[0].mxu0 %v2932
  %v3066 = vpop.f32.mrb[0].mxu0
  %v3067 = vadd.f32 %v2958, %v3066
  %v3068 = vpop.f32.mrb[0].mxu0
  %v3069 = vpop.f32.mrb[0].mxu0
  %v3070 = vadd.f32 %v2958, %v3069
  %v3071 = vpop.f32.mrb[0].mxu0
  %3072 = vmatprep.mubr.bf16.mxu0 0
  %3073 = vmatmul.mubr.bf16.gmra.mrb[0].mxu0 %v2933
  %v3074 = vpop.f32.mrb[0].mxu0
  %v3075 = vadd.f32 %v2958, %v3074
  %v3076 = vpop.f32.mrb[0].mxu0
  %v3077 = vpop.f32.mrb[0].mxu0
  %v3078 = vadd.f32 %v2958, %v3077
  %v3079 = vpop.f32.mrb[0].mxu0
  %3080 = vmatprep.mubr.bf16.mxu0 0
  %3081 = vmatmul.mubr.bf16.gmra.mrb[0].mxu0 %v2934
  %v3082 = vpop.f32.mrb[0].mxu0
  %v3083 = vadd.f32 %v2958, %v3082
  %v3084 = vpop.f32.mrb[0].mxu0
  %v3085 = vpop.f32.mrb[0].mxu0
  %v3086 = vadd.f32 %v2958, %v3085
  %v3087 = vpop.f32.mrb[0].mxu0
  %3088 = vmatprep.mubr.bf16.mxu0 0
  %3089 = vmatmul.mubr.bf16.gmra.mrb[0].mxu0 %v2935
  %v3090 = vpop.f32.mrb[0].mxu0
  %v3091 = vadd.f32 %v2958, %v3090
  %v3092 = vpop.f32.mrb[0].mxu0
  %v3093 = vpop.f32.mrb[0].mxu0
  %v3094 = vadd.f32 %v2958, %v3093
  %v3095 = vpop.f32.mrb[0].mxu0
  %3096 = vmatprep.mubr.bf16.mxu0 0
  %3097 = vmatmul.mubr.bf16.gmra.mrb[0].mxu0 %v2936
  %v3098 = vpop.f32.mrb[0].mxu0
  %v3099 = vadd.f32 %v2958, %v3098
  %v3100 = vpop.f32.mrb[0].mxu0
  %v3101 = vpop.f32.mrb[0].mxu0
  %v3102 = vadd.f32 %v2958, %v3101
  %v3103 = vpop.f32.mrb[0].mxu0
  %3104 = vdwg.mxu0
  %v3105 = vsel %vm1379, %v3043, -1e+30
  %v3106 = vsel %vm1379, %v3046, -1e+30
  %v3107 = vsel %vm1379, %v3051, -1e+30
  %v3108 = vsel %vm1379, %v3054, -1e+30
  %v3109 = vsel %vm1379, %v3059, -1e+30
  %v3110 = vsel %vm1379, %v3062, -1e+30
  %v3111 = vsel %vm1379, %v3067, -1e+30
  %v3112 = vsel %vm1379, %v3070, -1e+30
  %v3113 = vsel %vm1379, %v3075, -1e+30
  %v3114 = vsel %vm1379, %v3078, -1e+30
  %v3115 = vsel %vm1379, %v3083, -1e+30
  %v3116 = vsel %vm1379, %v3086, -1e+30
  %v3117 = vsel %vm1379, %v3091, -1e+30
  %v3118 = vsel %vm1379, %v3094, -1e+30
  %v3119 = vsel %vm1379, %v3099, -1e+30
  %v3120 = vsel %vm1379, %v3102, -1e+30
  %3121 = vmax.xlane.f32.xlu0 %v3105
  %v3122 = vpop.xlane.xlu0 %3121
  %3123 = vmax.xlane.f32.xlu0 %v3106
  %v3124 = vpop.xlane.xlu0 %3123
  %3125 = vmax.xlane.f32.xlu0 %v3107
  %v3126 = vpop.xlane.xlu0 %3125
  %3127 = vmax.xlane.f32.xlu0 %v3108
  %v3128 = vpop.xlane.xlu0 %3127
  %3129 = vmax.xlane.f32.xlu0 %v3109
  %v3130 = vpop.xlane.xlu0 %3129
  %3131 = vmax.xlane.f32.xlu0 %v3110
  %v3132 = vpop.xlane.xlu0 %3131
  %3133 = vmax.xlane.f32.xlu0 %v3111
  %v3134 = vpop.xlane.xlu0 %3133
  %3135 = vmax.xlane.f32.xlu0 %v3112
  %v3136 = vpop.xlane.xlu0 %3135
  %3137 = vmax.xlane.f32.xlu0 %v3113
  %v3138 = vpop.xlane.xlu0 %3137
  %3139 = vmax.xlane.f32.xlu0 %v3114
  %v3140 = vpop.xlane.xlu0 %3139
  %3141 = vmax.xlane.f32.xlu0 %v3115
  %v3142 = vpop.xlane.xlu0 %3141
  %3143 = vmax.xlane.f32.xlu0 %v3116
  %v3144 = vpop.xlane.xlu0 %3143
  %3145 = vmax.xlane.f32.xlu0 %v3117
  %v3146 = vpop.xlane.xlu0 %3145
  %3147 = vmax.xlane.f32.xlu0 %v3118
  %v3148 = vpop.xlane.xlu0 %3147
  %3149 = vmax.xlane.f32.xlu0 %v3119
  %v3150 = vpop.xlane.xlu0 %3149
  %3151 = vmax.xlane.f32.xlu0 %v3120
  %v3152 = vpop.xlane.xlu0 %3151
  %v3153 = vsub.f32 %v3105, %v3122
  %v3154 = vsub.f32 %v3106, %v3124
  %v3155 = vsub.f32 %v3107, %v3126
  %v3156 = vsub.f32 %v3108, %v3128
  %v3157 = vsub.f32 %v3109, %v3130
  %v3158 = vsub.f32 %v3110, %v3132
  %v3159 = vsub.f32 %v3111, %v3134
  %v3160 = vsub.f32 %v3112, %v3136
  %v3161 = vsub.f32 %v3113, %v3138
  %v3162 = vsub.f32 %v3114, %v3140
  %v3163 = vsub.f32 %v3115, %v3142
  %v3164 = vsub.f32 %v3116, %v3144
  %v3165 = vsub.f32 %v3117, %v3146
  %v3166 = vsub.f32 %v3118, %v3148
  %v3167 = vsub.f32 %v3119, %v3150
  %v3168 = vsub.f32 %v3120, %v3152
  %v3169 = vmul.f32 %v3153, 1.442695
  %v3170 = vpow.pop %v3169
  %v3171 = vmul.f32 %v3154, 1.442695
  %v3172 = vpow.pop %v3171
  %v3173 = vmul.f32 %v3155, 1.442695
  %v3174 = vpow.pop %v3173
  %v3175 = vmul.f32 %v3156, 1.442695
  %v3176 = vpow.pop %v3175
  %v3177 = vmul.f32 %v3157, 1.442695
  %v3178 = vpow.pop %v3177
  %v3179 = vmul.f32 %v3158, 1.442695
  %v3180 = vpow.pop %v3179
  %v3181 = vmul.f32 %v3159, 1.442695
  %v3182 = vpow.pop %v3181
  %v3183 = vmul.f32 %v3160, 1.442695
  %v3184 = vpow.pop %v3183
  %v3185 = vmul.f32 %v3161, 1.442695
  %v3186 = vpow.pop %v3185
  %v3187 = vmul.f32 %v3162, 1.442695
  %v3188 = vpow.pop %v3187
  %v3189 = vmul.f32 %v3163, 1.442695
  %v3190 = vpow.pop %v3189
  %v3191 = vmul.f32 %v3164, 1.442695
  %v3192 = vpow.pop %v3191
  %v3193 = vmul.f32 %v3165, 1.442695
  %v3194 = vpow.pop %v3193
  %v3195 = vmul.f32 %v3166, 1.442695
  %v3196 = vpow.pop %v3195
  %v3197 = vmul.f32 %v3167, 1.442695
  %v3198 = vpow.pop %v3197
  %v3199 = vmul.f32 %v3168, 1.442695
  %v3200 = vpow.pop %v3199
  %3201 = vadd.xlane.f32.xlu0 %v3170
  %v3202 = vpop.xlane.xlu0 %3201
  %3203 = vadd.xlane.f32.xlu0 %v3172
  %v3204 = vpop.xlane.xlu0 %3203
  %3205 = vadd.xlane.f32.xlu0 %v3174
  %v3206 = vpop.xlane.xlu0 %3205
  %3207 = vadd.xlane.f32.xlu0 %v3176
  %v3208 = vpop.xlane.xlu0 %3207
  %3209 = vadd.xlane.f32.xlu0 %v3178
  %v3210 = vpop.xlane.xlu0 %3209
  %3211 = vadd.xlane.f32.xlu0 %v3180
  %v3212 = vpop.xlane.xlu0 %3211
  %3213 = vadd.xlane.f32.xlu0 %v3182
  %v3214 = vpop.xlane.xlu0 %3213
  %3215 = vadd.xlane.f32.xlu0 %v3184
  %v3216 = vpop.xlane.xlu0 %3215
  %3217 = vadd.xlane.f32.xlu0 %v3186
  %v3218 = vpop.xlane.xlu0 %3217
  %3219 = vadd.xlane.f32.xlu0 %v3188
  %v3220 = vpop.xlane.xlu0 %3219
  %3221 = vadd.xlane.f32.xlu0 %v3190
  %v3222 = vpop.xlane.xlu0 %3221
  %3223 = vadd.xlane.f32.xlu0 %v3192
  %v3224 = vpop.xlane.xlu0 %3223
  %3225 = vadd.xlane.f32.xlu0 %v3194
  %v3226 = vpop.xlane.xlu0 %3225
  %3227 = vadd.xlane.f32.xlu0 %v3196
  %v3228 = vpop.xlane.xlu0 %3227
  %3229 = vadd.xlane.f32.xlu0 %v3198
  %v3230 = vpop.xlane.xlu0 %3229
  %3231 = vadd.xlane.f32.xlu0 %v3200
  %v3232 = vpop.xlane.xlu0 %3231
  %v3233 = vlog2.pop %v3202
  %v3234 = vmul.f32 %v3233, 0.6931472
  %v3235 = vlog2.pop %v3204
  %v3236 = vmul.f32 %v3235, 0.6931472
  %v3237 = vlog2.pop %v3206
  %v3238 = vmul.f32 %v3237, 0.6931472
  %v3239 = vlog2.pop %v3208
  %v3240 = vmul.f32 %v3239, 0.6931472
  %v3241 = vlog2.pop %v3210
  %v3242 = vmul.f32 %v3241, 0.6931472
  %v3243 = vlog2.pop %v3212
  %v3244 = vmul.f32 %v3243, 0.6931472
  %v3245 = vlog2.pop %v3214
  %v3246 = vmul.f32 %v3245, 0.6931472
  %v3247 = vlog2.pop %v3216
  %v3248 = vmul.f32 %v3247, 0.6931472
  %v3249 = vlog2.pop %v3218
  %v3250 = vmul.f32 %v3249, 0.6931472
  %v3251 = vlog2.pop %v3220
  %v3252 = vmul.f32 %v3251, 0.6931472
  %v3253 = vlog2.pop %v3222
  %v3254 = vmul.f32 %v3253, 0.6931472
  %v3255 = vlog2.pop %v3224
  %v3256 = vmul.f32 %v3255, 0.6931472
  %v3257 = vlog2.pop %v3226
  %v3258 = vmul.f32 %v3257, 0.6931472
  %v3259 = vlog2.pop %v3228
  %v3260 = vmul.f32 %v3259, 0.6931472
  %v3261 = vlog2.pop %v3230
  %v3262 = vmul.f32 %v3261, 0.6931472
  %v3263 = vlog2.pop %v3232
  %v3264 = vmul.f32 %v3263, 0.6931472
  %v3265 = vsub.f32 %v3153, %v3234
  %v3266 = vsub.f32 %v3154, %v3236
  %v3267 = vsub.f32 %v3155, %v3238
  %v3268 = vsub.f32 %v3156, %v3240
  %v3269 = vsub.f32 %v3157, %v3242
  %v3270 = vsub.f32 %v3158, %v3244
  %v3271 = vsub.f32 %v3159, %v3246
  %v3272 = vsub.f32 %v3160, %v3248
  %v3273 = vsub.f32 %v3161, %v3250
  %v3274 = vsub.f32 %v3162, %v3252
  %v3275 = vsub.f32 %v3163, %v3254
  %v3276 = vsub.f32 %v3164, %v3256
  %v3277 = vsub.f32 %v3165, %v3258
  %v3278 = vsub.f32 %v3166, %v3260
  %v3279 = vsub.f32 %v3167, %v3262
  %v3280 = vsub.f32 %v3168, %v3264
  %3281 = vst [vmem:[%s59] sm:$0xff] %v1540
  %3282 = vst [vmem:[%s59 + $0x8] sm:$0xff] %v1541
  %3283 = vst [vmem:[%s59 + $0x10] sm:$0xff] %v1542
  %3284 = vst [vmem:[%s59 + $0x18] sm:$0xff] %v1543
  %3285 = vst [vmem:[%s59 + $0x20] sm:$0xff] %v1544
  %3286 = vst [vmem:[%s59 + $0x28] sm:$0xff] %v1545
  %3287 = vst [vmem:[%s59 + $0x30] sm:$0xff] %v1546
  %3288 = vst [vmem:[%s59 + $0x38] sm:$0xff] %v1547
  %3289 = vst [vmem:[%s59 + $0x40] sm:$0xff] %v1548
  %3290 = vst [vmem:[%s59 + $0x48] sm:$0xff] %v1549
  %3291 = vst [vmem:[%s59 + $0x50] sm:$0xff] %v1550
  %3292 = vst [vmem:[%s59 + $0x58] sm:$0xff] %v1551
  %3293 = vst [vmem:[%s59 + $0x60] sm:$0xff] %v1552
  %3294 = vst [vmem:[%s59 + $0x68] sm:$0xff] %v1553
  %3295 = vst [vmem:[%s59 + $0x70] sm:$0xff] %v1554
  %3296 = vst [vmem:[%s59 + $0x78] sm:$0xff] %v1555
  %3297 = vst [vmem:[%s61] sm:$0xff] %v2115
  %3298 = vst [vmem:[%s61 + $0x8] sm:$0xff] %v2116
  %3299 = vst [vmem:[%s61 + $0x10] sm:$0xff] %v2117
  %3300 = vst [vmem:[%s61 + $0x18] sm:$0xff] %v2118
  %3301 = vst [vmem:[%s61 + $0x20] sm:$0xff] %v2119
  %3302 = vst [vmem:[%s61 + $0x28] sm:$0xff] %v2120
  %3303 = vst [vmem:[%s61 + $0x30] sm:$0xff] %v2121
  %3304 = vst [vmem:[%s61 + $0x38] sm:$0xff] %v2122
  %3305 = vst [vmem:[%s61 + $0x40] sm:$0xff] %v2123
  %3306 = vst [vmem:[%s61 + $0x48] sm:$0xff] %v2124
  %3307 = vst [vmem:[%s61 + $0x50] sm:$0xff] %v2125
  %3308 = vst [vmem:[%s61 + $0x58] sm:$0xff] %v2126
  %3309 = vst [vmem:[%s61 + $0x60] sm:$0xff] %v2127
  %3310 = vst [vmem:[%s61 + $0x68] sm:$0xff] %v2128
  %3311 = vst [vmem:[%s61 + $0x70] sm:$0xff] %v2129
  %3312 = vst [vmem:[%s61 + $0x78] sm:$0xff] %v2130
  %3313 = vst [vmem:[%s63] sm:$0xff] %v2690
  %3314 = vst [vmem:[%s63 + $0x8] sm:$0xff] %v2691
  %3315 = vst [vmem:[%s63 + $0x10] sm:$0xff] %v2692
  %3316 = vst [vmem:[%s63 + $0x18] sm:$0xff] %v2693
  %3317 = vst [vmem:[%s63 + $0x20] sm:$0xff] %v2694
  %3318 = vst [vmem:[%s63 + $0x28] sm:$0xff] %v2695
  %3319 = vst [vmem:[%s63 + $0x30] sm:$0xff] %v2696
  %3320 = vst [vmem:[%s63 + $0x38] sm:$0xff] %v2697
  %3321 = vst [vmem:[%s63 + $0x40] sm:$0xff] %v2698
  %3322 = vst [vmem:[%s63 + $0x48] sm:$0xff] %v2699
  %3323 = vst [vmem:[%s63 + $0x50] sm:$0xff] %v2700
  %3324 = vst [vmem:[%s63 + $0x58] sm:$0xff] %v2701
  %3325 = vst [vmem:[%s63 + $0x60] sm:$0xff] %v2702
  %3326 = vst [vmem:[%s63 + $0x68] sm:$0xff] %v2703
  %3327 = vst [vmem:[%s63 + $0x70] sm:$0xff] %v2704
  %3328 = vst [vmem:[%s63 + $0x78] sm:$0xff] %v2705
  %3329 = vst [vmem:[%s65] sm:$0xff] %v3265
  %3330 = vst [vmem:[%s65 + $0x8] sm:$0xff] %v3266
  %3331 = vst [vmem:[%s65 + $0x10] sm:$0xff] %v3267
  %3332 = vst [vmem:[%s65 + $0x18] sm:$0xff] %v3268
  %3333 = vst [vmem:[%s65 + $0x20] sm:$0xff] %v3269
  %3334 = vst [vmem:[%s65 + $0x28] sm:$0xff] %v3270
  %3335 = vst [vmem:[%s65 + $0x30] sm:$0xff] %v3271
  %3336 = vst [vmem:[%s65 + $0x38] sm:$0xff] %v3272
  %3337 = vst [vmem:[%s65 + $0x40] sm:$0xff] %v3273
  %3338 = vst [vmem:[%s65 + $0x48] sm:$0xff] %v3274
  %3339 = vst [vmem:[%s65 + $0x50] sm:$0xff] %v3275
  %3340 = vst [vmem:[%s65 + $0x58] sm:$0xff] %v3276
  %3341 = vst [vmem:[%s65 + $0x60] sm:$0xff] %v3277
  %3342 = vst [vmem:[%s65 + $0x68] sm:$0xff] %v3278
  %3343 = vst [vmem:[%s65 + $0x70] sm:$0xff] %v3279
  %3344 = vst [vmem:[%s65 + $0x78] sm:$0xff] %v3280
  // Predicated region
  $region118: #{hicfl_forward.9} parent=0 // pred_check
    _
  $region119: #{hicfl_forward.9} parent=0 // pred_check_branch
    %3346 = sbr.rel (0) target = $region121
  $region120: #{hicfl_forward.9} parent=0 // pred_region
    _
  $region121: #{hicfl_forward.9} parent=0 // pred_fallthru
    _
  // Predicated region
  $region122: #{hicfl_forward.9} parent=0 // pred_check
    _
  $region123: #{hicfl_forward.9} parent=0 // pred_check_branch
    %3348 = sbr.rel (0) target = $region125
  $region124: #{hicfl_forward.9} parent=0 // pred_region
    _
  $region125: #{hicfl_forward.9} parent=0 // pred_fallthru
    _
  // Predicated region
  $region126: #{hicfl_forward.9} parent=0 // pred_check
    _
  $region127: #{hicfl_forward.9} parent=0 // pred_check_branch
    %3350 = sbr.rel (0) target = $region129
  $region128: #{hicfl_forward.9} parent=0 // pred_region
    _
  $region129: #{hicfl_forward.9} parent=0 // pred_fallthru
    _
  // Predicated region
  $region130: #{hicfl_forward.9} parent=0 // pred_check
    _
  $region131: #{hicfl_forward.9} parent=0 // pred_check_branch
    %3352 = sbr.rel (0) target = $region133
  $region132: #{hicfl_forward.9} parent=0 // pred_region
    _
  $region133: #{hicfl_forward.9} parent=0 // pred_fallthru
    _
  // Predicated region
  $region134: #{hicfl_forward.9} parent=0 // pred_check
    _
  $region135: #{hicfl_forward.9} parent=0 // pred_check_branch
    %3354 = sbr.rel (0) target = $region137
  $region136: #{hicfl_forward.9} parent=0 // pred_region
    _
  $region137: #{hicfl_forward.9} parent=0 // pred_fallthru
    _
  // Predicated region
  $region138: #{hicfl_forward.9} parent=0 // pred_check
    _
  $region139: #{hicfl_forward.9} parent=0 // pred_check_branch
    %3356 = sbr.rel (0) target = $region141
  $region140: #{hicfl_forward.9} parent=0 // pred_region
    _
  $region141: #{hicfl_forward.9} parent=0 // pred_fallthru
    _
  // Predicated region
  $region142: #{hicfl_forward.9} parent=0 // pred_check
    _
  $region143: #{hicfl_forward.9} parent=0 // pred_check_branch
    %3358 = sbr.rel (0) target = $region145
  $region144: #{hicfl_forward.9} parent=0 // pred_region
    _
  $region145: #{hicfl_forward.9} parent=0 // pred_fallthru
    _
  // Predicated region
  $region146: #{hicfl_forward.9} parent=0 // pred_check
    _
  $region147: #{hicfl_forward.9} parent=0 // pred_check_branch
    %3360 = sbr.rel (0) target = $region149
  $region148: #{hicfl_forward.9} parent=0 // pred_region
    _
  $region149: #{hicfl_forward.9} parent=0 // pred_fallthru
    _

</llo_original>
